<compile_context>
chip_gen: v7x
topology: tpu7x:2x2x1
jax: 0.10.0
libtpu: 0.0.40
codegen_flags: <defaults>
</compile_context>

<pallas_src>
import jax
import jax.numpy as jnp
from jax.experimental import pallas as pl
from jax.experimental.pallas import tpu as pltpu


def _attention_kernel(out_ref, ctx_ref,
                      wc_ref, bc_ref, wo_ref, bo_ref,
                      wcomb_ref, bcomb_ref, wmix_ref, wres_ref, bout_ref,
                      y_ref, attn_ref):
    """One grid step == one batch tile. All hot-path math lives here."""
    bt, Lo, D = out_ref.shape           # batch tile, output_len, dim
    _, Li, _ = ctx_ref.shape            # input_len
    H, _, dh = wc_ref.shape             # 4 heads, dim // 4
    Z = bt * H                          # flattened (batch, head) axis

    out = out_ref[...].astype(jnp.float32)      # (bt, Lo, D)
    ctx = ctx_ref[...].astype(jnp.float32)      # (bt, Li, D)

    # Replicate activations / weights over a flattened (batch, head) axis Z.
    # Only major-dim broadcasts + leading-dim reshapes (no lane slicing, no
    # sublane relayout); every contraction below is a rank-3 batched matmul.
    ctx_z = jnp.broadcast_to(ctx[:, None], (bt, H, Li, D)).reshape(Z, Li, D)
    out_z = jnp.broadcast_to(out[:, None], (bt, H, Lo, D)).reshape(Z, Lo, D)
    wc_z = jnp.broadcast_to(wc_ref[...][None], (bt, H, D, dh)).reshape(Z, D, dh)
    wo_z = jnp.broadcast_to(wo_ref[...][None], (bt, H, D, dh)).reshape(Z, D, dh)
    bc_z = jnp.broadcast_to(bc_ref[...][None], (bt, H, 1, dh)).reshape(Z, 1, dh)
    bo_z = jnp.broadcast_to(bo_ref[...][None], (bt, H, 1, dh)).reshape(Z, 1, dh)

    # Head-major per-head projections: (Z, L, dh)
    C = jnp.einsum('zld,zdk->zlk', ctx_z, wc_z,
                   preferred_element_type=jnp.float32) + bc_z
    O = jnp.einsum('zqd,zdk->zqk', out_z, wo_z,
                   preferred_element_type=jnp.float32) + bo_z

    # Scores and softmax over the context axis (batched over (batch, head)).
    s = jnp.einsum('zqd,zkd->zqk', O, C, preferred_element_type=jnp.float32)  # (Z, Lo, Li)
    s = s - jnp.max(s, axis=-1, keepdims=True)
    e = jnp.exp(s)
    att = e * pl.reciprocal(jnp.sum(e, axis=-1, keepdims=True), approx=True)

    # Head-major attention output; the wrapper re-lays it out to (B, Lo, 4*Li).
    attn_ref[...] = att.astype(attn_ref.dtype)

    # mix_h = att_h @ c_h, per (batch, head).
    mix = jnp.einsum('zqk,zkd->zqd', att, C, preferred_element_type=jnp.float32)  # (Z, Lo, dh)

    # attn_combine contracted head-major: sum_h mix_h @ wcomb[h*dh:(h+1)*dh, :]
    # (equivalent to concat(mix_h) @ wcomb, without the lane concatenation).
    wcomb_z = jnp.broadcast_to(wcomb_ref[...][None], (bt, H, dh, D)).reshape(Z, dh, D)
    part = jnp.einsum('zqd,zdk->zqk', mix, wcomb_z,
                      preferred_element_type=jnp.float32)           # (Z, Lo, D)
    part4 = part.reshape(bt, H, Lo, D)
    comb = part4[:, 0]
    for h in range(1, H):
        comb = comb + part4[:, h]
    comb = comb + bcomb_ref[...]                                     # (bt, Lo, D)

    # linear_out on [mix, output]: the (2D, D) weight is pre-split into halves.
    wmix_b = jnp.broadcast_to(wmix_ref[...][None], (bt, D, D))
    wres_b = jnp.broadcast_to(wres_ref[...][None], (bt, D, D))
    y = (jnp.einsum('bqd,bdk->bqk', comb, wmix_b, preferred_element_type=jnp.float32)
         + jnp.einsum('bqd,bdk->bqk', out, wres_b, preferred_element_type=jnp.float32)
         + bout_ref[...])
    y_ref[...] = jnp.tanh(y).astype(y_ref.dtype)


def attention_forward(output, context, params, *, bt=None):
    """Wrapper: returns (attended_output (B,Lo,D), attn (B,Lo,4*Li))."""
    wc, bc, wo, bo, wcomb, bcomb, wout, bout = params
    B, Lo, D = output.shape
    _, Li, _ = context.shape
    H = 4
    dh = D // H

    # Batch-tile heuristic: a single grid step minimises per-step overhead, but
    # with >=4 batch elements use two parallel blocks so v7x's 2 TCs both work.
    if bt is None:
        bt = B // 2 if (B % 2 == 0 and B >= 4) else B
    assert B % bt == 0, "batch must be divisible by the batch tile"
    grid = (B // bt,)

    # Wrapper-side layout plumbing (done once by XLA, not in the kernel):
    # head-major weight layouts and a split linear_out weight.
    wc_h = wc.reshape(D, H, dh).transpose(1, 0, 2)        # (4, D, dh)
    wo_h = wo.reshape(D, H, dh).transpose(1, 0, 2)        # (4, D, dh)
    bc_h = bc.reshape(H, dh)[:, None, :]                  # (4, 1, dh)
    bo_h = bo.reshape(H, dh)[:, None, :]                  # (4, 1, dh)
    wcomb_h = wcomb.reshape(H, dh, D)                     # (4, dh, D)
    wout_mix = wout[:D]                                   # (D, D)  -> applied to mix
    wout_res = wout[D:]                                   # (D, D)  -> applied to output

    in_specs = [
        pl.BlockSpec((bt, Lo, D), lambda i: (i, 0, 0)),   # output (batch tile)
        pl.BlockSpec((bt, Li, D), lambda i: (i, 0, 0)),   # context (batch tile)
        pl.BlockSpec((H, D, dh), lambda i: (0, 0, 0)),    # wc (head-major)
        pl.BlockSpec((H, 1, dh), lambda i: (0, 0, 0)),    # bc
        pl.BlockSpec((H, D, dh), lambda i: (0, 0, 0)),    # wo (head-major)
        pl.BlockSpec((H, 1, dh), lambda i: (0, 0, 0)),    # bo
        pl.BlockSpec((H, dh, D), lambda i: (0, 0, 0)),    # attn_combine W (head-major)
        pl.BlockSpec((1, D), lambda i: (0, 0)),           # attn_combine b
        pl.BlockSpec((D, D), lambda i: (0, 0)),           # linear_out W (mix half)
        pl.BlockSpec((D, D), lambda i: (0, 0)),           # linear_out W (output half)
        pl.BlockSpec((1, D), lambda i: (0, 0)),           # linear_out b
    ]
    out_specs = [
        pl.BlockSpec((bt, Lo, D), lambda i: (i, 0, 0)),        # attended output
        pl.BlockSpec((bt * H, Lo, Li), lambda i: (i, 0, 0)),   # attn, head-major
    ]
    out_shape = (
        jax.ShapeDtypeStruct((B, Lo, D), output.dtype),
        jax.ShapeDtypeStruct((B * H, Lo, Li), jnp.float32),
    )

    y, attn_z = pl.pallas_call(
        _attention_kernel,
        grid=grid,
        in_specs=in_specs,
        out_specs=out_specs,
        out_shape=out_shape,
        compiler_params=pltpu.CompilerParams(
            dimension_semantics=("parallel",),
            vmem_limit_bytes=32 * 1024 * 1024,
        ),
    )(output, context, wc_h, bc_h, wo_h, bo_h, wcomb_h, bcomb,
      wout_mix, wout_res, bout)

    # Re-lay the head-major attn slab into the PyTorch layout (B, Lo, 4*Li).
    attn = attn_z.reshape(B, H, Lo, Li).transpose(0, 2, 1, 3).reshape(B, Lo, H * Li)
    return y, attn


def reference_forward(output, context, params):
    """Pure-JAX reference mirroring the PyTorch forward (packed weights)."""
    wc, bc, wo, bo, wcomb, bcomb, wout, bout = params
    D = output.shape[-1]
    dh = D // 4
    C = context @ wc + bc[0]
    O = output @ wo + bo[0]
    atts, mixes = [], []
    for h in range(4):
        ch = C[:, :, h * dh:(h + 1) * dh]
        oh = O[:, :, h * dh:(h + 1) * dh]
        s = jnp.einsum('bqd,bkd->bqk', oh, ch)
        a = jax.nn.softmax(s, axis=-1)
        atts.append(a)
        mixes.append(jnp.einsum('bqk,bkd->bqd', a, ch))
    attn = jnp.concatenate(atts, axis=-1)
    concat = jnp.concatenate(mixes, axis=-1)
    mix = concat @ wcomb + bcomb[0]
    combined = jnp.concatenate([mix, output], axis=-1)
    y = jnp.tanh(combined @ wout + bout[0])
    return y, attn


def init_params(key, dim):
    """Deterministic synthetic parameters (shapes follow the nn.Module __init__)."""
    ks = jax.random.split(key, 8)
    scale = 0.1
    # 4 per-head context / output projections packed column-wise into (D, D)
    wc = scale * jax.random.normal(ks[0], (dim, dim), jnp.float32)        # [wc1|wc2|wc3|wc4]
    bc = scale * jax.random.normal(ks[1], (1, dim), jnp.float32)
    wo = scale * jax.random.normal(ks[2], (dim, dim), jnp.float32)        # [wo1|wo2|wo3|wo4]
    bo = scale * jax.random.normal(ks[3], (1, dim), jnp.float32)
    wcomb = scale * jax.random.normal(ks[4], (dim, dim), jnp.float32)     # attn_combine
    bcomb = scale * jax.random.normal(ks[5], (1, dim), jnp.float32)
    wout = scale * jax.random.normal(ks[6], (2 * dim, dim), jnp.float32)  # linear_out
    bout = scale * jax.random.normal(ks[7], (1, dim), jnp.float32)
    return (wc, bc, wo, bo, wcomb, bcomb, wout, bout)


if __name__ == "__main__":
    # batch, output_len, input_len, dim (dim % 4 == 0); B=4 -> 2 parallel grid blocks.
    B, Lo, Li, D = 4, 5, 6, 32
    key = jax.random.PRNGKey(0)
    k_out, k_ctx, k_par = jax.random.split(key, 3)
    output = jax.random.normal(k_out, (B, Lo, D), jnp.float32)
    context = jax.random.normal(k_ctx, (B, Li, D), jnp.float32)
    params = init_params(k_par, D)

    y, attn = attention_forward(output, context, params)
    y = jax.block_until_ready(y)
    attn = jax.block_until_ready(attn)

    y_ref, attn_ref = reference_forward(output, context, params)
    assert y.shape == (B, Lo, D) and attn.shape == (B, Lo, 4 * Li)
    # Tolerance accounts for the approximate EUP reciprocal used in the softmax
    # normalisation (small relative error); everything else is exact f32 math.
    assert jnp.allclose(y, y_ref, atol=2e-2, rtol=2e-2)
    assert jnp.allclose(attn, attn_ref, atol=2e-2, rtol=2e-2)

    print("KERNEL_OK")
</pallas_src>

<mosaic_0001>
module attributes {stable_mosaic.version = 11 : i64} {
  func.func @_attention_kernel(%arg0: i32, %arg1: memref<2x5x32xf32, #tpu.memory_space<vmem>>, %arg2: memref<2x6x32xf32, #tpu.memory_space<vmem>>, %arg3: memref<4x32x8xf32, #tpu.memory_space<vmem>>, %arg4: memref<4x1x8xf32, #tpu.memory_space<vmem>>, %arg5: memref<4x32x8xf32, #tpu.memory_space<vmem>>, %arg6: memref<4x1x8xf32, #tpu.memory_space<vmem>>, %arg7: memref<4x8x32xf32, #tpu.memory_space<vmem>>, %arg8: memref<1x32xf32, #tpu.memory_space<vmem>>, %arg9: memref<32x32xf32, #tpu.memory_space<vmem>>, %arg10: memref<32x32xf32, #tpu.memory_space<vmem>>, %arg11: memref<1x32xf32, #tpu.memory_space<vmem>>, %arg12: memref<2x5x32xf32, #tpu.memory_space<vmem>>, %arg13: memref<8x5x6xf32, #tpu.memory_space<vmem>>) attributes {dimension_semantics = [#tpu.dimension_semantics<parallel>], iteration_bounds = array<i64: 2>, scalar_prefetch = 0 : i64, scratch_operands = 0 : i64, tpu.core_type = #tpu.core_type<tc>, window_params = [{transform_indices = @transform_0, window_bounds = array<i64: 2, 5, 32>}, {transform_indices = @transform_1, window_bounds = array<i64: 2, 6, 32>}, {pipeline_mode = #tpu.pipeline_mode<synchronous>, transform_indices = @transform_2, window_bounds = array<i64: 4, 32, 8>}, {pipeline_mode = #tpu.pipeline_mode<synchronous>, transform_indices = @transform_3, window_bounds = array<i64: 4, 1, 8>}, {pipeline_mode = #tpu.pipeline_mode<synchronous>, transform_indices = @transform_4, window_bounds = array<i64: 4, 32, 8>}, {pipeline_mode = #tpu.pipeline_mode<synchronous>, transform_indices = @transform_5, window_bounds = array<i64: 4, 1, 8>}, {pipeline_mode = #tpu.pipeline_mode<synchronous>, transform_indices = @transform_6, window_bounds = array<i64: 4, 8, 32>}, {pipeline_mode = #tpu.pipeline_mode<synchronous>, transform_indices = @transform_7, window_bounds = array<i64: 1, 32>}, {pipeline_mode = #tpu.pipeline_mode<synchronous>, transform_indices = @transform_8, window_bounds = array<i64: 32, 32>}, {pipeline_mode = #tpu.pipeline_mode<synchronous>, transform_indices = @transform_9, window_bounds = array<i64: 32, 32>}, {pipeline_mode = #tpu.pipeline_mode<synchronous>, transform_indices = @transform_10, window_bounds = array<i64: 1, 32>}, {transform_indices = @transform_11, window_bounds = array<i64: 2, 5, 32>}, {transform_indices = @transform_12, window_bounds = array<i64: 8, 5, 6>}]} {
    %c0 = arith.constant 0 : index
    %c0_0 = arith.constant 0 : index
    %c0_1 = arith.constant 0 : index
    %0 = vector.load %arg1[%c0, %c0_0, %c0_1] : memref<2x5x32xf32, #tpu.memory_space<vmem>>, vector<2x5x32xf32>
    %c0_2 = arith.constant 0 : index
    %c0_3 = arith.constant 0 : index
    %c0_4 = arith.constant 0 : index
    %1 = vector.load %arg2[%c0_2, %c0_3, %c0_4] : memref<2x6x32xf32, #tpu.memory_space<vmem>>, vector<2x6x32xf32>
    %2 = vector.shape_cast %1 : vector<2x6x32xf32> to vector<2x1x6x32xf32>
    %3 = vector.shape_cast %2 : vector<2x1x6x32xf32> to vector<2x1x6x32xf32>
    %4 = vector.broadcast %3 : vector<2x1x6x32xf32> to vector<2x4x6x32xf32>
    %5 = vector.shape_cast %4 : vector<2x4x6x32xf32> to vector<8x6x32xf32>
    %6 = vector.shape_cast %0 : vector<2x5x32xf32> to vector<2x1x5x32xf32>
    %7 = vector.shape_cast %6 : vector<2x1x5x32xf32> to vector<2x1x5x32xf32>
    %8 = vector.broadcast %7 : vector<2x1x5x32xf32> to vector<2x4x5x32xf32>
    %9 = vector.shape_cast %8 : vector<2x4x5x32xf32> to vector<8x5x32xf32>
    %c0_5 = arith.constant 0 : index
    %c0_6 = arith.constant 0 : index
    %c0_7 = arith.constant 0 : index
    %10 = vector.load %arg3[%c0_5, %c0_6, %c0_7] : memref<4x32x8xf32, #tpu.memory_space<vmem>>, vector<4x32x8xf32>
    %11 = vector.shape_cast %10 : vector<4x32x8xf32> to vector<1x4x32x8xf32>
    %12 = vector.shape_cast %11 : vector<1x4x32x8xf32> to vector<1x4x32x8xf32>
    %13 = vector.broadcast %12 : vector<1x4x32x8xf32> to vector<2x4x32x8xf32>
    %14 = vector.shape_cast %13 : vector<2x4x32x8xf32> to vector<8x32x8xf32>
    %c0_8 = arith.constant 0 : index
    %c0_9 = arith.constant 0 : index
    %c0_10 = arith.constant 0 : index
    %15 = vector.load %arg5[%c0_8, %c0_9, %c0_10] : memref<4x32x8xf32, #tpu.memory_space<vmem>>, vector<4x32x8xf32>
    %16 = vector.shape_cast %15 : vector<4x32x8xf32> to vector<1x4x32x8xf32>
    %17 = vector.shape_cast %16 : vector<1x4x32x8xf32> to vector<1x4x32x8xf32>
    %18 = vector.broadcast %17 : vector<1x4x32x8xf32> to vector<2x4x32x8xf32>
    %19 = vector.shape_cast %18 : vector<2x4x32x8xf32> to vector<8x32x8xf32>
    %c0_11 = arith.constant 0 : index
    %c0_12 = arith.constant 0 : index
    %c0_13 = arith.constant 0 : index
    %20 = vector.load %arg4[%c0_11, %c0_12, %c0_13] : memref<4x1x8xf32, #tpu.memory_space<vmem>>, vector<4x1x8xf32>
    %21 = vector.shape_cast %20 : vector<4x1x8xf32> to vector<1x4x1x8xf32>
    %22 = vector.shape_cast %21 : vector<1x4x1x8xf32> to vector<1x4x1x8xf32>
    %23 = vector.broadcast %22 : vector<1x4x1x8xf32> to vector<2x4x1x8xf32>
    %24 = vector.shape_cast %23 : vector<2x4x1x8xf32> to vector<8x1x8xf32>
    %c0_14 = arith.constant 0 : index
    %c0_15 = arith.constant 0 : index
    %c0_16 = arith.constant 0 : index
    %25 = vector.load %arg6[%c0_14, %c0_15, %c0_16] : memref<4x1x8xf32, #tpu.memory_space<vmem>>, vector<4x1x8xf32>
    %26 = vector.shape_cast %25 : vector<4x1x8xf32> to vector<1x4x1x8xf32>
    %27 = vector.shape_cast %26 : vector<1x4x1x8xf32> to vector<1x4x1x8xf32>
    %28 = vector.broadcast %27 : vector<1x4x1x8xf32> to vector<2x4x1x8xf32>
    %29 = vector.shape_cast %28 : vector<2x4x1x8xf32> to vector<8x1x8xf32>
    "tpu.trace_start"() <{level = 10 : i32, message = "zld,zdk->zlk"}> : () -> ()
    %cst = arith.constant dense<0.000000e+00> : vector<8x6x8xf32>
    %30 = tpu.matmul %5, %14, %cst {dimension_numbers = #tpu.dot_dimension_numbers<[2], [1], [1], [2], [0, 0, 0, 1, 1, 2], [0], [0]>} : vector<8x6x32xf32>, vector<8x32x8xf32>, vector<8x6x8xf32> -> vector<8x6x8xf32>
    "tpu.trace_stop"() : () -> ()
    %31 = vector.broadcast %24 : vector<8x1x8xf32> to vector<8x6x8xf32>
    %32 = arith.addf %30, %31 : vector<8x6x8xf32>
    "tpu.trace_start"() <{level = 10 : i32, message = "zqd,zdk->zqk"}> : () -> ()
    %cst_17 = arith.constant dense<0.000000e+00> : vector<8x5x8xf32>
    %33 = tpu.matmul %9, %19, %cst_17 {dimension_numbers = #tpu.dot_dimension_numbers<[2], [1], [1], [2], [0, 0, 0, 1, 1, 2], [0], [0]>} : vector<8x5x32xf32>, vector<8x32x8xf32>, vector<8x5x8xf32> -> vector<8x5x8xf32>
    "tpu.trace_stop"() : () -> ()
    %34 = vector.broadcast %29 : vector<8x1x8xf32> to vector<8x5x8xf32>
    %35 = arith.addf %33, %34 : vector<8x5x8xf32>
    "tpu.trace_start"() <{level = 10 : i32, message = "zqd,zkd->zqk"}> : () -> ()
    %cst_18 = arith.constant dense<0.000000e+00> : vector<8x5x6xf32>
    %36 = tpu.matmul %35, %32, %cst_18 {dimension_numbers = #tpu.dot_dimension_numbers<[2], [2], [1], [1], [0, 0, 0, 1, 1, 1], [0], [0]>} : vector<8x5x8xf32>, vector<8x6x8xf32>, vector<8x5x6xf32> -> vector<8x5x6xf32>
    "tpu.trace_stop"() : () -> ()
    %cst_19 = arith.constant dense<0xFF800000> : vector<8x5xf32>
    %37 = vector.multi_reduction <maximumf>, %36, %cst_19 [2] : vector<8x5x6xf32> to vector<8x5xf32>
    %38 = vector.shape_cast %37 : vector<8x5xf32> to vector<8x5x1xf32>
    %39 = vector.broadcast %38 : vector<8x5x1xf32> to vector<8x5x6xf32>
    %40 = arith.subf %36, %39 : vector<8x5x6xf32>
    %41 = math.exp %40 : vector<8x5x6xf32>
    %cst_20 = arith.constant dense<0.000000e+00> : vector<8x5xf32>
    %42 = vector.multi_reduction <add>, %41, %cst_20 [2] : vector<8x5x6xf32> to vector<8x5xf32>
    %43 = vector.shape_cast %42 : vector<8x5xf32> to vector<8x5x1xf32>
    %44 = tpu.reciprocal %43 {approx = true} : vector<8x5x1xf32> -> vector<8x5x1xf32>
    %45 = vector.broadcast %44 : vector<8x5x1xf32> to vector<8x5x6xf32>
    %46 = arith.mulf %41, %45 : vector<8x5x6xf32>
    %c0_21 = arith.constant 0 : index
    %c0_22 = arith.constant 0 : index
    %c0_23 = arith.constant 0 : index
    %47 = vector.load %arg13[%c0_21, %c0_22, %c0_23] : memref<8x5x6xf32, #tpu.memory_space<vmem>>, vector<8x5x6xf32>
    tpu.vector_store %arg13[%c0_21, %c0_22, %c0_23], %46 {strides = array<i32>} : memref<8x5x6xf32, #tpu.memory_space<vmem>>, vector<8x5x6xf32>,
    "tpu.trace_start"() <{level = 10 : i32, message = "zqk,zkd->zqd"}> : () -> ()
    %cst_24 = arith.constant dense<0.000000e+00> : vector<8x5x8xf32>
    %48 = tpu.matmul %46, %32, %cst_24 {dimension_numbers = #tpu.dot_dimension_numbers<[2], [1], [1], [2], [0, 0, 0, 1, 1, 2], [0], [0]>} : vector<8x5x6xf32>, vector<8x6x8xf32>, vector<8x5x8xf32> -> vector<8x5x8xf32>
    "tpu.trace_stop"() : () -> ()
    %c0_25 = arith.constant 0 : index
    %c0_26 = arith.constant 0 : index
    %c0_27 = arith.constant 0 : index
    %49 = vector.load %arg7[%c0_25, %c0_26, %c0_27] : memref<4x8x32xf32, #tpu.memory_space<vmem>>, vector<4x8x32xf32>
    %50 = vector.shape_cast %49 : vector<4x8x32xf32> to vector<1x4x8x32xf32>
    %51 = vector.shape_cast %50 : vector<1x4x8x32xf32> to vector<1x4x8x32xf32>
    %52 = vector.broadcast %51 : vector<1x4x8x32xf32> to vector<2x4x8x32xf32>
    %53 = vector.shape_cast %52 : vector<2x4x8x32xf32> to vector<8x8x32xf32>
    "tpu.trace_start"() <{level = 10 : i32, message = "zqd,zdk->zqk"}> : () -> ()
    %cst_28 = arith.constant dense<0.000000e+00> : vector<8x5x32xf32>
    %54 = tpu.matmul %48, %53, %cst_28 {dimension_numbers = #tpu.dot_dimension_numbers<[2], [1], [1], [2], [0, 0, 0, 1, 1, 2], [0], [0]>} : vector<8x5x8xf32>, vector<8x8x32xf32>, vector<8x5x32xf32> -> vector<8x5x32xf32>
    "tpu.trace_stop"() : () -> ()
    %55 = vector.shape_cast %54 : vector<8x5x32xf32> to vector<2x4x5x32xf32>
    %56 = vector.extract_strided_slice %55 {offsets = [0, 0, 0, 0], sizes = [2, 1, 5, 32], strides = [1, 1, 1, 1]} : vector<2x4x5x32xf32> to vector<2x1x5x32xf32>
    %57 = vector.shape_cast %56 : vector<2x1x5x32xf32> to vector<2x5x32xf32>
    %58 = vector.extract_strided_slice %55 {offsets = [0, 1, 0, 0], sizes = [2, 1, 5, 32], strides = [1, 1, 1, 1]} : vector<2x4x5x32xf32> to vector<2x1x5x32xf32>
    %59 = vector.shape_cast %58 : vector<2x1x5x32xf32> to vector<2x5x32xf32>
    %60 = arith.addf %57, %59 : vector<2x5x32xf32>
    %61 = vector.extract_strided_slice %55 {offsets = [0, 2, 0, 0], sizes = [2, 1, 5, 32], strides = [1, 1, 1, 1]} : vector<2x4x5x32xf32> to vector<2x1x5x32xf32>
    %62 = vector.shape_cast %61 : vector<2x1x5x32xf32> to vector<2x5x32xf32>
    %63 = arith.addf %60, %62 : vector<2x5x32xf32>
    %64 = vector.extract_strided_slice %55 {offsets = [0, 3, 0, 0], sizes = [2, 1, 5, 32], strides = [1, 1, 1, 1]} : vector<2x4x5x32xf32> to vector<2x1x5x32xf32>
    %65 = vector.shape_cast %64 : vector<2x1x5x32xf32> to vector<2x5x32xf32>
    %66 = arith.addf %63, %65 : vector<2x5x32xf32>
    %c0_29 = arith.constant 0 : index
    %c0_30 = arith.constant 0 : index
    %67 = vector.load %arg8[%c0_29, %c0_30] : memref<1x32xf32, #tpu.memory_space<vmem>>, vector<1x32xf32>
    %68 = vector.shape_cast %67 : vector<1x32xf32> to vector<1x1x32xf32>
    %69 = vector.broadcast %68 : vector<1x1x32xf32> to vector<2x5x32xf32>
    %70 = arith.addf %66, %69 : vector<2x5x32xf32>
    %c0_31 = arith.constant 0 : index
    %c0_32 = arith.constant 0 : index
    %71 = vector.load %arg9[%c0_31, %c0_32] : memref<32x32xf32, #tpu.memory_space<vmem>>, vector<32x32xf32>
    %72 = vector.shape_cast %71 : vector<32x32xf32> to vector<1x32x32xf32>
    %73 = vector.shape_cast %72 : vector<1x32x32xf32> to vector<1x32x32xf32>
    %74 = vector.broadcast %73 : vector<1x32x32xf32> to vector<2x32x32xf32>
    %c0_33 = arith.constant 0 : index
    %c0_34 = arith.constant 0 : index
    %75 = vector.load %arg10[%c0_33, %c0_34] : memref<32x32xf32, #tpu.memory_space<vmem>>, vector<32x32xf32>
    %76 = vector.shape_cast %75 : vector<32x32xf32> to vector<1x32x32xf32>
    %77 = vector.shape_cast %76 : vector<1x32x32xf32> to vector<1x32x32xf32>
    %78 = vector.broadcast %77 : vector<1x32x32xf32> to vector<2x32x32xf32>
    "tpu.trace_start"() <{level = 10 : i32, message = "bqd,bdk->bqk"}> : () -> ()
    %cst_35 = arith.constant dense<0.000000e+00> : vector<2x5x32xf32>
    %79 = tpu.matmul %70, %74, %cst_35 {dimension_numbers = #tpu.dot_dimension_numbers<[2], [1], [1], [2], [0, 0, 0, 1, 1, 2], [0], [0]>} : vector<2x5x32xf32>, vector<2x32x32xf32>, vector<2x5x32xf32> -> vector<2x5x32xf32>
    %cst_36 = arith.constant dense<0.000000e+00> : vector<2x5x32xf32>
    %80 = tpu.matmul %0, %78, %cst_36 {dimension_numbers = #tpu.dot_dimension_numbers<[2], [1], [1], [2], [0, 0, 0, 1, 1, 2], [0], [0]>} : vector<2x5x32xf32>, vector<2x32x32xf32>, vector<2x5x32xf32> -> vector<2x5x32xf32>
    "tpu.trace_stop"() : () -> ()
    %81 = arith.addf %79, %80 : vector<2x5x32xf32>
    %c0_37 = arith.constant 0 : index
    %c0_38 = arith.constant 0 : index
    %82 = vector.load %arg11[%c0_37, %c0_38] : memref<1x32xf32, #tpu.memory_space<vmem>>, vector<1x32xf32>
    %83 = vector.shape_cast %82 : vector<1x32xf32> to vector<1x1x32xf32>
    %84 = vector.broadcast %83 : vector<1x1x32xf32> to vector<2x5x32xf32>
    %85 = arith.addf %81, %84 : vector<2x5x32xf32>
    %86 = math.tanh %85 : vector<2x5x32xf32>
    %c0_39 = arith.constant 0 : index
    %c0_40 = arith.constant 0 : index
    %c0_41 = arith.constant 0 : index
    %87 = vector.load %arg12[%c0_39, %c0_40, %c0_41] : memref<2x5x32xf32, #tpu.memory_space<vmem>>, vector<2x5x32xf32>
    tpu.vector_store %arg12[%c0_39, %c0_40, %c0_41], %86 {strides = array<i32>} : memref<2x5x32xf32, #tpu.memory_space<vmem>>, vector<2x5x32xf32>,
    return
  }
  func.func @transform_0(%arg0: i32) -> (i32, i32, i32) {
    %c0_i32 = arith.constant 0 : i32
    %c0_i32_0 = arith.constant 0 : i32
    %c0_i32_1 = arith.constant 0 : i32
    return %arg0, %c0_i32, %c0_i32_0 : i32, i32, i32
  }
  func.func @transform_1(%arg0: i32) -> (i32, i32, i32) {
    %c0_i32 = arith.constant 0 : i32
    %c0_i32_0 = arith.constant 0 : i32
    %c0_i32_1 = arith.constant 0 : i32
    return %arg0, %c0_i32, %c0_i32_0 : i32, i32, i32
  }
  func.func @transform_2(%arg0: i32) -> (i32, i32, i32) {
    %c0_i32 = arith.constant 0 : i32
    %c0_i32_0 = arith.constant 0 : i32
    %c0_i32_1 = arith.constant 0 : i32
    %c0_i32_2 = arith.constant 0 : i32
    return %c0_i32, %c0_i32_0, %c0_i32_1 : i32, i32, i32
  }
  func.func @transform_3(%arg0: i32) -> (i32, i32, i32) {
    %c0_i32 = arith.constant 0 : i32
    %c0_i32_0 = arith.constant 0 : i32
    %c0_i32_1 = arith.constant 0 : i32
    %c0_i32_2 = arith.constant 0 : i32
    return %c0_i32, %c0_i32_0, %c0_i32_1 : i32, i32, i32
  }
  func.func @transform_4(%arg0: i32) -> (i32, i32, i32) {
    %c0_i32 = arith.constant 0 : i32
    %c0_i32_0 = arith.constant 0 : i32
    %c0_i32_1 = arith.constant 0 : i32
    %c0_i32_2 = arith.constant 0 : i32
    return %c0_i32, %c0_i32_0, %c0_i32_1 : i32, i32, i32
  }
  func.func @transform_5(%arg0: i32) -> (i32, i32, i32) {
    %c0_i32 = arith.constant 0 : i32
    %c0_i32_0 = arith.constant 0 : i32
    %c0_i32_1 = arith.constant 0 : i32
    %c0_i32_2 = arith.constant 0 : i32
    return %c0_i32, %c0_i32_0, %c0_i32_1 : i32, i32, i32
  }
  func.func @transform_6(%arg0: i32) -> (i32, i32, i32) {
    %c0_i32 = arith.constant 0 : i32
    %c0_i32_0 = arith.constant 0 : i32
    %c0_i32_1 = arith.constant 0 : i32
    %c0_i32_2 = arith.constant 0 : i32
    return %c0_i32, %c0_i32_0, %c0_i32_1 : i32, i32, i32
  }
  func.func @transform_7(%arg0: i32) -> (i32, i32) {
    %c0_i32 = arith.constant 0 : i32
    %c0_i32_0 = arith.constant 0 : i32
    %c0_i32_1 = arith.constant 0 : i32
    return %c0_i32, %c0_i32_0 : i32, i32
  }
  func.func @transform_8(%arg0: i32) -> (i32, i32) {
    %c0_i32 = arith.constant 0 : i32
    %c0_i32_0 = arith.constant 0 : i32
    %c0_i32_1 = arith.constant 0 : i32
    return %c0_i32, %c0_i32_0 : i32, i32
  }
  func.func @transform_9(%arg0: i32) -> (i32, i32) {
    %c0_i32 = arith.constant 0 : i32
    %c0_i32_0 = arith.constant 0 : i32
    %c0_i32_1 = arith.constant 0 : i32
    return %c0_i32, %c0_i32_0 : i32, i32
  }
  func.func @transform_10(%arg0: i32) -> (i32, i32) {
    %c0_i32 = arith.constant 0 : i32
    %c0_i32_0 = arith.constant 0 : i32
    %c0_i32_1 = arith.constant 0 : i32
    return %c0_i32, %c0_i32_0 : i32, i32
  }
  func.func @transform_11(%arg0: i32) -> (i32, i32, i32) {
    %c0_i32 = arith.constant 0 : i32
    %c0_i32_0 = arith.constant 0 : i32
    %c0_i32_1 = arith.constant 0 : i32
    return %arg0, %c0_i32, %c0_i32_0 : i32, i32, i32
  }
  func.func @transform_12(%arg0: i32) -> (i32, i32, i32) {
    %c0_i32 = arith.constant 0 : i32
    %c0_i32_0 = arith.constant 0 : i32
    %c0_i32_1 = arith.constant 0 : i32
    return %arg0, %c0_i32, %c0_i32_0 : i32, i32, i32
  }
}

</mosaic_0001>

<llo_original>
// kernel: tpu_custom_call.1
$region0: #{tpu_custom_call.1}
  #allocation0 [shape = 'u32[]', space=smem, size = 0x4, offset = 0x4, fixed_abs, tag = 'smem constant byte address 0x4 - core index']
  #allocation1 [shape = 'u32[144,128]{1,0:T(1,128)}', space=vmem, size = 0x12000, scoped, tag = 'internal scratch']
  %s0 = inlined_call_operand.vmem [shape: f32[4,5,32], index: 0, kind: input, shape index: {}]
  %s1 = inlined_call_operand.vmem [shape: f32[4,6,32], index: 1, kind: input, shape index: {}]
  %s2 = inlined_call_operand.vmem [shape: f32[4,32,8], index: 2, kind: input, shape index: {}]
  %s3 = inlined_call_operand.vmem [shape: f32[4,1,8], index: 3, kind: input, shape index: {}]
  %s4 = inlined_call_operand.vmem [shape: f32[4,32,8], index: 4, kind: input, shape index: {}]
  %s5 = inlined_call_operand.vmem [shape: f32[4,1,8], index: 5, kind: input, shape index: {}]
  %s6 = inlined_call_operand.vmem [shape: f32[4,8,32], index: 6, kind: input, shape index: {}]
  %s7 = inlined_call_operand.vmem [shape: f32[1,32], index: 7, kind: input, shape index: {}]
  %s8 = inlined_call_operand.vmem [shape: f32[32,32], index: 8, kind: input, shape index: {}]
  %s9 = inlined_call_operand.vmem [shape: f32[32,32], index: 9, kind: input, shape index: {}]
  %s10 = inlined_call_operand.vmem [shape: f32[1,32], index: 10, kind: input, shape index: {}]
  %s11 = inlined_call_operand.vmem [shape: f32[4,5,32], index: 11, kind: output, shape index: {0}]
  %s12 = inlined_call_operand.vmem [shape: f32[16,5,6], index: 12, kind: output, shape index: {1}]
  %13 = xla_tuple %s11, %s12
  %s14 = sld [smem:[#allocation0]]
  $region85: #{tpu_custom_call.1} parent=0
    _
  %s16 = ssub.s32 1, %s14
  %s17 = scalar_select 0, %s16, %s14
  loop: start=0, step=1, limit=4
  $region2: #{tpu_custom_call.1} parent=0 // loop_pre_header
    _
  $region3: #{tpu_custom_call.1} parent=0 // loop_header
    %s19 = sphi 0, %s23
    %p20 = scmp.ge.s32.totalorder %s19, 4
    %s29 = sphi 0, %s31
    %s32 = sphi 0, %s29
    %s33 = sphi 0, %s32
    %s49 = sphi 0, %s33
    %s55 = sphi 0, %s57
    %s58 = sphi 0, %s55
    %s59 = sphi 0, %s58
    %s75 = sphi 0, %s59
    %s79 = sphi 0, %s79
    %s81 = sphi 0, %s79
    %s82 = sphi 0, %s81
    %s96 = sphi 0, %s82
    %s100 = sphi 0, %s100
    %s102 = sphi 0, %s100
    %s103 = sphi 0, %s102
    %s117 = sphi 0, %s103
    %s121 = sphi 0, %s121
    %s123 = sphi 0, %s121
    %s124 = sphi 0, %s123
    %s138 = sphi 0, %s124
    %s142 = sphi 0, %s142
    %s144 = sphi 0, %s142
    %s145 = sphi 0, %s144
    %s159 = sphi 0, %s145
    %s163 = sphi 0, %s163
    %s165 = sphi 0, %s163
    %s166 = sphi 0, %s165
    %s180 = sphi 0, %s166
    %s184 = sphi 0, %s184
    %s186 = sphi 0, %s184
    %s187 = sphi 0, %s186
    %s201 = sphi 0, %s187
    %s205 = sphi 0, %s205
    %s207 = sphi 0, %s205
    %s208 = sphi 0, %s207
    %s222 = sphi 0, %s208
    %s226 = sphi 0, %s226
    %s228 = sphi 0, %s226
    %s229 = sphi 0, %s228
    %s243 = sphi 0, %s229
    %s247 = sphi 0, %s247
    %s249 = sphi 0, %s247
    %s250 = sphi 0, %s249
    %s264 = sphi 0, %s250
    %s270 = sphi 0, %s272
    %s273 = sphi 0, %s270
    %s274 = sphi 0, %s273
    %s290 = sphi 0, %s274
    %s296 = sphi 0, %s298
    %s299 = sphi 0, %s296
    %s300 = sphi 0, %s299
    %s316 = sphi 0, %s300
  $region4: #{tpu_custom_call.1} parent=0 // loop_header_branch
    %22 = sbr.rel (%p20) target = $region8
  $region5: #{tpu_custom_call.1} parent=0 // loop_body
    %s24 = ssub.s32 %s19, 1
    %s25 = ssub.s32 %s19, 2
    %s26 = sadd.s32 %s19, 1
    %s27 = ssub.s32 %s19, %s26
    %p28 = scmp.eq.s32.totalorder %s27, 0
    %s30 = sadd.s32 %s29, 1
    %s31 = scalar_select %p28, %s29, %s30
    %p34 = pneg %p28
    %p35 = scmp.eq.s32.totalorder %s19, 1
    %p36 = por %p34, %p35
    %p37 = scmp.ne.s32.totalorder %s29, %s32
    %p38 = scmp.eq.s32.totalorder %s19, 0
    %p39 = por %p37, %p38
    %p40 = scmp.ne.s32.totalorder %s29, %s32
    %p41 = scmp.eq.s32.totalorder %s24, 1
    %p42 = por %p40, %p41
    %p43 = scmp.ne.s32.totalorder %s32, %s33
    %p44 = scmp.eq.s32.totalorder %s24, 0
    %p45 = por %p43, %p44
    %p46 = scmp.ne.s32.totalorder %s32, %s33
    %p47 = scmp.eq.s32.totalorder %s25, 1
    %p48 = por %p46, %p47
    %p50 = scmp.ne.s32.totalorder %s33, %s49
    %p51 = scmp.eq.s32.totalorder %s25, 0
    %p52 = por %p50, %p51
    %s53 = ssub.s32 %s19, %s26
    %p54 = scmp.eq.s32.totalorder %s53, 0
    %s56 = sadd.s32 %s55, 1
    %s57 = scalar_select %p54, %s55, %s56
    %p60 = pneg %p54
    %p61 = scmp.eq.s32.totalorder %s19, 1
    %p62 = por %p60, %p61
    %p63 = scmp.ne.s32.totalorder %s55, %s58
    %p64 = scmp.eq.s32.totalorder %s19, 0
    %p65 = por %p63, %p64
    %p66 = scmp.ne.s32.totalorder %s55, %s58
    %p67 = scmp.eq.s32.totalorder %s24, 1
    %p68 = por %p66, %p67
    %p69 = scmp.ne.s32.totalorder %s58, %s59
    %p70 = scmp.eq.s32.totalorder %s24, 0
    %p71 = por %p69, %p70
    %p72 = scmp.ne.s32.totalorder %s58, %s59
    %p73 = scmp.eq.s32.totalorder %s25, 1
    %p74 = por %p72, %p73
    %p76 = scmp.ne.s32.totalorder %s59, %s75
    %p77 = scmp.eq.s32.totalorder %s25, 0
    %p78 = por %p76, %p77
    %s80 = sadd.s32 %s79, 1
    %p83 = scmp.eq.s32.totalorder %s19, 1
    %p84 = scmp.ne.s32.totalorder %s79, %s81
    %p85 = scmp.eq.s32.totalorder %s19, 0
    %p86 = por %p84, %p85
    %p87 = scmp.ne.s32.totalorder %s79, %s81
    %p88 = scmp.eq.s32.totalorder %s24, 1
    %p89 = por %p87, %p88
    %p90 = scmp.ne.s32.totalorder %s81, %s82
    %p91 = scmp.eq.s32.totalorder %s24, 0
    %p92 = por %p90, %p91
    %p93 = scmp.ne.s32.totalorder %s81, %s82
    %p94 = scmp.eq.s32.totalorder %s25, 1
    %p95 = por %p93, %p94
    %p97 = scmp.ne.s32.totalorder %s82, %s96
    %p98 = scmp.eq.s32.totalorder %s25, 0
    %p99 = por %p97, %p98
    %s101 = sadd.s32 %s100, 1
    %p104 = scmp.eq.s32.totalorder %s19, 1
    %p105 = scmp.ne.s32.totalorder %s100, %s102
    %p106 = scmp.eq.s32.totalorder %s19, 0
    %p107 = por %p105, %p106
    %p108 = scmp.ne.s32.totalorder %s100, %s102
    %p109 = scmp.eq.s32.totalorder %s24, 1
    %p110 = por %p108, %p109
    %p111 = scmp.ne.s32.totalorder %s102, %s103
    %p112 = scmp.eq.s32.totalorder %s24, 0
    %p113 = por %p111, %p112
    %p114 = scmp.ne.s32.totalorder %s102, %s103
    %p115 = scmp.eq.s32.totalorder %s25, 1
    %p116 = por %p114, %p115
    %p118 = scmp.ne.s32.totalorder %s103, %s117
    %p119 = scmp.eq.s32.totalorder %s25, 0
    %p120 = por %p118, %p119
    %s122 = sadd.s32 %s121, 1
    %p125 = scmp.eq.s32.totalorder %s19, 1
    %p126 = scmp.ne.s32.totalorder %s121, %s123
    %p127 = scmp.eq.s32.totalorder %s19, 0
    %p128 = por %p126, %p127
    %p129 = scmp.ne.s32.totalorder %s121, %s123
    %p130 = scmp.eq.s32.totalorder %s24, 1
    %p131 = por %p129, %p130
    %p132 = scmp.ne.s32.totalorder %s123, %s124
    %p133 = scmp.eq.s32.totalorder %s24, 0
    %p134 = por %p132, %p133
    %p135 = scmp.ne.s32.totalorder %s123, %s124
    %p136 = scmp.eq.s32.totalorder %s25, 1
    %p137 = por %p135, %p136
    %p139 = scmp.ne.s32.totalorder %s124, %s138
    %p140 = scmp.eq.s32.totalorder %s25, 0
    %p141 = por %p139, %p140
    %s143 = sadd.s32 %s142, 1
    %p146 = scmp.eq.s32.totalorder %s19, 1
    %p147 = scmp.ne.s32.totalorder %s142, %s144
    %p148 = scmp.eq.s32.totalorder %s19, 0
    %p149 = por %p147, %p148
    %p150 = scmp.ne.s32.totalorder %s142, %s144
    %p151 = scmp.eq.s32.totalorder %s24, 1
    %p152 = por %p150, %p151
    %p153 = scmp.ne.s32.totalorder %s144, %s145
    %p154 = scmp.eq.s32.totalorder %s24, 0
    %p155 = por %p153, %p154
    %p156 = scmp.ne.s32.totalorder %s144, %s145
    %p157 = scmp.eq.s32.totalorder %s25, 1
    %p158 = por %p156, %p157
    %p160 = scmp.ne.s32.totalorder %s145, %s159
    %p161 = scmp.eq.s32.totalorder %s25, 0
    %p162 = por %p160, %p161
    %s164 = sadd.s32 %s163, 1
    %p167 = scmp.eq.s32.totalorder %s19, 1
    %p168 = scmp.ne.s32.totalorder %s163, %s165
    %p169 = scmp.eq.s32.totalorder %s19, 0
    %p170 = por %p168, %p169
    %p171 = scmp.ne.s32.totalorder %s163, %s165
    %p172 = scmp.eq.s32.totalorder %s24, 1
    %p173 = por %p171, %p172
    %p174 = scmp.ne.s32.totalorder %s165, %s166
    %p175 = scmp.eq.s32.totalorder %s24, 0
    %p176 = por %p174, %p175
    %p177 = scmp.ne.s32.totalorder %s165, %s166
    %p178 = scmp.eq.s32.totalorder %s25, 1
    %p179 = por %p177, %p178
    %p181 = scmp.ne.s32.totalorder %s166, %s180
    %p182 = scmp.eq.s32.totalorder %s25, 0
    %p183 = por %p181, %p182
    %s185 = sadd.s32 %s184, 1
    %p188 = scmp.eq.s32.totalorder %s19, 1
    %p189 = scmp.ne.s32.totalorder %s184, %s186
    %p190 = scmp.eq.s32.totalorder %s19, 0
    %p191 = por %p189, %p190
    %p192 = scmp.ne.s32.totalorder %s184, %s186
    %p193 = scmp.eq.s32.totalorder %s24, 1
    %p194 = por %p192, %p193
    %p195 = scmp.ne.s32.totalorder %s186, %s187
    %p196 = scmp.eq.s32.totalorder %s24, 0
    %p197 = por %p195, %p196
    %p198 = scmp.ne.s32.totalorder %s186, %s187
    %p199 = scmp.eq.s32.totalorder %s25, 1
    %p200 = por %p198, %p199
    %p202 = scmp.ne.s32.totalorder %s187, %s201
    %p203 = scmp.eq.s32.totalorder %s25, 0
    %p204 = por %p202, %p203
    %s206 = sadd.s32 %s205, 1
    %p209 = scmp.eq.s32.totalorder %s19, 1
    %p210 = scmp.ne.s32.totalorder %s205, %s207
    %p211 = scmp.eq.s32.totalorder %s19, 0
    %p212 = por %p210, %p211
    %p213 = scmp.ne.s32.totalorder %s205, %s207
    %p214 = scmp.eq.s32.totalorder %s24, 1
    %p215 = por %p213, %p214
    %p216 = scmp.ne.s32.totalorder %s207, %s208
    %p217 = scmp.eq.s32.totalorder %s24, 0
    %p218 = por %p216, %p217
    %p219 = scmp.ne.s32.totalorder %s207, %s208
    %p220 = scmp.eq.s32.totalorder %s25, 1
    %p221 = por %p219, %p220
    %p223 = scmp.ne.s32.totalorder %s208, %s222
    %p224 = scmp.eq.s32.totalorder %s25, 0
    %p225 = por %p223, %p224
    %s227 = sadd.s32 %s226, 1
    %p230 = scmp.eq.s32.totalorder %s19, 1
    %p231 = scmp.ne.s32.totalorder %s226, %s228
    %p232 = scmp.eq.s32.totalorder %s19, 0
    %p233 = por %p231, %p232
    %p234 = scmp.ne.s32.totalorder %s226, %s228
    %p235 = scmp.eq.s32.totalorder %s24, 1
    %p236 = por %p234, %p235
    %p237 = scmp.ne.s32.totalorder %s228, %s229
    %p238 = scmp.eq.s32.totalorder %s24, 0
    %p239 = por %p237, %p238
    %p240 = scmp.ne.s32.totalorder %s228, %s229
    %p241 = scmp.eq.s32.totalorder %s25, 1
    %p242 = por %p240, %p241
    %p244 = scmp.ne.s32.totalorder %s229, %s243
    %p245 = scmp.eq.s32.totalorder %s25, 0
    %p246 = por %p244, %p245
    %s248 = sadd.s32 %s247, 1
    %p251 = scmp.eq.s32.totalorder %s19, 1
    %p252 = scmp.ne.s32.totalorder %s247, %s249
    %p253 = scmp.eq.s32.totalorder %s19, 0
    %p254 = por %p252, %p253
    %p255 = scmp.ne.s32.totalorder %s247, %s249
    %p256 = scmp.eq.s32.totalorder %s24, 1
    %p257 = por %p255, %p256
    %p258 = scmp.ne.s32.totalorder %s249, %s250
    %p259 = scmp.eq.s32.totalorder %s24, 0
    %p260 = por %p258, %p259
    %p261 = scmp.ne.s32.totalorder %s249, %s250
    %p262 = scmp.eq.s32.totalorder %s25, 1
    %p263 = por %p261, %p262
    %p265 = scmp.ne.s32.totalorder %s250, %s264
    %p266 = scmp.eq.s32.totalorder %s25, 0
    %p267 = por %p265, %p266
    %s268 = ssub.s32 %s19, %s26
    %p269 = scmp.eq.s32.totalorder %s268, 0
    %s271 = sadd.s32 %s270, 1
    %s272 = scalar_select %p269, %s270, %s271
    %p275 = pneg %p269
    %p276 = scmp.eq.s32.totalorder %s19, 1
    %p277 = por %p275, %p276
    %p278 = scmp.ne.s32.totalorder %s270, %s273
    %p279 = scmp.eq.s32.totalorder %s19, 0
    %p280 = por %p278, %p279
    %p281 = scmp.ne.s32.totalorder %s270, %s273
    %p282 = scmp.eq.s32.totalorder %s24, 1
    %p283 = por %p281, %p282
    %p284 = scmp.ne.s32.totalorder %s273, %s274
    %p285 = scmp.eq.s32.totalorder %s24, 0
    %p286 = por %p284, %p285
    %p287 = scmp.ne.s32.totalorder %s273, %s274
    %p288 = scmp.eq.s32.totalorder %s25, 1
    %p289 = por %p287, %p288
    %p291 = scmp.ne.s32.totalorder %s274, %s290
    %p292 = scmp.eq.s32.totalorder %s25, 0
    %p293 = por %p291, %p292
    %s294 = ssub.s32 %s19, %s26
    %p295 = scmp.eq.s32.totalorder %s294, 0
    %s297 = sadd.s32 %s296, 1
    %s298 = scalar_select %p295, %s296, %s297
    %p301 = pneg %p295
    %p302 = scmp.eq.s32.totalorder %s19, 1
    %p303 = por %p301, %p302
    %p304 = scmp.ne.s32.totalorder %s296, %s299
    %p305 = scmp.eq.s32.totalorder %s19, 0
    %p306 = por %p304, %p305
    %p307 = scmp.ne.s32.totalorder %s296, %s299
    %p308 = scmp.eq.s32.totalorder %s24, 1
    %p309 = por %p307, %p308
    %p310 = scmp.ne.s32.totalorder %s299, %s300
    %p311 = scmp.eq.s32.totalorder %s24, 0
    %p312 = por %p310, %p311
    %p313 = scmp.ne.s32.totalorder %s299, %s300
    %p314 = scmp.eq.s32.totalorder %s25, 1
    %p315 = por %p313, %p314
    %p317 = scmp.ne.s32.totalorder %s300, %s316
    %p318 = scmp.eq.s32.totalorder %s25, 0
    %p319 = por %p317, %p318
    %p320 = scmp.le.s32.totalorder 1, %s19
    %p321 = scmp.lt.s32.totalorder %s19, 3
    %p322 = pnand %p320, %p321
    %p323 = pneg %p322
    // Predicated region
    $region9: #{tpu_custom_call.1} parent=5 // pred_check
      _
    $region10: #{tpu_custom_call.1} parent=5 // pred_check_branch
      %325 = sbr.rel (%p322) target = $region12
    $region11: #{tpu_custom_call.1} parent=5 // pred_region
      %s326 = ssub.s32 %s19, 1
      // Predicated region
      $region13: #{tpu_custom_call.1} parent=11 // pred_check
        %p327 = pneg %p92
      $region14: #{tpu_custom_call.1} parent=11 // pred_check_branch
        %329 = sbr.rel (%p327) target = $region16
      $region15: #{tpu_custom_call.1} parent=11 // pred_region
        _
      $region16: #{tpu_custom_call.1} parent=11 // pred_fallthru
        _
      // Predicated region
      $region17: #{tpu_custom_call.1} parent=11 // pred_check
        %p330 = pneg %p113
      $region18: #{tpu_custom_call.1} parent=11 // pred_check_branch
        %332 = sbr.rel (%p330) target = $region20
      $region19: #{tpu_custom_call.1} parent=11 // pred_region
        _
      $region20: #{tpu_custom_call.1} parent=11 // pred_fallthru
        _
      // Predicated region
      $region21: #{tpu_custom_call.1} parent=11 // pred_check
        %p333 = pneg %p134
      $region22: #{tpu_custom_call.1} parent=11 // pred_check_branch
        %335 = sbr.rel (%p333) target = $region24
      $region23: #{tpu_custom_call.1} parent=11 // pred_region
        _
      $region24: #{tpu_custom_call.1} parent=11 // pred_fallthru
        _
      // Predicated region
      $region25: #{tpu_custom_call.1} parent=11 // pred_check
        %p336 = pneg %p155
      $region26: #{tpu_custom_call.1} parent=11 // pred_check_branch
        %338 = sbr.rel (%p336) target = $region28
      $region27: #{tpu_custom_call.1} parent=11 // pred_region
        _
      $region28: #{tpu_custom_call.1} parent=11 // pred_fallthru
        _
      // Predicated region
      $region29: #{tpu_custom_call.1} parent=11 // pred_check
        %p339 = pneg %p176
      $region30: #{tpu_custom_call.1} parent=11 // pred_check_branch
        %341 = sbr.rel (%p339) target = $region32
      $region31: #{tpu_custom_call.1} parent=11 // pred_region
        _
      $region32: #{tpu_custom_call.1} parent=11 // pred_fallthru
        _
      // Predicated region
      $region33: #{tpu_custom_call.1} parent=11 // pred_check
        %p342 = pneg %p197
      $region34: #{tpu_custom_call.1} parent=11 // pred_check_branch
        %344 = sbr.rel (%p342) target = $region36
      $region35: #{tpu_custom_call.1} parent=11 // pred_region
        _
      $region36: #{tpu_custom_call.1} parent=11 // pred_fallthru
        _
      // Predicated region
      $region37: #{tpu_custom_call.1} parent=11 // pred_check
        %p345 = pneg %p218
      $region38: #{tpu_custom_call.1} parent=11 // pred_check_branch
        %347 = sbr.rel (%p345) target = $region40
      $region39: #{tpu_custom_call.1} parent=11 // pred_region
        _
      $region40: #{tpu_custom_call.1} parent=11 // pred_fallthru
        _
      // Predicated region
      $region41: #{tpu_custom_call.1} parent=11 // pred_check
        %p348 = pneg %p239
      $region42: #{tpu_custom_call.1} parent=11 // pred_check_branch
        %350 = sbr.rel (%p348) target = $region44
      $region43: #{tpu_custom_call.1} parent=11 // pred_region
        _
      $region44: #{tpu_custom_call.1} parent=11 // pred_fallthru
        _
      // Predicated region
      $region45: #{tpu_custom_call.1} parent=11 // pred_check
        %p351 = pneg %p260
      $region46: #{tpu_custom_call.1} parent=11 // pred_check_branch
        %353 = sbr.rel (%p351) target = $region48
      $region47: #{tpu_custom_call.1} parent=11 // pred_region
        _
      $region48: #{tpu_custom_call.1} parent=11 // pred_fallthru
        _
    $region12: #{tpu_custom_call.1} parent=5 // pred_fallthru
      _
    %p354 = scmp.lt.s32.totalorder %s19, 2
    // Predicated region
    $region49: #{tpu_custom_call.1} parent=5 // pred_check
      %p355 = pneg %p354
    $region50: #{tpu_custom_call.1} parent=5 // pred_check_branch
      %357 = sbr.rel (%p355) target = $region52
    $region51: #{tpu_custom_call.1} parent=5 // pred_region
      // Predicated region
      $region53: #{tpu_custom_call.1} parent=51 // pred_check
        %p358 = pneg %p39
      $region54: #{tpu_custom_call.1} parent=51 // pred_check_branch
        %360 = sbr.rel (%p358) target = $region56
      $region55: #{tpu_custom_call.1} parent=51 // pred_region
        %s361 = smul.u32 2, %s19
        %p362 = scmp.lt.s32.totalorder %s361, 3
        %s363 = scalar_select %p362, %s361, 3
        %s364 = smul.addr %s363, 8
        %s365 = scalar_lea.vmem %s0, %s364
        %s366 = smul.u32 2, %s19
      $region56: #{tpu_custom_call.1} parent=51 // pred_fallthru
        _
      // Predicated region
      $region57: #{tpu_custom_call.1} parent=51 // pred_check
        %p367 = pneg %p65
      $region58: #{tpu_custom_call.1} parent=51 // pred_check_branch
        %369 = sbr.rel (%p367) target = $region60
      $region59: #{tpu_custom_call.1} parent=51 // pred_region
        %s370 = smul.u32 2, %s19
        %p371 = scmp.lt.s32.totalorder %s370, 3
        %s372 = scalar_select %p371, %s370, 3
        %s373 = smul.addr %s372, 8
        %s374 = scalar_lea.vmem %s1, %s373
        %s375 = smul.u32 2, %s19
      $region60: #{tpu_custom_call.1} parent=51 // pred_fallthru
        _
    $region52: #{tpu_custom_call.1} parent=5 // pred_fallthru
      _
    %p376 = scmp.le.s32.totalorder 1, %s19
    %p377 = scmp.lt.s32.totalorder %s19, 3
    %p378 = pnand %p376, %p377
    %p379 = pneg %p378
    // Predicated region
    $region61: #{tpu_custom_call.1} parent=5 // pred_check
      _
    $region62: #{tpu_custom_call.1} parent=5 // pred_check_branch
      %381 = sbr.rel (%p378) target = $region64
    $region63: #{tpu_custom_call.1} parent=5 // pred_region
      %s382 = ssub.s32 %s19, 1
      %s383 = smul.u32 2, %s24
      %p384 = scmp.lt.s32.totalorder %s383, 3
      %s385 = scalar_select %p384, %s383, 3
      %s386 = smul.addr %s385, 8
      %s387 = scalar_lea.vmem %s0, %s386
      %p388 = pneg %p45
      %p389 = pneg %p42
      %s390 = smul.u32 2, %s24
      %p391 = scmp.lt.s32.totalorder %s390, 3
      %s392 = scalar_select %p391, %s390, 3
      %s393 = smul.addr %s392, 8
      %s394 = scalar_lea.vmem %s1, %s393
      %p395 = pneg %p71
      %p396 = pneg %p68
      %p397 = pneg %p92
      %p398 = pneg %p89
      %p399 = pneg %p113
      %p400 = pneg %p110
      %p401 = pneg %p134
      %p402 = pneg %p131
      %p403 = pneg %p155
      %p404 = pneg %p152
      %p405 = pneg %p176
      %p406 = pneg %p173
      %p407 = pneg %p197
      %p408 = pneg %p194
      %p409 = pneg %p218
      %p410 = pneg %p215
      %p411 = pneg %p239
      %p412 = pneg %p236
      %p413 = pneg %p260
      %p414 = pneg %p257
      %p415 = pneg %p286
      %p416 = pneg %p283
      %s417 = smul.u32 2, %s24
      %p418 = scmp.lt.s32.totalorder %s417, 3
      %s419 = scalar_select %p418, %s417, 3
      %s420 = smul.addr %s419, 8
      %s421 = scalar_lea.vmem %s11, %s420
      %p422 = pneg %p312
      %p423 = pneg %p309
      %s424 = smul.u32 8, %s24
      %p425 = scmp.lt.s32.totalorder %s424, 15
      %s426 = scalar_select %p425, %s424, 15
      %s427 = smul.addr %s426, 8
      %s428 = scalar_lea.vmem %s12, %s427
      %s429 = smul.u32 2, %s24
      %p430 = scmp.lt.s32.totalorder %s429, 3
      %s431 = scalar_select %p430, %s429, 3
      %s432 = smul.addr %s431, 8
      %s433 = scalar_lea.vmem %s0, %s432
      %s434 = smul.u32 2, %s24
      %s435 = smul.u32 2, %s24
      %p436 = scmp.lt.s32.totalorder %s435, 3
      %s437 = scalar_select %p436, %s435, 3
      %s438 = smul.addr %s437, 8
      %s439 = scalar_lea.vmem %s1, %s438
      %s440 = smul.u32 2, %s24
      %s441 = smul.u32 2, %s24
      %p442 = scmp.lt.s32.totalorder %s441, 3
      %s443 = scalar_select %p442, %s441, 3
      %s444 = smul.addr %s443, 8
      %s445 = scalar_lea.vmem %s11, %s444
      %s446 = smul.u32 2, %s24
      %s447 = smul.u32 8, %s24
      %p448 = scmp.lt.s32.totalorder %s447, 15
      %s449 = scalar_select %p448, %s447, 15
      %s450 = smul.addr %s449, 8
      %s451 = scalar_lea.vmem %s12, %s450
      %s452 = smul.u32 8, %s24
      %v453 = vld [vmem:[%s433] sm:$0x1f]
      %v454 = vld [vmem:[%s433 + $0x8] sm:$0x1f]
      %v455 = vld [vmem:[%s439] sm:$0x3f]
      %v456 = vld [vmem:[%s439 + $0x8] sm:$0x3f]
      %v457 = vld [vmem:[%s2] sm:$0xff]
      %v458 = vld [vmem:[%s2 + $0x8] sm:$0xff]
      %v459 = vld [vmem:[%s2 + $0x10] sm:$0xff]
      %v460 = vld [vmem:[%s2 + $0x18] sm:$0xff]
      %v461 = vld [vmem:[%s2 + $0x20] sm:$0xff]
      %v462 = vld [vmem:[%s2 + $0x28] sm:$0xff]
      %v463 = vld [vmem:[%s2 + $0x30] sm:$0xff]
      %v464 = vld [vmem:[%s2 + $0x38] sm:$0xff]
      %v465 = vld [vmem:[%s2 + $0x40] sm:$0xff]
      %v466 = vld [vmem:[%s2 + $0x48] sm:$0xff]
      %v467 = vld [vmem:[%s2 + $0x50] sm:$0xff]
      %v468 = vld [vmem:[%s2 + $0x58] sm:$0xff]
      %v469 = vld [vmem:[%s2 + $0x60] sm:$0xff]
      %v470 = vld [vmem:[%s2 + $0x68] sm:$0xff]
      %v471 = vld [vmem:[%s2 + $0x70] sm:$0xff]
      %v472 = vld [vmem:[%s2 + $0x78] sm:$0xff]
      %v473 = vld [vmem:[%s4] sm:$0xff]
      %v474 = vld [vmem:[%s4 + $0x8] sm:$0xff]
      %v475 = vld [vmem:[%s4 + $0x10] sm:$0xff]
      %v476 = vld [vmem:[%s4 + $0x18] sm:$0xff]
      %v477 = vld [vmem:[%s4 + $0x20] sm:$0xff]
      %v478 = vld [vmem:[%s4 + $0x28] sm:$0xff]
      %v479 = vld [vmem:[%s4 + $0x30] sm:$0xff]
      %v480 = vld [vmem:[%s4 + $0x38] sm:$0xff]
      %v481 = vld [vmem:[%s4 + $0x40] sm:$0xff]
      %v482 = vld [vmem:[%s4 + $0x48] sm:$0xff]
      %v483 = vld [vmem:[%s4 + $0x50] sm:$0xff]
      %v484 = vld [vmem:[%s4 + $0x58] sm:$0xff]
      %v485 = vld [vmem:[%s4 + $0x60] sm:$0xff]
      %v486 = vld [vmem:[%s4 + $0x68] sm:$0xff]
      %v487 = vld [vmem:[%s4 + $0x70] sm:$0xff]
      %v488 = vld [vmem:[%s4 + $0x78] sm:$0xff]
      %v489 = vld [vmem:[%s3] sm:$0x1]
      %v490 = vld [vmem:[%s3 + $0x1] sm:$0x1]
      %v491 = vld [vmem:[%s3 + $0x2] sm:$0x1]
      %v492 = vld [vmem:[%s3 + $0x3] sm:$0x1]
      %v493 = vld [vmem:[%s5] sm:$0x1]
      %v494 = vld [vmem:[%s5 + $0x1] sm:$0x1]
      %v495 = vld [vmem:[%s5 + $0x2] sm:$0x1]
      %v496 = vld [vmem:[%s5 + $0x3] sm:$0x1]
      %v501 = vlaneseq
      %v502 = vshrl.u32 %v501, 7
      %v503 = vsub.s32 0, %v502
      %v504 = vrot.slane %v489, %v503
      %v505 = vlaneseq
      %v506 = vshrl.u32 %v505, 7
      %v507 = vsub.s32 0, %v506
      %v508 = vrot.slane %v490, %v507
      %v509 = vlaneseq
      %v510 = vshrl.u32 %v509, 7
      %v511 = vsub.s32 0, %v510
      %v512 = vrot.slane %v491, %v511
      %v513 = vlaneseq
      %v514 = vshrl.u32 %v513, 7
      %v515 = vsub.s32 0, %v514
      %v516 = vrot.slane %v492, %v515
      %vm521 = vcmask 261120
      %v523 = vsel %vm521, %v455, 0
      %525 = vmatprep.subr.mxu0 0.0
      %526 = vmatpush1.msra.mxu0 %v457
      %527 = vmatprep.subr.mxu0 0.0
      %528 = vmatpush1.msra.mxu0 %v458
      %529 = vmatprep.subr.mxu0 0.0
      %530 = vmatpush1.msra.mxu0 %v459
      %531 = vmatprep.subr.mxu0 0.0
      %532 = vmatpush1.msra.mxu0 %v460
      %533 = vmatprep.subr.mxu0 0.0
      %534 = vmatpush1.msra.mxu0 0.0
      %535 = vmatprep.subr.mxu0 0.0
      %536 = vmatpush1.msra.mxu0 0.0
      %537 = vmatprep.subr.mxu0 0.0
      %538 = vmatpush1.msra.mxu0 0.0
      %539 = vmatprep.subr.mxu0 0.0
      %540 = vmatpush1.msra.mxu0 0.0
      %541 = vmatprep.subr.mxu0 0.0
      %542 = vmatpush1.msra.mxu0 0.0
      %543 = vmatprep.subr.mxu0 0.0
      %544 = vmatpush1.msra.mxu0 0.0
      %545 = vmatprep.subr.mxu0 0.0
      %546 = vmatpush1.msra.mxu0 0.0
      %547 = vmatprep.subr.mxu0 0.0
      %548 = vmatpush1.msra.mxu0 0.0
      %549 = vmatprep.subr.mxu0 0.0
      %550 = vmatpush1.msra.mxu0 0.0
      %551 = vmatprep.subr.mxu0 0.0
      %552 = vmatpush1.msra.mxu0 0.0
      %553 = vmatprep.subr.mxu0 0.0
      %554 = vmatpush1.msra.mxu0 0.0
      %555 = vmatprep.subr.mxu0 0.0
      %556 = vmatpush1.msra.mxu0 0.0
      %557 = vmatprep.subr.mxu0 0.0
      %558 = vmatpush1.msra.mxu0 0.0
      %559 = vmatprep.subr.mxu0 0.0
      %560 = vmatpush1.msra.mxu0 0.0
      %561 = vmatprep.subr.mxu0 0.0
      %562 = vmatpush1.msra.mxu0 0.0
      %563 = vmatprep.subr.mxu0 0.0
      %564 = vmatpush1.msra.mxu0 0.0
      %565 = vmatprep.subr.mxu0 0.0
      %566 = vmatpush1.msra.mxu0 0.0
      %567 = vmatprep.subr.mxu0 0.0
      %568 = vmatpush1.msra.mxu0 0.0
      %569 = vmatprep.subr.mxu0 0.0
      %570 = vmatpush1.msra.mxu0 0.0
      %571 = vmatprep.subr.mxu0 0.0
      %572 = vmatpush1.msra.mxu0 0.0
      %573 = vmatprep.subr.mxu0 0.0
      %574 = vmatpush1.msra.mxu0 0.0
      %575 = vmatprep.subr.mxu0 0.0
      %576 = vmatpush1.msra.mxu0 0.0
      %577 = vmatprep.subr.mxu0 0.0
      %578 = vmatpush1.msra.mxu0 0.0
      %579 = vmatprep.subr.mxu0 0.0
      %580 = vmatpush1.msra.mxu0 0.0
      %581 = vmatprep.subr.mxu0 0.0
      %582 = vmatpush1.msra.mxu0 0.0
      %583 = vmatprep.subr.mxu0 0.0
      %584 = vmatpush1.msra.mxu0 0.0
      %585 = vmatprep.subr.mxu0 0.0
      %586 = vmatpush1.msra.mxu0 0.0
      %587 = vmatprep.subr.mxu0 0.0
      %588 = vmatpush1.msra.mxu0 0.0
      %589 = vmatprep.mubr.f32.mxu0 0.0
      %590 = vmatmul.mubr.f32.gmra.mrb[0].mxu0 %v523
      %v591 = vpop.f32.mrb[0].mxu0
      %v592 = vadd.f32 %v504, %v591
      %v593 = vpop.f32.mrb[0].mxu0
      %594 = vdwg.mxu0
      %595 = vmatprep.subr.mxu0 0.0
      %596 = vmatpush1.msra.mxu0 %v461
      %597 = vmatprep.subr.mxu0 0.0
      %598 = vmatpush1.msra.mxu0 %v462
      %599 = vmatprep.subr.mxu0 0.0
      %600 = vmatpush1.msra.mxu0 %v463
      %601 = vmatprep.subr.mxu0 0.0
      %602 = vmatpush1.msra.mxu0 %v464
      %603 = vmatprep.subr.mxu0 0.0
      %604 = vmatpush1.msra.mxu0 0.0
      %605 = vmatprep.subr.mxu0 0.0
      %606 = vmatpush1.msra.mxu0 0.0
      %607 = vmatprep.subr.mxu0 0.0
      %608 = vmatpush1.msra.mxu0 0.0
      %609 = vmatprep.subr.mxu0 0.0
      %610 = vmatpush1.msra.mxu0 0.0
      %611 = vmatprep.subr.mxu0 0.0
      %612 = vmatpush1.msra.mxu0 0.0
      %613 = vmatprep.subr.mxu0 0.0
      %614 = vmatpush1.msra.mxu0 0.0
      %615 = vmatprep.subr.mxu0 0.0
      %616 = vmatpush1.msra.mxu0 0.0
      %617 = vmatprep.subr.mxu0 0.0
      %618 = vmatpush1.msra.mxu0 0.0
      %619 = vmatprep.subr.mxu0 0.0
      %620 = vmatpush1.msra.mxu0 0.0
      %621 = vmatprep.subr.mxu0 0.0
      %622 = vmatpush1.msra.mxu0 0.0
      %623 = vmatprep.subr.mxu0 0.0
      %624 = vmatpush1.msra.mxu0 0.0
      %625 = vmatprep.subr.mxu0 0.0
      %626 = vmatpush1.msra.mxu0 0.0
      %627 = vmatprep.subr.mxu0 0.0
      %628 = vmatpush1.msra.mxu0 0.0
      %629 = vmatprep.subr.mxu0 0.0
      %630 = vmatpush1.msra.mxu0 0.0
      %631 = vmatprep.subr.mxu0 0.0
      %632 = vmatpush1.msra.mxu0 0.0
      %633 = vmatprep.subr.mxu0 0.0
      %634 = vmatpush1.msra.mxu0 0.0
      %635 = vmatprep.subr.mxu0 0.0
      %636 = vmatpush1.msra.mxu0 0.0
      %637 = vmatprep.subr.mxu0 0.0
      %638 = vmatpush1.msra.mxu0 0.0
      %639 = vmatprep.subr.mxu0 0.0
      %640 = vmatpush1.msra.mxu0 0.0
      %641 = vmatprep.subr.mxu0 0.0
      %642 = vmatpush1.msra.mxu0 0.0
      %643 = vmatprep.subr.mxu0 0.0
      %644 = vmatpush1.msra.mxu0 0.0
      %645 = vmatprep.subr.mxu0 0.0
      %646 = vmatpush1.msra.mxu0 0.0
      %647 = vmatprep.subr.mxu0 0.0
      %648 = vmatpush1.msra.mxu0 0.0
      %649 = vmatprep.subr.mxu0 0.0
      %650 = vmatpush1.msra.mxu0 0.0
      %651 = vmatprep.subr.mxu0 0.0
      %652 = vmatpush1.msra.mxu0 0.0
      %653 = vmatprep.subr.mxu0 0.0
      %654 = vmatpush1.msra.mxu0 0.0
      %655 = vmatprep.subr.mxu0 0.0
      %656 = vmatpush1.msra.mxu0 0.0
      %657 = vmatprep.subr.mxu0 0.0
      %658 = vmatpush1.msra.mxu0 0.0
      %659 = vmatprep.mubr.f32.mxu0 0.0
      %660 = vmatmul.mubr.f32.gmra.mrb[0].mxu0 %v523
      %v661 = vpop.f32.mrb[0].mxu0
      %v662 = vadd.f32 %v508, %v661
      %v663 = vpop.f32.mrb[0].mxu0
      %664 = vdwg.mxu0
      %665 = vmatprep.subr.mxu0 0.0
      %666 = vmatpush1.msra.mxu0 %v465
      %667 = vmatprep.subr.mxu0 0.0
      %668 = vmatpush1.msra.mxu0 %v466
      %669 = vmatprep.subr.mxu0 0.0
      %670 = vmatpush1.msra.mxu0 %v467
      %671 = vmatprep.subr.mxu0 0.0
      %672 = vmatpush1.msra.mxu0 %v468
      %673 = vmatprep.subr.mxu0 0.0
      %674 = vmatpush1.msra.mxu0 0.0
      %675 = vmatprep.subr.mxu0 0.0
      %676 = vmatpush1.msra.mxu0 0.0
      %677 = vmatprep.subr.mxu0 0.0
      %678 = vmatpush1.msra.mxu0 0.0
      %679 = vmatprep.subr.mxu0 0.0
      %680 = vmatpush1.msra.mxu0 0.0
      %681 = vmatprep.subr.mxu0 0.0
      %682 = vmatpush1.msra.mxu0 0.0
      %683 = vmatprep.subr.mxu0 0.0
      %684 = vmatpush1.msra.mxu0 0.0
      %685 = vmatprep.subr.mxu0 0.0
      %686 = vmatpush1.msra.mxu0 0.0
      %687 = vmatprep.subr.mxu0 0.0
      %688 = vmatpush1.msra.mxu0 0.0
      %689 = vmatprep.subr.mxu0 0.0
      %690 = vmatpush1.msra.mxu0 0.0
      %691 = vmatprep.subr.mxu0 0.0
      %692 = vmatpush1.msra.mxu0 0.0
      %693 = vmatprep.subr.mxu0 0.0
      %694 = vmatpush1.msra.mxu0 0.0
      %695 = vmatprep.subr.mxu0 0.0
      %696 = vmatpush1.msra.mxu0 0.0
      %697 = vmatprep.subr.mxu0 0.0
      %698 = vmatpush1.msra.mxu0 0.0
      %699 = vmatprep.subr.mxu0 0.0
      %700 = vmatpush1.msra.mxu0 0.0
      %701 = vmatprep.subr.mxu0 0.0
      %702 = vmatpush1.msra.mxu0 0.0
      %703 = vmatprep.subr.mxu0 0.0
      %704 = vmatpush1.msra.mxu0 0.0
      %705 = vmatprep.subr.mxu0 0.0
      %706 = vmatpush1.msra.mxu0 0.0
      %707 = vmatprep.subr.mxu0 0.0
      %708 = vmatpush1.msra.mxu0 0.0
      %709 = vmatprep.subr.mxu0 0.0
      %710 = vmatpush1.msra.mxu0 0.0
      %711 = vmatprep.subr.mxu0 0.0
      %712 = vmatpush1.msra.mxu0 0.0
      %713 = vmatprep.subr.mxu0 0.0
      %714 = vmatpush1.msra.mxu0 0.0
      %715 = vmatprep.subr.mxu0 0.0
      %716 = vmatpush1.msra.mxu0 0.0
      %717 = vmatprep.subr.mxu0 0.0
      %718 = vmatpush1.msra.mxu0 0.0
      %719 = vmatprep.subr.mxu0 0.0
      %720 = vmatpush1.msra.mxu0 0.0
      %721 = vmatprep.subr.mxu0 0.0
      %722 = vmatpush1.msra.mxu0 0.0
      %723 = vmatprep.subr.mxu0 0.0
      %724 = vmatpush1.msra.mxu0 0.0
      %725 = vmatprep.subr.mxu0 0.0
      %726 = vmatpush1.msra.mxu0 0.0
      %727 = vmatprep.subr.mxu0 0.0
      %728 = vmatpush1.msra.mxu0 0.0
      %729 = vmatprep.mubr.f32.mxu0 0.0
      %730 = vmatmul.mubr.f32.gmra.mrb[0].mxu0 %v523
      %v731 = vpop.f32.mrb[0].mxu0
      %v732 = vadd.f32 %v512, %v731
      %v733 = vpop.f32.mrb[0].mxu0
      %734 = vdwg.mxu0
      %735 = vmatprep.subr.mxu0 0.0
      %736 = vmatpush1.msra.mxu0 %v469
      %737 = vmatprep.subr.mxu0 0.0
      %738 = vmatpush1.msra.mxu0 %v470
      %739 = vmatprep.subr.mxu0 0.0
      %740 = vmatpush1.msra.mxu0 %v471
      %741 = vmatprep.subr.mxu0 0.0
      %742 = vmatpush1.msra.mxu0 %v472
      %743 = vmatprep.subr.mxu0 0.0
      %744 = vmatpush1.msra.mxu0 0.0
      %745 = vmatprep.subr.mxu0 0.0
      %746 = vmatpush1.msra.mxu0 0.0
      %747 = vmatprep.subr.mxu0 0.0
      %748 = vmatpush1.msra.mxu0 0.0
      %749 = vmatprep.subr.mxu0 0.0
      %750 = vmatpush1.msra.mxu0 0.0
      %751 = vmatprep.subr.mxu0 0.0
      %752 = vmatpush1.msra.mxu0 0.0
      %753 = vmatprep.subr.mxu0 0.0
      %754 = vmatpush1.msra.mxu0 0.0
      %755 = vmatprep.subr.mxu0 0.0
      %756 = vmatpush1.msra.mxu0 0.0
      %757 = vmatprep.subr.mxu0 0.0
      %758 = vmatpush1.msra.mxu0 0.0
      %759 = vmatprep.subr.mxu0 0.0
      %760 = vmatpush1.msra.mxu0 0.0
      %761 = vmatprep.subr.mxu0 0.0
      %762 = vmatpush1.msra.mxu0 0.0
      %763 = vmatprep.subr.mxu0 0.0
      %764 = vmatpush1.msra.mxu0 0.0
      %765 = vmatprep.subr.mxu0 0.0
      %766 = vmatpush1.msra.mxu0 0.0
      %767 = vmatprep.subr.mxu0 0.0
      %768 = vmatpush1.msra.mxu0 0.0
      %769 = vmatprep.subr.mxu0 0.0
      %770 = vmatpush1.msra.mxu0 0.0
      %771 = vmatprep.subr.mxu0 0.0
      %772 = vmatpush1.msra.mxu0 0.0
      %773 = vmatprep.subr.mxu0 0.0
      %774 = vmatpush1.msra.mxu0 0.0
      %775 = vmatprep.subr.mxu0 0.0
      %776 = vmatpush1.msra.mxu0 0.0
      %777 = vmatprep.subr.mxu0 0.0
      %778 = vmatpush1.msra.mxu0 0.0
      %779 = vmatprep.subr.mxu0 0.0
      %780 = vmatpush1.msra.mxu0 0.0
      %781 = vmatprep.subr.mxu0 0.0
      %782 = vmatpush1.msra.mxu0 0.0
      %783 = vmatprep.subr.mxu0 0.0
      %784 = vmatpush1.msra.mxu0 0.0
      %785 = vmatprep.subr.mxu0 0.0
      %786 = vmatpush1.msra.mxu0 0.0
      %787 = vmatprep.subr.mxu0 0.0
      %788 = vmatpush1.msra.mxu0 0.0
      %789 = vmatprep.subr.mxu0 0.0
      %790 = vmatpush1.msra.mxu0 0.0
      %791 = vmatprep.subr.mxu0 0.0
      %792 = vmatpush1.msra.mxu0 0.0
      %793 = vmatprep.subr.mxu0 0.0
      %794 = vmatpush1.msra.mxu0 0.0
      %795 = vmatprep.subr.mxu0 0.0
      %796 = vmatpush1.msra.mxu0 0.0
      %797 = vmatprep.subr.mxu0 0.0
      %798 = vmatpush1.msra.mxu0 0.0
      %799 = vmatprep.mubr.f32.mxu0 0.0
      %800 = vmatmul.mubr.f32.gmra.mrb[0].mxu0 %v523
      %v801 = vpop.f32.mrb[0].mxu0
      %v802 = vadd.f32 %v516, %v801
      %v803 = vpop.f32.mrb[0].mxu0
      %804 = vdwg.mxu0
      %v806 = vsel %vm521, %v456, 0
      %808 = vmatprep.subr.mxu0 0.0
      %809 = vmatpush1.msra.mxu0 %v457
      %810 = vmatprep.subr.mxu0 0.0
      %811 = vmatpush1.msra.mxu0 %v458
      %812 = vmatprep.subr.mxu0 0.0
      %813 = vmatpush1.msra.mxu0 %v459
      %814 = vmatprep.subr.mxu0 0.0
      %815 = vmatpush1.msra.mxu0 %v460
      %816 = vmatprep.subr.mxu0 0.0
      %817 = vmatpush1.msra.mxu0 0.0
      %818 = vmatprep.subr.mxu0 0.0
      %819 = vmatpush1.msra.mxu0 0.0
      %820 = vmatprep.subr.mxu0 0.0
      %821 = vmatpush1.msra.mxu0 0.0
      %822 = vmatprep.subr.mxu0 0.0
      %823 = vmatpush1.msra.mxu0 0.0
      %824 = vmatprep.subr.mxu0 0.0
      %825 = vmatpush1.msra.mxu0 0.0
      %826 = vmatprep.subr.mxu0 0.0
      %827 = vmatpush1.msra.mxu0 0.0
      %828 = vmatprep.subr.mxu0 0.0
      %829 = vmatpush1.msra.mxu0 0.0
      %830 = vmatprep.subr.mxu0 0.0
      %831 = vmatpush1.msra.mxu0 0.0
      %832 = vmatprep.subr.mxu0 0.0
      %833 = vmatpush1.msra.mxu0 0.0
      %834 = vmatprep.subr.mxu0 0.0
      %835 = vmatpush1.msra.mxu0 0.0
      %836 = vmatprep.subr.mxu0 0.0
      %837 = vmatpush1.msra.mxu0 0.0
      %838 = vmatprep.subr.mxu0 0.0
      %839 = vmatpush1.msra.mxu0 0.0
      %840 = vmatprep.subr.mxu0 0.0
      %841 = vmatpush1.msra.mxu0 0.0
      %842 = vmatprep.subr.mxu0 0.0
      %843 = vmatpush1.msra.mxu0 0.0
      %844 = vmatprep.subr.mxu0 0.0
      %845 = vmatpush1.msra.mxu0 0.0
      %846 = vmatprep.subr.mxu0 0.0
      %847 = vmatpush1.msra.mxu0 0.0
      %848 = vmatprep.subr.mxu0 0.0
      %849 = vmatpush1.msra.mxu0 0.0
      %850 = vmatprep.subr.mxu0 0.0
      %851 = vmatpush1.msra.mxu0 0.0
      %852 = vmatprep.subr.mxu0 0.0
      %853 = vmatpush1.msra.mxu0 0.0
      %854 = vmatprep.subr.mxu0 0.0
      %855 = vmatpush1.msra.mxu0 0.0
      %856 = vmatprep.subr.mxu0 0.0
      %857 = vmatpush1.msra.mxu0 0.0
      %858 = vmatprep.subr.mxu0 0.0
      %859 = vmatpush1.msra.mxu0 0.0
      %860 = vmatprep.subr.mxu0 0.0
      %861 = vmatpush1.msra.mxu0 0.0
      %862 = vmatprep.subr.mxu0 0.0
      %863 = vmatpush1.msra.mxu0 0.0
      %864 = vmatprep.subr.mxu0 0.0
      %865 = vmatpush1.msra.mxu0 0.0
      %866 = vmatprep.subr.mxu0 0.0
      %867 = vmatpush1.msra.mxu0 0.0
      %868 = vmatprep.subr.mxu0 0.0
      %869 = vmatpush1.msra.mxu0 0.0
      %870 = vmatprep.subr.mxu0 0.0
      %871 = vmatpush1.msra.mxu0 0.0
      %872 = vmatprep.mubr.f32.mxu0 0.0
      %873 = vmatmul.mubr.f32.gmra.mrb[0].mxu0 %v806
      %v874 = vpop.f32.mrb[0].mxu0
      %v875 = vadd.f32 %v504, %v874
      %v876 = vpop.f32.mrb[0].mxu0
      %877 = vdwg.mxu0
      %878 = vmatprep.subr.mxu0 0.0
      %879 = vmatpush1.msra.mxu0 %v461
      %880 = vmatprep.subr.mxu0 0.0
      %881 = vmatpush1.msra.mxu0 %v462
      %882 = vmatprep.subr.mxu0 0.0
      %883 = vmatpush1.msra.mxu0 %v463
      %884 = vmatprep.subr.mxu0 0.0
      %885 = vmatpush1.msra.mxu0 %v464
      %886 = vmatprep.subr.mxu0 0.0
      %887 = vmatpush1.msra.mxu0 0.0
      %888 = vmatprep.subr.mxu0 0.0
      %889 = vmatpush1.msra.mxu0 0.0
      %890 = vmatprep.subr.mxu0 0.0
      %891 = vmatpush1.msra.mxu0 0.0
      %892 = vmatprep.subr.mxu0 0.0
      %893 = vmatpush1.msra.mxu0 0.0
      %894 = vmatprep.subr.mxu0 0.0
      %895 = vmatpush1.msra.mxu0 0.0
      %896 = vmatprep.subr.mxu0 0.0
      %897 = vmatpush1.msra.mxu0 0.0
      %898 = vmatprep.subr.mxu0 0.0
      %899 = vmatpush1.msra.mxu0 0.0
      %900 = vmatprep.subr.mxu0 0.0
      %901 = vmatpush1.msra.mxu0 0.0
      %902 = vmatprep.subr.mxu0 0.0
      %903 = vmatpush1.msra.mxu0 0.0
      %904 = vmatprep.subr.mxu0 0.0
      %905 = vmatpush1.msra.mxu0 0.0
      %906 = vmatprep.subr.mxu0 0.0
      %907 = vmatpush1.msra.mxu0 0.0
      %908 = vmatprep.subr.mxu0 0.0
      %909 = vmatpush1.msra.mxu0 0.0
      %910 = vmatprep.subr.mxu0 0.0
      %911 = vmatpush1.msra.mxu0 0.0
      %912 = vmatprep.subr.mxu0 0.0
      %913 = vmatpush1.msra.mxu0 0.0
      %914 = vmatprep.subr.mxu0 0.0
      %915 = vmatpush1.msra.mxu0 0.0
      %916 = vmatprep.subr.mxu0 0.0
      %917 = vmatpush1.msra.mxu0 0.0
      %918 = vmatprep.subr.mxu0 0.0
      %919 = vmatpush1.msra.mxu0 0.0
      %920 = vmatprep.subr.mxu0 0.0
      %921 = vmatpush1.msra.mxu0 0.0
      %922 = vmatprep.subr.mxu0 0.0
      %923 = vmatpush1.msra.mxu0 0.0
      %924 = vmatprep.subr.mxu0 0.0
      %925 = vmatpush1.msra.mxu0 0.0
      %926 = vmatprep.subr.mxu0 0.0
      %927 = vmatpush1.msra.mxu0 0.0
      %928 = vmatprep.subr.mxu0 0.0
      %929 = vmatpush1.msra.mxu0 0.0
      %930 = vmatprep.subr.mxu0 0.0
      %931 = vmatpush1.msra.mxu0 0.0
      %932 = vmatprep.subr.mxu0 0.0
      %933 = vmatpush1.msra.mxu0 0.0
      %934 = vmatprep.subr.mxu0 0.0
      %935 = vmatpush1.msra.mxu0 0.0
      %936 = vmatprep.subr.mxu0 0.0
      %937 = vmatpush1.msra.mxu0 0.0
      %938 = vmatprep.subr.mxu0 0.0
      %939 = vmatpush1.msra.mxu0 0.0
      %940 = vmatprep.subr.mxu0 0.0
      %941 = vmatpush1.msra.mxu0 0.0
      %942 = vmatprep.mubr.f32.mxu0 0.0
      %943 = vmatmul.mubr.f32.gmra.mrb[0].mxu0 %v806
      %v944 = vpop.f32.mrb[0].mxu0
      %v945 = vadd.f32 %v508, %v944
      %v946 = vpop.f32.mrb[0].mxu0
      %947 = vdwg.mxu0
      %948 = vmatprep.subr.mxu0 0.0
      %949 = vmatpush1.msra.mxu0 %v465
      %950 = vmatprep.subr.mxu0 0.0
      %951 = vmatpush1.msra.mxu0 %v466
      %952 = vmatprep.subr.mxu0 0.0
      %953 = vmatpush1.msra.mxu0 %v467
      %954 = vmatprep.subr.mxu0 0.0
      %955 = vmatpush1.msra.mxu0 %v468
      %956 = vmatprep.subr.mxu0 0.0
      %957 = vmatpush1.msra.mxu0 0.0
      %958 = vmatprep.subr.mxu0 0.0
      %959 = vmatpush1.msra.mxu0 0.0
      %960 = vmatprep.subr.mxu0 0.0
      %961 = vmatpush1.msra.mxu0 0.0
      %962 = vmatprep.subr.mxu0 0.0
      %963 = vmatpush1.msra.mxu0 0.0
      %964 = vmatprep.subr.mxu0 0.0
      %965 = vmatpush1.msra.mxu0 0.0
      %966 = vmatprep.subr.mxu0 0.0
      %967 = vmatpush1.msra.mxu0 0.0
      %968 = vmatprep.subr.mxu0 0.0
      %969 = vmatpush1.msra.mxu0 0.0
      %970 = vmatprep.subr.mxu0 0.0
      %971 = vmatpush1.msra.mxu0 0.0
      %972 = vmatprep.subr.mxu0 0.0
      %973 = vmatpush1.msra.mxu0 0.0
      %974 = vmatprep.subr.mxu0 0.0
      %975 = vmatpush1.msra.mxu0 0.0
      %976 = vmatprep.subr.mxu0 0.0
      %977 = vmatpush1.msra.mxu0 0.0
      %978 = vmatprep.subr.mxu0 0.0
      %979 = vmatpush1.msra.mxu0 0.0
      %980 = vmatprep.subr.mxu0 0.0
      %981 = vmatpush1.msra.mxu0 0.0
      %982 = vmatprep.subr.mxu0 0.0
      %983 = vmatpush1.msra.mxu0 0.0
      %984 = vmatprep.subr.mxu0 0.0
      %985 = vmatpush1.msra.mxu0 0.0
      %986 = vmatprep.subr.mxu0 0.0
      %987 = vmatpush1.msra.mxu0 0.0
      %988 = vmatprep.subr.mxu0 0.0
      %989 = vmatpush1.msra.mxu0 0.0
      %990 = vmatprep.subr.mxu0 0.0
      %991 = vmatpush1.msra.mxu0 0.0
      %992 = vmatprep.subr.mxu0 0.0
      %993 = vmatpush1.msra.mxu0 0.0
      %994 = vmatprep.subr.mxu0 0.0
      %995 = vmatpush1.msra.mxu0 0.0
      %996 = vmatprep.subr.mxu0 0.0
      %997 = vmatpush1.msra.mxu0 0.0
      %998 = vmatprep.subr.mxu0 0.0
      %999 = vmatpush1.msra.mxu0 0.0
      %1000 = vmatprep.subr.mxu0 0.0
      %1001 = vmatpush1.msra.mxu0 0.0
      %1002 = vmatprep.subr.mxu0 0.0
      %1003 = vmatpush1.msra.mxu0 0.0
      %1004 = vmatprep.subr.mxu0 0.0
      %1005 = vmatpush1.msra.mxu0 0.0
      %1006 = vmatprep.subr.mxu0 0.0
      %1007 = vmatpush1.msra.mxu0 0.0
      %1008 = vmatprep.subr.mxu0 0.0
      %1009 = vmatpush1.msra.mxu0 0.0
      %1010 = vmatprep.subr.mxu0 0.0
      %1011 = vmatpush1.msra.mxu0 0.0
      %1012 = vmatprep.mubr.f32.mxu0 0.0
      %1013 = vmatmul.mubr.f32.gmra.mrb[0].mxu0 %v806
      %v1014 = vpop.f32.mrb[0].mxu0
      %v1015 = vadd.f32 %v512, %v1014
      %v1016 = vpop.f32.mrb[0].mxu0
      %1017 = vdwg.mxu0
      %1018 = vmatprep.subr.mxu0 0.0
      %1019 = vmatpush1.msra.mxu0 %v469
      %1020 = vmatprep.subr.mxu0 0.0
      %1021 = vmatpush1.msra.mxu0 %v470
      %1022 = vmatprep.subr.mxu0 0.0
      %1023 = vmatpush1.msra.mxu0 %v471
      %1024 = vmatprep.subr.mxu0 0.0
      %1025 = vmatpush1.msra.mxu0 %v472
      %1026 = vmatprep.subr.mxu0 0.0
      %1027 = vmatpush1.msra.mxu0 0.0
      %1028 = vmatprep.subr.mxu0 0.0
      %1029 = vmatpush1.msra.mxu0 0.0
      %1030 = vmatprep.subr.mxu0 0.0
      %1031 = vmatpush1.msra.mxu0 0.0
      %1032 = vmatprep.subr.mxu0 0.0
      %1033 = vmatpush1.msra.mxu0 0.0
      %1034 = vmatprep.subr.mxu0 0.0
      %1035 = vmatpush1.msra.mxu0 0.0
      %1036 = vmatprep.subr.mxu0 0.0
      %1037 = vmatpush1.msra.mxu0 0.0
      %1038 = vmatprep.subr.mxu0 0.0
      %1039 = vmatpush1.msra.mxu0 0.0
      %1040 = vmatprep.subr.mxu0 0.0
      %1041 = vmatpush1.msra.mxu0 0.0
      %1042 = vmatprep.subr.mxu0 0.0
      %1043 = vmatpush1.msra.mxu0 0.0
      %1044 = vmatprep.subr.mxu0 0.0
      %1045 = vmatpush1.msra.mxu0 0.0
      %1046 = vmatprep.subr.mxu0 0.0
      %1047 = vmatpush1.msra.mxu0 0.0
      %1048 = vmatprep.subr.mxu0 0.0
      %1049 = vmatpush1.msra.mxu0 0.0
      %1050 = vmatprep.subr.mxu0 0.0
      %1051 = vmatpush1.msra.mxu0 0.0
      %1052 = vmatprep.subr.mxu0 0.0
      %1053 = vmatpush1.msra.mxu0 0.0
      %1054 = vmatprep.subr.mxu0 0.0
      %1055 = vmatpush1.msra.mxu0 0.0
      %1056 = vmatprep.subr.mxu0 0.0
      %1057 = vmatpush1.msra.mxu0 0.0
      %1058 = vmatprep.subr.mxu0 0.0
      %1059 = vmatpush1.msra.mxu0 0.0
      %1060 = vmatprep.subr.mxu0 0.0
      %1061 = vmatpush1.msra.mxu0 0.0
      %1062 = vmatprep.subr.mxu0 0.0
      %1063 = vmatpush1.msra.mxu0 0.0
      %1064 = vmatprep.subr.mxu0 0.0
      %1065 = vmatpush1.msra.mxu0 0.0
      %1066 = vmatprep.subr.mxu0 0.0
      %1067 = vmatpush1.msra.mxu0 0.0
      %1068 = vmatprep.subr.mxu0 0.0
      %1069 = vmatpush1.msra.mxu0 0.0
      %1070 = vmatprep.subr.mxu0 0.0
      %1071 = vmatpush1.msra.mxu0 0.0
      %1072 = vmatprep.subr.mxu0 0.0
      %1073 = vmatpush1.msra.mxu0 0.0
      %1074 = vmatprep.subr.mxu0 0.0
      %1075 = vmatpush1.msra.mxu0 0.0
      %1076 = vmatprep.subr.mxu0 0.0
      %1077 = vmatpush1.msra.mxu0 0.0
      %1078 = vmatprep.subr.mxu0 0.0
      %1079 = vmatpush1.msra.mxu0 0.0
      %1080 = vmatprep.subr.mxu0 0.0
      %1081 = vmatpush1.msra.mxu0 0.0
      %1082 = vmatprep.mubr.f32.mxu0 0.0
      %1083 = vmatmul.mubr.f32.gmra.mrb[0].mxu0 %v806
      %v1084 = vpop.f32.mrb[0].mxu0
      %v1085 = vadd.f32 %v516, %v1084
      %v1086 = vpop.f32.mrb[0].mxu0
      %1087 = vdwg.mxu0
      %v1092 = vlaneseq
      %v1093 = vshrl.u32 %v1092, 7
      %v1094 = vsub.s32 0, %v1093
      %v1095 = vrot.slane %v493, %v1094
      %v1096 = vlaneseq
      %v1097 = vshrl.u32 %v1096, 7
      %v1098 = vsub.s32 0, %v1097
      %v1099 = vrot.slane %v494, %v1098
      %v1100 = vlaneseq
      %v1101 = vshrl.u32 %v1100, 7
      %v1102 = vsub.s32 0, %v1101
      %v1103 = vrot.slane %v495, %v1102
      %v1104 = vlaneseq
      %v1105 = vshrl.u32 %v1104, 7
      %v1106 = vsub.s32 0, %v1105
      %v1107 = vrot.slane %v496, %v1106
      %v1113 = vsel %vm521, %v453, 0
      %1115 = vmatprep.subr.mxu0 0.0
      %1116 = vmatpush1.msra.mxu0 %v473
      %1117 = vmatprep.subr.mxu0 0.0
      %1118 = vmatpush1.msra.mxu0 %v474
      %1119 = vmatprep.subr.mxu0 0.0
      %1120 = vmatpush1.msra.mxu0 %v475
      %1121 = vmatprep.subr.mxu0 0.0
      %1122 = vmatpush1.msra.mxu0 %v476
      %1123 = vmatprep.subr.mxu0 0.0
      %1124 = vmatpush1.msra.mxu0 0.0
      %1125 = vmatprep.subr.mxu0 0.0
      %1126 = vmatpush1.msra.mxu0 0.0
      %1127 = vmatprep.subr.mxu0 0.0
      %1128 = vmatpush1.msra.mxu0 0.0
      %1129 = vmatprep.subr.mxu0 0.0
      %1130 = vmatpush1.msra.mxu0 0.0
      %1131 = vmatprep.subr.mxu0 0.0
      %1132 = vmatpush1.msra.mxu0 0.0
      %1133 = vmatprep.subr.mxu0 0.0
      %1134 = vmatpush1.msra.mxu0 0.0
      %1135 = vmatprep.subr.mxu0 0.0
      %1136 = vmatpush1.msra.mxu0 0.0
      %1137 = vmatprep.subr.mxu0 0.0
      %1138 = vmatpush1.msra.mxu0 0.0
      %1139 = vmatprep.subr.mxu0 0.0
      %1140 = vmatpush1.msra.mxu0 0.0
      %1141 = vmatprep.subr.mxu0 0.0
      %1142 = vmatpush1.msra.mxu0 0.0
      %1143 = vmatprep.subr.mxu0 0.0
      %1144 = vmatpush1.msra.mxu0 0.0
      %1145 = vmatprep.subr.mxu0 0.0
      %1146 = vmatpush1.msra.mxu0 0.0
      %1147 = vmatprep.subr.mxu0 0.0
      %1148 = vmatpush1.msra.mxu0 0.0
      %1149 = vmatprep.subr.mxu0 0.0
      %1150 = vmatpush1.msra.mxu0 0.0
      %1151 = vmatprep.subr.mxu0 0.0
      %1152 = vmatpush1.msra.mxu0 0.0
      %1153 = vmatprep.subr.mxu0 0.0
      %1154 = vmatpush1.msra.mxu0 0.0
      %1155 = vmatprep.subr.mxu0 0.0
      %1156 = vmatpush1.msra.mxu0 0.0
      %1157 = vmatprep.subr.mxu0 0.0
      %1158 = vmatpush1.msra.mxu0 0.0
      %1159 = vmatprep.subr.mxu0 0.0
      %1160 = vmatpush1.msra.mxu0 0.0
      %1161 = vmatprep.subr.mxu0 0.0
      %1162 = vmatpush1.msra.mxu0 0.0
      %1163 = vmatprep.subr.mxu0 0.0
      %1164 = vmatpush1.msra.mxu0 0.0
      %1165 = vmatprep.subr.mxu0 0.0
      %1166 = vmatpush1.msra.mxu0 0.0
      %1167 = vmatprep.subr.mxu0 0.0
      %1168 = vmatpush1.msra.mxu0 0.0
      %1169 = vmatprep.subr.mxu0 0.0
      %1170 = vmatpush1.msra.mxu0 0.0
      %1171 = vmatprep.subr.mxu0 0.0
      %1172 = vmatpush1.msra.mxu0 0.0
      %1173 = vmatprep.subr.mxu0 0.0
      %1174 = vmatpush1.msra.mxu0 0.0
      %1175 = vmatprep.subr.mxu0 0.0
      %1176 = vmatpush1.msra.mxu0 0.0
      %1177 = vmatprep.subr.mxu0 0.0
      %1178 = vmatpush1.msra.mxu0 0.0
      %1179 = vmatprep.mubr.f32.mxu0 0.0
      %1180 = vmatmul.mubr.f32.gmra.mrb[0].mxu0 %v1113
      %v1181 = vpop.f32.mrb[0].mxu0
      %v1182 = vadd.f32 %v1095, %v1181
      %v1183 = vpop.f32.mrb[0].mxu0
      %1184 = vdwg.mxu0
      %1185 = vmatprep.subr.mxu0 0.0
      %1186 = vmatpush1.msra.mxu0 %v477
      %1187 = vmatprep.subr.mxu0 0.0
      %1188 = vmatpush1.msra.mxu0 %v478
      %1189 = vmatprep.subr.mxu0 0.0
      %1190 = vmatpush1.msra.mxu0 %v479
      %1191 = vmatprep.subr.mxu0 0.0
      %1192 = vmatpush1.msra.mxu0 %v480
      %1193 = vmatprep.subr.mxu0 0.0
      %1194 = vmatpush1.msra.mxu0 0.0
      %1195 = vmatprep.subr.mxu0 0.0
      %1196 = vmatpush1.msra.mxu0 0.0
      %1197 = vmatprep.subr.mxu0 0.0
      %1198 = vmatpush1.msra.mxu0 0.0
      %1199 = vmatprep.subr.mxu0 0.0
      %1200 = vmatpush1.msra.mxu0 0.0
      %1201 = vmatprep.subr.mxu0 0.0
      %1202 = vmatpush1.msra.mxu0 0.0
      %1203 = vmatprep.subr.mxu0 0.0
      %1204 = vmatpush1.msra.mxu0 0.0
      %1205 = vmatprep.subr.mxu0 0.0
      %1206 = vmatpush1.msra.mxu0 0.0
      %1207 = vmatprep.subr.mxu0 0.0
      %1208 = vmatpush1.msra.mxu0 0.0
      %1209 = vmatprep.subr.mxu0 0.0
      %1210 = vmatpush1.msra.mxu0 0.0
      %1211 = vmatprep.subr.mxu0 0.0
      %1212 = vmatpush1.msra.mxu0 0.0
      %1213 = vmatprep.subr.mxu0 0.0
      %1214 = vmatpush1.msra.mxu0 0.0
      %1215 = vmatprep.subr.mxu0 0.0
      %1216 = vmatpush1.msra.mxu0 0.0
      %1217 = vmatprep.subr.mxu0 0.0
      %1218 = vmatpush1.msra.mxu0 0.0
      %1219 = vmatprep.subr.mxu0 0.0
      %1220 = vmatpush1.msra.mxu0 0.0
      %1221 = vmatprep.subr.mxu0 0.0
      %1222 = vmatpush1.msra.mxu0 0.0
      %1223 = vmatprep.subr.mxu0 0.0
      %1224 = vmatpush1.msra.mxu0 0.0
      %1225 = vmatprep.subr.mxu0 0.0
      %1226 = vmatpush1.msra.mxu0 0.0
      %1227 = vmatprep.subr.mxu0 0.0
      %1228 = vmatpush1.msra.mxu0 0.0
      %1229 = vmatprep.subr.mxu0 0.0
      %1230 = vmatpush1.msra.mxu0 0.0
      %1231 = vmatprep.subr.mxu0 0.0
      %1232 = vmatpush1.msra.mxu0 0.0
      %1233 = vmatprep.subr.mxu0 0.0
      %1234 = vmatpush1.msra.mxu0 0.0
      %1235 = vmatprep.subr.mxu0 0.0
      %1236 = vmatpush1.msra.mxu0 0.0
      %1237 = vmatprep.subr.mxu0 0.0
      %1238 = vmatpush1.msra.mxu0 0.0
      %1239 = vmatprep.subr.mxu0 0.0
      %1240 = vmatpush1.msra.mxu0 0.0
      %1241 = vmatprep.subr.mxu0 0.0
      %1242 = vmatpush1.msra.mxu0 0.0
      %1243 = vmatprep.subr.mxu0 0.0
      %1244 = vmatpush1.msra.mxu0 0.0
      %1245 = vmatprep.subr.mxu0 0.0
      %1246 = vmatpush1.msra.mxu0 0.0
      %1247 = vmatprep.subr.mxu0 0.0
      %1248 = vmatpush1.msra.mxu0 0.0
      %1249 = vmatprep.mubr.f32.mxu0 0.0
      %1250 = vmatmul.mubr.f32.gmra.mrb[0].mxu0 %v1113
      %v1251 = vpop.f32.mrb[0].mxu0
      %v1252 = vadd.f32 %v1099, %v1251
      %v1253 = vpop.f32.mrb[0].mxu0
      %1254 = vdwg.mxu0
      %1255 = vmatprep.subr.mxu0 0.0
      %1256 = vmatpush1.msra.mxu0 %v481
      %1257 = vmatprep.subr.mxu0 0.0
      %1258 = vmatpush1.msra.mxu0 %v482
      %1259 = vmatprep.subr.mxu0 0.0
      %1260 = vmatpush1.msra.mxu0 %v483
      %1261 = vmatprep.subr.mxu0 0.0
      %1262 = vmatpush1.msra.mxu0 %v484
      %1263 = vmatprep.subr.mxu0 0.0
      %1264 = vmatpush1.msra.mxu0 0.0
      %1265 = vmatprep.subr.mxu0 0.0
      %1266 = vmatpush1.msra.mxu0 0.0
      %1267 = vmatprep.subr.mxu0 0.0
      %1268 = vmatpush1.msra.mxu0 0.0
      %1269 = vmatprep.subr.mxu0 0.0
      %1270 = vmatpush1.msra.mxu0 0.0
      %1271 = vmatprep.subr.mxu0 0.0
      %1272 = vmatpush1.msra.mxu0 0.0
      %1273 = vmatprep.subr.mxu0 0.0
      %1274 = vmatpush1.msra.mxu0 0.0
      %1275 = vmatprep.subr.mxu0 0.0
      %1276 = vmatpush1.msra.mxu0 0.0
      %1277 = vmatprep.subr.mxu0 0.0
      %1278 = vmatpush1.msra.mxu0 0.0
      %1279 = vmatprep.subr.mxu0 0.0
      %1280 = vmatpush1.msra.mxu0 0.0
      %1281 = vmatprep.subr.mxu0 0.0
      %1282 = vmatpush1.msra.mxu0 0.0
      %1283 = vmatprep.subr.mxu0 0.0
      %1284 = vmatpush1.msra.mxu0 0.0
      %1285 = vmatprep.subr.mxu0 0.0
      %1286 = vmatpush1.msra.mxu0 0.0
      %1287 = vmatprep.subr.mxu0 0.0
      %1288 = vmatpush1.msra.mxu0 0.0
      %1289 = vmatprep.subr.mxu0 0.0
      %1290 = vmatpush1.msra.mxu0 0.0
      %1291 = vmatprep.subr.mxu0 0.0
      %1292 = vmatpush1.msra.mxu0 0.0
      %1293 = vmatprep.subr.mxu0 0.0
      %1294 = vmatpush1.msra.mxu0 0.0
      %1295 = vmatprep.subr.mxu0 0.0
      %1296 = vmatpush1.msra.mxu0 0.0
      %1297 = vmatprep.subr.mxu0 0.0
      %1298 = vmatpush1.msra.mxu0 0.0
      %1299 = vmatprep.subr.mxu0 0.0
      %1300 = vmatpush1.msra.mxu0 0.0
      %1301 = vmatprep.subr.mxu0 0.0
      %1302 = vmatpush1.msra.mxu0 0.0
      %1303 = vmatprep.subr.mxu0 0.0
      %1304 = vmatpush1.msra.mxu0 0.0
      %1305 = vmatprep.subr.mxu0 0.0
      %1306 = vmatpush1.msra.mxu0 0.0
      %1307 = vmatprep.subr.mxu0 0.0
      %1308 = vmatpush1.msra.mxu0 0.0
      %1309 = vmatprep.subr.mxu0 0.0
      %1310 = vmatpush1.msra.mxu0 0.0
      %1311 = vmatprep.subr.mxu0 0.0
      %1312 = vmatpush1.msra.mxu0 0.0
      %1313 = vmatprep.subr.mxu0 0.0
      %1314 = vmatpush1.msra.mxu0 0.0
      %1315 = vmatprep.subr.mxu0 0.0
      %1316 = vmatpush1.msra.mxu0 0.0
      %1317 = vmatprep.subr.mxu0 0.0
      %1318 = vmatpush1.msra.mxu0 0.0
      %1319 = vmatprep.mubr.f32.mxu0 0.0
      %1320 = vmatmul.mubr.f32.gmra.mrb[0].mxu0 %v1113
      %v1321 = vpop.f32.mrb[0].mxu0
      %v1322 = vadd.f32 %v1103, %v1321
      %v1323 = vpop.f32.mrb[0].mxu0
      %1324 = vdwg.mxu0
      %1325 = vmatprep.subr.mxu0 0.0
      %1326 = vmatpush1.msra.mxu0 %v485
      %1327 = vmatprep.subr.mxu0 0.0
      %1328 = vmatpush1.msra.mxu0 %v486
      %1329 = vmatprep.subr.mxu0 0.0
      %1330 = vmatpush1.msra.mxu0 %v487
      %1331 = vmatprep.subr.mxu0 0.0
      %1332 = vmatpush1.msra.mxu0 %v488
      %1333 = vmatprep.subr.mxu0 0.0
      %1334 = vmatpush1.msra.mxu0 0.0
      %1335 = vmatprep.subr.mxu0 0.0
      %1336 = vmatpush1.msra.mxu0 0.0
      %1337 = vmatprep.subr.mxu0 0.0
      %1338 = vmatpush1.msra.mxu0 0.0
      %1339 = vmatprep.subr.mxu0 0.0
      %1340 = vmatpush1.msra.mxu0 0.0
      %1341 = vmatprep.subr.mxu0 0.0
      %1342 = vmatpush1.msra.mxu0 0.0
      %1343 = vmatprep.subr.mxu0 0.0
      %1344 = vmatpush1.msra.mxu0 0.0
      %1345 = vmatprep.subr.mxu0 0.0
      %1346 = vmatpush1.msra.mxu0 0.0
      %1347 = vmatprep.subr.mxu0 0.0
      %1348 = vmatpush1.msra.mxu0 0.0
      %1349 = vmatprep.subr.mxu0 0.0
      %1350 = vmatpush1.msra.mxu0 0.0
      %1351 = vmatprep.subr.mxu0 0.0
      %1352 = vmatpush1.msra.mxu0 0.0
      %1353 = vmatprep.subr.mxu0 0.0
      %1354 = vmatpush1.msra.mxu0 0.0
      %1355 = vmatprep.subr.mxu0 0.0
      %1356 = vmatpush1.msra.mxu0 0.0
      %1357 = vmatprep.subr.mxu0 0.0
      %1358 = vmatpush1.msra.mxu0 0.0
      %1359 = vmatprep.subr.mxu0 0.0
      %1360 = vmatpush1.msra.mxu0 0.0
      %1361 = vmatprep.subr.mxu0 0.0
      %1362 = vmatpush1.msra.mxu0 0.0
      %1363 = vmatprep.subr.mxu0 0.0
      %1364 = vmatpush1.msra.mxu0 0.0
      %1365 = vmatprep.subr.mxu0 0.0
      %1366 = vmatpush1.msra.mxu0 0.0
      %1367 = vmatprep.subr.mxu0 0.0
      %1368 = vmatpush1.msra.mxu0 0.0
      %1369 = vmatprep.subr.mxu0 0.0
      %1370 = vmatpush1.msra.mxu0 0.0
      %1371 = vmatprep.subr.mxu0 0.0
      %1372 = vmatpush1.msra.mxu0 0.0
      %1373 = vmatprep.subr.mxu0 0.0
      %1374 = vmatpush1.msra.mxu0 0.0
      %1375 = vmatprep.subr.mxu0 0.0
      %1376 = vmatpush1.msra.mxu0 0.0
      %1377 = vmatprep.subr.mxu0 0.0
      %1378 = vmatpush1.msra.mxu0 0.0
      %1379 = vmatprep.subr.mxu0 0.0
      %1380 = vmatpush1.msra.mxu0 0.0
      %1381 = vmatprep.subr.mxu0 0.0
      %1382 = vmatpush1.msra.mxu0 0.0
      %1383 = vmatprep.subr.mxu0 0.0
      %1384 = vmatpush1.msra.mxu0 0.0
      %1385 = vmatprep.subr.mxu0 0.0
      %1386 = vmatpush1.msra.mxu0 0.0
      %1387 = vmatprep.subr.mxu0 0.0
      %1388 = vmatpush1.msra.mxu0 0.0
      %1389 = vmatprep.mubr.f32.mxu0 0.0
      %1390 = vmatmul.mubr.f32.gmra.mrb[0].mxu0 %v1113
      %v1391 = vpop.f32.mrb[0].mxu0
      %v1392 = vadd.f32 %v1107, %v1391
      %v1393 = vpop.f32.mrb[0].mxu0
      %1394 = vdwg.mxu0
      %v1396 = vsel %vm521, %v454, 0
      %1398 = vmatprep.subr.mxu0 0.0
      %1399 = vmatpush1.msra.mxu0 %v473
      %1400 = vmatprep.subr.mxu0 0.0
      %1401 = vmatpush1.msra.mxu0 %v474
      %1402 = vmatprep.subr.mxu0 0.0
      %1403 = vmatpush1.msra.mxu0 %v475
      %1404 = vmatprep.subr.mxu0 0.0
      %1405 = vmatpush1.msra.mxu0 %v476
      %1406 = vmatprep.subr.mxu0 0.0
      %1407 = vmatpush1.msra.mxu0 0.0
      %1408 = vmatprep.subr.mxu0 0.0
      %1409 = vmatpush1.msra.mxu0 0.0
      %1410 = vmatprep.subr.mxu0 0.0
      %1411 = vmatpush1.msra.mxu0 0.0
      %1412 = vmatprep.subr.mxu0 0.0
      %1413 = vmatpush1.msra.mxu0 0.0
      %1414 = vmatprep.subr.mxu0 0.0
      %1415 = vmatpush1.msra.mxu0 0.0
      %1416 = vmatprep.subr.mxu0 0.0
      %1417 = vmatpush1.msra.mxu0 0.0
      %1418 = vmatprep.subr.mxu0 0.0
      %1419 = vmatpush1.msra.mxu0 0.0
      %1420 = vmatprep.subr.mxu0 0.0
      %1421 = vmatpush1.msra.mxu0 0.0
      %1422 = vmatprep.subr.mxu0 0.0
      %1423 = vmatpush1.msra.mxu0 0.0
      %1424 = vmatprep.subr.mxu0 0.0
      %1425 = vmatpush1.msra.mxu0 0.0
      %1426 = vmatprep.subr.mxu0 0.0
      %1427 = vmatpush1.msra.mxu0 0.0
      %1428 = vmatprep.subr.mxu0 0.0
      %1429 = vmatpush1.msra.mxu0 0.0
      %1430 = vmatprep.subr.mxu0 0.0
      %1431 = vmatpush1.msra.mxu0 0.0
      %1432 = vmatprep.subr.mxu0 0.0
      %1433 = vmatpush1.msra.mxu0 0.0
      %1434 = vmatprep.subr.mxu0 0.0
      %1435 = vmatpush1.msra.mxu0 0.0
      %1436 = vmatprep.subr.mxu0 0.0
      %1437 = vmatpush1.msra.mxu0 0.0
      %1438 = vmatprep.subr.mxu0 0.0
      %1439 = vmatpush1.msra.mxu0 0.0
      %1440 = vmatprep.subr.mxu0 0.0
      %1441 = vmatpush1.msra.mxu0 0.0
      %1442 = vmatprep.subr.mxu0 0.0
      %1443 = vmatpush1.msra.mxu0 0.0
      %1444 = vmatprep.subr.mxu0 0.0
      %1445 = vmatpush1.msra.mxu0 0.0
      %1446 = vmatprep.subr.mxu0 0.0
      %1447 = vmatpush1.msra.mxu0 0.0
      %1448 = vmatprep.subr.mxu0 0.0
      %1449 = vmatpush1.msra.mxu0 0.0
      %1450 = vmatprep.subr.mxu0 0.0
      %1451 = vmatpush1.msra.mxu0 0.0
      %1452 = vmatprep.subr.mxu0 0.0
      %1453 = vmatpush1.msra.mxu0 0.0
      %1454 = vmatprep.subr.mxu0 0.0
      %1455 = vmatpush1.msra.mxu0 0.0
      %1456 = vmatprep.subr.mxu0 0.0
      %1457 = vmatpush1.msra.mxu0 0.0
      %1458 = vmatprep.subr.mxu0 0.0
      %1459 = vmatpush1.msra.mxu0 0.0
      %1460 = vmatprep.subr.mxu0 0.0
      %1461 = vmatpush1.msra.mxu0 0.0
      %1462 = vmatprep.mubr.f32.mxu0 0.0
      %1463 = vmatmul.mubr.f32.gmra.mrb[0].mxu0 %v1396
      %v1464 = vpop.f32.mrb[0].mxu0
      %v1465 = vadd.f32 %v1095, %v1464
      %v1466 = vpop.f32.mrb[0].mxu0
      %1467 = vdwg.mxu0
      %1468 = vmatprep.subr.mxu0 0.0
      %1469 = vmatpush1.msra.mxu0 %v477
      %1470 = vmatprep.subr.mxu0 0.0
      %1471 = vmatpush1.msra.mxu0 %v478
      %1472 = vmatprep.subr.mxu0 0.0
      %1473 = vmatpush1.msra.mxu0 %v479
      %1474 = vmatprep.subr.mxu0 0.0
      %1475 = vmatpush1.msra.mxu0 %v480
      %1476 = vmatprep.subr.mxu0 0.0
      %1477 = vmatpush1.msra.mxu0 0.0
      %1478 = vmatprep.subr.mxu0 0.0
      %1479 = vmatpush1.msra.mxu0 0.0
      %1480 = vmatprep.subr.mxu0 0.0
      %1481 = vmatpush1.msra.mxu0 0.0
      %1482 = vmatprep.subr.mxu0 0.0
      %1483 = vmatpush1.msra.mxu0 0.0
      %1484 = vmatprep.subr.mxu0 0.0
      %1485 = vmatpush1.msra.mxu0 0.0
      %1486 = vmatprep.subr.mxu0 0.0
      %1487 = vmatpush1.msra.mxu0 0.0
      %1488 = vmatprep.subr.mxu0 0.0
      %1489 = vmatpush1.msra.mxu0 0.0
      %1490 = vmatprep.subr.mxu0 0.0
      %1491 = vmatpush1.msra.mxu0 0.0
      %1492 = vmatprep.subr.mxu0 0.0
      %1493 = vmatpush1.msra.mxu0 0.0
      %1494 = vmatprep.subr.mxu0 0.0
      %1495 = vmatpush1.msra.mxu0 0.0
      %1496 = vmatprep.subr.mxu0 0.0
      %1497 = vmatpush1.msra.mxu0 0.0
      %1498 = vmatprep.subr.mxu0 0.0
      %1499 = vmatpush1.msra.mxu0 0.0
      %1500 = vmatprep.subr.mxu0 0.0
      %1501 = vmatpush1.msra.mxu0 0.0
      %1502 = vmatprep.subr.mxu0 0.0
      %1503 = vmatpush1.msra.mxu0 0.0
      %1504 = vmatprep.subr.mxu0 0.0
      %1505 = vmatpush1.msra.mxu0 0.0
      %1506 = vmatprep.subr.mxu0 0.0
      %1507 = vmatpush1.msra.mxu0 0.0
      %1508 = vmatprep.subr.mxu0 0.0
      %1509 = vmatpush1.msra.mxu0 0.0
      %1510 = vmatprep.subr.mxu0 0.0
      %1511 = vmatpush1.msra.mxu0 0.0
      %1512 = vmatprep.subr.mxu0 0.0
      %1513 = vmatpush1.msra.mxu0 0.0
      %1514 = vmatprep.subr.mxu0 0.0
      %1515 = vmatpush1.msra.mxu0 0.0
      %1516 = vmatprep.subr.mxu0 0.0
      %1517 = vmatpush1.msra.mxu0 0.0
      %1518 = vmatprep.subr.mxu0 0.0
      %1519 = vmatpush1.msra.mxu0 0.0
      %1520 = vmatprep.subr.mxu0 0.0
      %1521 = vmatpush1.msra.mxu0 0.0
      %1522 = vmatprep.subr.mxu0 0.0
      %1523 = vmatpush1.msra.mxu0 0.0
      %1524 = vmatprep.subr.mxu0 0.0
      %1525 = vmatpush1.msra.mxu0 0.0
      %1526 = vmatprep.subr.mxu0 0.0
      %1527 = vmatpush1.msra.mxu0 0.0
      %1528 = vmatprep.subr.mxu0 0.0
      %1529 = vmatpush1.msra.mxu0 0.0
      %1530 = vmatprep.subr.mxu0 0.0
      %1531 = vmatpush1.msra.mxu0 0.0
      %1532 = vmatprep.mubr.f32.mxu0 0.0
      %1533 = vmatmul.mubr.f32.gmra.mrb[0].mxu0 %v1396
      %v1534 = vpop.f32.mrb[0].mxu0
      %v1535 = vadd.f32 %v1099, %v1534
      %v1536 = vpop.f32.mrb[0].mxu0
      %1537 = vdwg.mxu0
      %1538 = vmatprep.subr.mxu0 0.0
      %1539 = vmatpush1.msra.mxu0 %v481
      %1540 = vmatprep.subr.mxu0 0.0
      %1541 = vmatpush1.msra.mxu0 %v482
      %1542 = vmatprep.subr.mxu0 0.0
      %1543 = vmatpush1.msra.mxu0 %v483
      %1544 = vmatprep.subr.mxu0 0.0
      %1545 = vmatpush1.msra.mxu0 %v484
      %1546 = vmatprep.subr.mxu0 0.0
      %1547 = vmatpush1.msra.mxu0 0.0
      %1548 = vmatprep.subr.mxu0 0.0
      %1549 = vmatpush1.msra.mxu0 0.0
      %1550 = vmatprep.subr.mxu0 0.0
      %1551 = vmatpush1.msra.mxu0 0.0
      %1552 = vmatprep.subr.mxu0 0.0
      %1553 = vmatpush1.msra.mxu0 0.0
      %1554 = vmatprep.subr.mxu0 0.0
      %1555 = vmatpush1.msra.mxu0 0.0
      %1556 = vmatprep.subr.mxu0 0.0
      %1557 = vmatpush1.msra.mxu0 0.0
      %1558 = vmatprep.subr.mxu0 0.0
      %1559 = vmatpush1.msra.mxu0 0.0
      %1560 = vmatprep.subr.mxu0 0.0
      %1561 = vmatpush1.msra.mxu0 0.0
      %1562 = vmatprep.subr.mxu0 0.0
      %1563 = vmatpush1.msra.mxu0 0.0
      %1564 = vmatprep.subr.mxu0 0.0
      %1565 = vmatpush1.msra.mxu0 0.0
      %1566 = vmatprep.subr.mxu0 0.0
      %1567 = vmatpush1.msra.mxu0 0.0
      %1568 = vmatprep.subr.mxu0 0.0
      %1569 = vmatpush1.msra.mxu0 0.0
      %1570 = vmatprep.subr.mxu0 0.0
      %1571 = vmatpush1.msra.mxu0 0.0
      %1572 = vmatprep.subr.mxu0 0.0
      %1573 = vmatpush1.msra.mxu0 0.0
      %1574 = vmatprep.subr.mxu0 0.0
      %1575 = vmatpush1.msra.mxu0 0.0
      %1576 = vmatprep.subr.mxu0 0.0
      %1577 = vmatpush1.msra.mxu0 0.0
      %1578 = vmatprep.subr.mxu0 0.0
      %1579 = vmatpush1.msra.mxu0 0.0
      %1580 = vmatprep.subr.mxu0 0.0
      %1581 = vmatpush1.msra.mxu0 0.0
      %1582 = vmatprep.subr.mxu0 0.0
      %1583 = vmatpush1.msra.mxu0 0.0
      %1584 = vmatprep.subr.mxu0 0.0
      %1585 = vmatpush1.msra.mxu0 0.0
      %1586 = vmatprep.subr.mxu0 0.0
      %1587 = vmatpush1.msra.mxu0 0.0
      %1588 = vmatprep.subr.mxu0 0.0
      %1589 = vmatpush1.msra.mxu0 0.0
      %1590 = vmatprep.subr.mxu0 0.0
      %1591 = vmatpush1.msra.mxu0 0.0
      %1592 = vmatprep.subr.mxu0 0.0
      %1593 = vmatpush1.msra.mxu0 0.0
      %1594 = vmatprep.subr.mxu0 0.0
      %1595 = vmatpush1.msra.mxu0 0.0
      %1596 = vmatprep.subr.mxu0 0.0
      %1597 = vmatpush1.msra.mxu0 0.0
      %1598 = vmatprep.subr.mxu0 0.0
      %1599 = vmatpush1.msra.mxu0 0.0
      %1600 = vmatprep.subr.mxu0 0.0
      %1601 = vmatpush1.msra.mxu0 0.0
      %1602 = vmatprep.mubr.f32.mxu0 0.0
      %1603 = vmatmul.mubr.f32.gmra.mrb[0].mxu0 %v1396
      %v1604 = vpop.f32.mrb[0].mxu0
      %v1605 = vadd.f32 %v1103, %v1604
      %v1606 = vpop.f32.mrb[0].mxu0
      %1607 = vdwg.mxu0
      %1608 = vmatprep.subr.mxu0 0.0
      %1609 = vmatpush1.msra.mxu0 %v485
      %1610 = vmatprep.subr.mxu0 0.0
      %1611 = vmatpush1.msra.mxu0 %v486
      %1612 = vmatprep.subr.mxu0 0.0
      %1613 = vmatpush1.msra.mxu0 %v487
      %1614 = vmatprep.subr.mxu0 0.0
      %1615 = vmatpush1.msra.mxu0 %v488
      %1616 = vmatprep.subr.mxu0 0.0
      %1617 = vmatpush1.msra.mxu0 0.0
      %1618 = vmatprep.subr.mxu0 0.0
      %1619 = vmatpush1.msra.mxu0 0.0
      %1620 = vmatprep.subr.mxu0 0.0
      %1621 = vmatpush1.msra.mxu0 0.0
      %1622 = vmatprep.subr.mxu0 0.0
      %1623 = vmatpush1.msra.mxu0 0.0
      %1624 = vmatprep.subr.mxu0 0.0
      %1625 = vmatpush1.msra.mxu0 0.0
      %1626 = vmatprep.subr.mxu0 0.0
      %1627 = vmatpush1.msra.mxu0 0.0
      %1628 = vmatprep.subr.mxu0 0.0
      %1629 = vmatpush1.msra.mxu0 0.0
      %1630 = vmatprep.subr.mxu0 0.0
      %1631 = vmatpush1.msra.mxu0 0.0
      %1632 = vmatprep.subr.mxu0 0.0
      %1633 = vmatpush1.msra.mxu0 0.0
      %1634 = vmatprep.subr.mxu0 0.0
      %1635 = vmatpush1.msra.mxu0 0.0
      %1636 = vmatprep.subr.mxu0 0.0
      %1637 = vmatpush1.msra.mxu0 0.0
      %1638 = vmatprep.subr.mxu0 0.0
      %1639 = vmatpush1.msra.mxu0 0.0
      %1640 = vmatprep.subr.mxu0 0.0
      %1641 = vmatpush1.msra.mxu0 0.0
      %1642 = vmatprep.subr.mxu0 0.0
      %1643 = vmatpush1.msra.mxu0 0.0
      %1644 = vmatprep.subr.mxu0 0.0
      %1645 = vmatpush1.msra.mxu0 0.0
      %1646 = vmatprep.subr.mxu0 0.0
      %1647 = vmatpush1.msra.mxu0 0.0
      %1648 = vmatprep.subr.mxu0 0.0
      %1649 = vmatpush1.msra.mxu0 0.0
      %1650 = vmatprep.subr.mxu0 0.0
      %1651 = vmatpush1.msra.mxu0 0.0
      %1652 = vmatprep.subr.mxu0 0.0
      %1653 = vmatpush1.msra.mxu0 0.0
      %1654 = vmatprep.subr.mxu0 0.0
      %1655 = vmatpush1.msra.mxu0 0.0
      %1656 = vmatprep.subr.mxu0 0.0
      %1657 = vmatpush1.msra.mxu0 0.0
      %1658 = vmatprep.subr.mxu0 0.0
      %1659 = vmatpush1.msra.mxu0 0.0
      %1660 = vmatprep.subr.mxu0 0.0
      %1661 = vmatpush1.msra.mxu0 0.0
      %1662 = vmatprep.subr.mxu0 0.0
      %1663 = vmatpush1.msra.mxu0 0.0
      %1664 = vmatprep.subr.mxu0 0.0
      %1665 = vmatpush1.msra.mxu0 0.0
      %1666 = vmatprep.subr.mxu0 0.0
      %1667 = vmatpush1.msra.mxu0 0.0
      %1668 = vmatprep.subr.mxu0 0.0
      %1669 = vmatpush1.msra.mxu0 0.0
      %1670 = vmatprep.subr.mxu0 0.0
      %1671 = vmatpush1.msra.mxu0 0.0
      %1672 = vmatprep.mubr.f32.mxu0 0.0
      %1673 = vmatmul.mubr.f32.gmra.mrb[0].mxu0 %v1396
      %v1674 = vpop.f32.mrb[0].mxu0
      %v1675 = vadd.f32 %v1107, %v1674
      %v1676 = vpop.f32.mrb[0].mxu0
      %1677 = vdwg.mxu0
      %vm1678 = vcmask 64512
      %v1680 = vsel %vm1678, %v1182, 0
      %v1683 = vsel %vm1678, %v592, 0
      %1685 = vmatprep.subr.mxu0 0.0
      %1686 = vmatpush1.xpose.msra.mxu0 %v1683
      %1687 = vmatprep.subr.mxu0 0.0
      %1688 = vmatpush1.xpose.msra.mxu0 0.0
      %1689 = vmatprep.subr.mxu0 0.0
      %1690 = vmatpush1.xpose.msra.mxu0 0.0
      %1691 = vmatprep.subr.mxu0 0.0
      %1692 = vmatpush1.xpose.msra.mxu0 0.0
      %1693 = vmatprep.subr.mxu0 0.0
      %1694 = vmatpush1.xpose.msra.mxu0 0.0
      %1695 = vmatprep.subr.mxu0 0.0
      %1696 = vmatpush1.xpose.msra.mxu0 0.0
      %1697 = vmatprep.subr.mxu0 0.0
      %1698 = vmatpush1.xpose.msra.mxu0 0.0
      %1699 = vmatprep.subr.mxu0 0.0
      %1700 = vmatpush1.xpose.msra.mxu0 0.0
      %1701 = vmatprep.subr.mxu0 0.0
      %1702 = vmatpush1.xpose.msra.mxu0 0.0
      %1703 = vmatprep.subr.mxu0 0.0
      %1704 = vmatpush1.xpose.msra.mxu0 0.0
      %1705 = vmatprep.subr.mxu0 0.0
      %1706 = vmatpush1.xpose.msra.mxu0 0.0
      %1707 = vmatprep.subr.mxu0 0.0
      %1708 = vmatpush1.xpose.msra.mxu0 0.0
      %1709 = vmatprep.subr.mxu0 0.0
      %1710 = vmatpush1.xpose.msra.mxu0 0.0
      %1711 = vmatprep.subr.mxu0 0.0
      %1712 = vmatpush1.xpose.msra.mxu0 0.0
      %1713 = vmatprep.subr.mxu0 0.0
      %1714 = vmatpush1.xpose.msra.mxu0 0.0
      %1715 = vmatprep.subr.mxu0 0.0
      %1716 = vmatpush1.xpose.msra.mxu0 0.0
      %1717 = vmatprep.subr.mxu0 0.0
      %1718 = vmatpush1.xpose.msra.mxu0 0.0
      %1719 = vmatprep.subr.mxu0 0.0
      %1720 = vmatpush1.xpose.msra.mxu0 0.0
      %1721 = vmatprep.subr.mxu0 0.0
      %1722 = vmatpush1.xpose.msra.mxu0 0.0
      %1723 = vmatprep.subr.mxu0 0.0
      %1724 = vmatpush1.xpose.msra.mxu0 0.0
      %1725 = vmatprep.subr.mxu0 0.0
      %1726 = vmatpush1.xpose.msra.mxu0 0.0
      %1727 = vmatprep.subr.mxu0 0.0
      %1728 = vmatpush1.xpose.msra.mxu0 0.0
      %1729 = vmatprep.subr.mxu0 0.0
      %1730 = vmatpush1.xpose.msra.mxu0 0.0
      %1731 = vmatprep.subr.mxu0 0.0
      %1732 = vmatpush1.xpose.msra.mxu0 0.0
      %1733 = vmatprep.subr.mxu0 0.0
      %1734 = vmatpush1.xpose.msra.mxu0 0.0
      %1735 = vmatprep.subr.mxu0 0.0
      %1736 = vmatpush1.xpose.msra.mxu0 0.0
      %1737 = vmatprep.subr.mxu0 0.0
      %1738 = vmatpush1.xpose.msra.mxu0 0.0
      %1739 = vmatprep.subr.mxu0 0.0
      %1740 = vmatpush1.xpose.msra.mxu0 0.0
      %1741 = vmatprep.subr.mxu0 0.0
      %1742 = vmatpush1.xpose.msra.mxu0 0.0
      %1743 = vmatprep.subr.mxu0 0.0
      %1744 = vmatpush1.xpose.msra.mxu0 0.0
      %1745 = vmatprep.subr.mxu0 0.0
      %1746 = vmatpush1.xpose.msra.mxu0 0.0
      %1747 = vmatprep.subr.mxu0 0.0
      %1748 = vmatpush1.xpose.msra.mxu0 0.0
      %1749 = vmatprep.mubr.f32.mxu0 0.0
      %1750 = vmatmul.mubr.f32.gmra.mrb[0].mxu0 %v1680
      %v1751 = vpop.f32.mrb[0].mxu0
      %v1752 = vadd.f32 0.0, %v1751
      %v1753 = vpop.f32.mrb[0].mxu0
      %1754 = vdwg.mxu0
      %v1756 = vsel %vm1678, %v1252, 0
      %v1759 = vsel %vm1678, %v662, 0
      %1761 = vmatprep.subr.mxu0 0.0
      %1762 = vmatpush1.xpose.msra.mxu0 %v1759
      %1763 = vmatprep.subr.mxu0 0.0
      %1764 = vmatpush1.xpose.msra.mxu0 0.0
      %1765 = vmatprep.subr.mxu0 0.0
      %1766 = vmatpush1.xpose.msra.mxu0 0.0
      %1767 = vmatprep.subr.mxu0 0.0
      %1768 = vmatpush1.xpose.msra.mxu0 0.0
      %1769 = vmatprep.subr.mxu0 0.0
      %1770 = vmatpush1.xpose.msra.mxu0 0.0
      %1771 = vmatprep.subr.mxu0 0.0
      %1772 = vmatpush1.xpose.msra.mxu0 0.0
      %1773 = vmatprep.subr.mxu0 0.0
      %1774 = vmatpush1.xpose.msra.mxu0 0.0
      %1775 = vmatprep.subr.mxu0 0.0
      %1776 = vmatpush1.xpose.msra.mxu0 0.0
      %1777 = vmatprep.subr.mxu0 0.0
      %1778 = vmatpush1.xpose.msra.mxu0 0.0
      %1779 = vmatprep.subr.mxu0 0.0
      %1780 = vmatpush1.xpose.msra.mxu0 0.0
      %1781 = vmatprep.subr.mxu0 0.0
      %1782 = vmatpush1.xpose.msra.mxu0 0.0
      %1783 = vmatprep.subr.mxu0 0.0
      %1784 = vmatpush1.xpose.msra.mxu0 0.0
      %1785 = vmatprep.subr.mxu0 0.0
      %1786 = vmatpush1.xpose.msra.mxu0 0.0
      %1787 = vmatprep.subr.mxu0 0.0
      %1788 = vmatpush1.xpose.msra.mxu0 0.0
      %1789 = vmatprep.subr.mxu0 0.0
      %1790 = vmatpush1.xpose.msra.mxu0 0.0
      %1791 = vmatprep.subr.mxu0 0.0
      %1792 = vmatpush1.xpose.msra.mxu0 0.0
      %1793 = vmatprep.subr.mxu0 0.0
      %1794 = vmatpush1.xpose.msra.mxu0 0.0
      %1795 = vmatprep.subr.mxu0 0.0
      %1796 = vmatpush1.xpose.msra.mxu0 0.0
      %1797 = vmatprep.subr.mxu0 0.0
      %1798 = vmatpush1.xpose.msra.mxu0 0.0
      %1799 = vmatprep.subr.mxu0 0.0
      %1800 = vmatpush1.xpose.msra.mxu0 0.0
      %1801 = vmatprep.subr.mxu0 0.0
      %1802 = vmatpush1.xpose.msra.mxu0 0.0
      %1803 = vmatprep.subr.mxu0 0.0
      %1804 = vmatpush1.xpose.msra.mxu0 0.0
      %1805 = vmatprep.subr.mxu0 0.0
      %1806 = vmatpush1.xpose.msra.mxu0 0.0
      %1807 = vmatprep.subr.mxu0 0.0
      %1808 = vmatpush1.xpose.msra.mxu0 0.0
      %1809 = vmatprep.subr.mxu0 0.0
      %1810 = vmatpush1.xpose.msra.mxu0 0.0
      %1811 = vmatprep.subr.mxu0 0.0
      %1812 = vmatpush1.xpose.msra.mxu0 0.0
      %1813 = vmatprep.subr.mxu0 0.0
      %1814 = vmatpush1.xpose.msra.mxu0 0.0
      %1815 = vmatprep.subr.mxu0 0.0
      %1816 = vmatpush1.xpose.msra.mxu0 0.0
      %1817 = vmatprep.subr.mxu0 0.0
      %1818 = vmatpush1.xpose.msra.mxu0 0.0
      %1819 = vmatprep.subr.mxu0 0.0
      %1820 = vmatpush1.xpose.msra.mxu0 0.0
      %1821 = vmatprep.subr.mxu0 0.0
      %1822 = vmatpush1.xpose.msra.mxu0 0.0
      %1823 = vmatprep.subr.mxu0 0.0
      %1824 = vmatpush1.xpose.msra.mxu0 0.0
      %1825 = vmatprep.mubr.f32.mxu0 0.0
      %1826 = vmatmul.mubr.f32.gmra.mrb[0].mxu0 %v1756
      %v1827 = vpop.f32.mrb[0].mxu0
      %v1828 = vadd.f32 0.0, %v1827
      %v1829 = vpop.f32.mrb[0].mxu0
      %1830 = vdwg.mxu0
      %v1832 = vsel %vm1678, %v1322, 0
      %v1835 = vsel %vm1678, %v732, 0
      %1837 = vmatprep.subr.mxu0 0.0
      %1838 = vmatpush1.xpose.msra.mxu0 %v1835
      %1839 = vmatprep.subr.mxu0 0.0
      %1840 = vmatpush1.xpose.msra.mxu0 0.0
      %1841 = vmatprep.subr.mxu0 0.0
      %1842 = vmatpush1.xpose.msra.mxu0 0.0
      %1843 = vmatprep.subr.mxu0 0.0
      %1844 = vmatpush1.xpose.msra.mxu0 0.0
      %1845 = vmatprep.subr.mxu0 0.0
      %1846 = vmatpush1.xpose.msra.mxu0 0.0
      %1847 = vmatprep.subr.mxu0 0.0
      %1848 = vmatpush1.xpose.msra.mxu0 0.0
      %1849 = vmatprep.subr.mxu0 0.0
      %1850 = vmatpush1.xpose.msra.mxu0 0.0
      %1851 = vmatprep.subr.mxu0 0.0
      %1852 = vmatpush1.xpose.msra.mxu0 0.0
      %1853 = vmatprep.subr.mxu0 0.0
      %1854 = vmatpush1.xpose.msra.mxu0 0.0
      %1855 = vmatprep.subr.mxu0 0.0
      %1856 = vmatpush1.xpose.msra.mxu0 0.0
      %1857 = vmatprep.subr.mxu0 0.0
      %1858 = vmatpush1.xpose.msra.mxu0 0.0
      %1859 = vmatprep.subr.mxu0 0.0
      %1860 = vmatpush1.xpose.msra.mxu0 0.0
      %1861 = vmatprep.subr.mxu0 0.0
      %1862 = vmatpush1.xpose.msra.mxu0 0.0
      %1863 = vmatprep.subr.mxu0 0.0
      %1864 = vmatpush1.xpose.msra.mxu0 0.0
      %1865 = vmatprep.subr.mxu0 0.0
      %1866 = vmatpush1.xpose.msra.mxu0 0.0
      %1867 = vmatprep.subr.mxu0 0.0
      %1868 = vmatpush1.xpose.msra.mxu0 0.0
      %1869 = vmatprep.subr.mxu0 0.0
      %1870 = vmatpush1.xpose.msra.mxu0 0.0
      %1871 = vmatprep.subr.mxu0 0.0
      %1872 = vmatpush1.xpose.msra.mxu0 0.0
      %1873 = vmatprep.subr.mxu0 0.0
      %1874 = vmatpush1.xpose.msra.mxu0 0.0
      %1875 = vmatprep.subr.mxu0 0.0
      %1876 = vmatpush1.xpose.msra.mxu0 0.0
      %1877 = vmatprep.subr.mxu0 0.0
      %1878 = vmatpush1.xpose.msra.mxu0 0.0
      %1879 = vmatprep.subr.mxu0 0.0
      %1880 = vmatpush1.xpose.msra.mxu0 0.0
      %1881 = vmatprep.subr.mxu0 0.0
      %1882 = vmatpush1.xpose.msra.mxu0 0.0
      %1883 = vmatprep.subr.mxu0 0.0
      %1884 = vmatpush1.xpose.msra.mxu0 0.0
      %1885 = vmatprep.subr.mxu0 0.0
      %1886 = vmatpush1.xpose.msra.mxu0 0.0
      %1887 = vmatprep.subr.mxu0 0.0
      %1888 = vmatpush1.xpose.msra.mxu0 0.0
      %1889 = vmatprep.subr.mxu0 0.0
      %1890 = vmatpush1.xpose.msra.mxu0 0.0
      %1891 = vmatprep.subr.mxu0 0.0
      %1892 = vmatpush1.xpose.msra.mxu0 0.0
      %1893 = vmatprep.subr.mxu0 0.0
      %1894 = vmatpush1.xpose.msra.mxu0 0.0
      %1895 = vmatprep.subr.mxu0 0.0
      %1896 = vmatpush1.xpose.msra.mxu0 0.0
      %1897 = vmatprep.subr.mxu0 0.0
      %1898 = vmatpush1.xpose.msra.mxu0 0.0
      %1899 = vmatprep.subr.mxu0 0.0
      %1900 = vmatpush1.xpose.msra.mxu0 0.0
      %1901 = vmatprep.mubr.f32.mxu0 0.0
      %1902 = vmatmul.mubr.f32.gmra.mrb[0].mxu0 %v1832
      %v1903 = vpop.f32.mrb[0].mxu0
      %v1904 = vadd.f32 0.0, %v1903
      %v1905 = vpop.f32.mrb[0].mxu0
      %1906 = vdwg.mxu0
      %v1908 = vsel %vm1678, %v1392, 0
      %v1911 = vsel %vm1678, %v802, 0
      %1913 = vmatprep.subr.mxu0 0.0
      %1914 = vmatpush1.xpose.msra.mxu0 %v1911
      %1915 = vmatprep.subr.mxu0 0.0
      %1916 = vmatpush1.xpose.msra.mxu0 0.0
      %1917 = vmatprep.subr.mxu0 0.0
      %1918 = vmatpush1.xpose.msra.mxu0 0.0
      %1919 = vmatprep.subr.mxu0 0.0
      %1920 = vmatpush1.xpose.msra.mxu0 0.0
      %1921 = vmatprep.subr.mxu0 0.0
      %1922 = vmatpush1.xpose.msra.mxu0 0.0
      %1923 = vmatprep.subr.mxu0 0.0
      %1924 = vmatpush1.xpose.msra.mxu0 0.0
      %1925 = vmatprep.subr.mxu0 0.0
      %1926 = vmatpush1.xpose.msra.mxu0 0.0
      %1927 = vmatprep.subr.mxu0 0.0
      %1928 = vmatpush1.xpose.msra.mxu0 0.0
      %1929 = vmatprep.subr.mxu0 0.0
      %1930 = vmatpush1.xpose.msra.mxu0 0.0
      %1931 = vmatprep.subr.mxu0 0.0
      %1932 = vmatpush1.xpose.msra.mxu0 0.0
      %1933 = vmatprep.subr.mxu0 0.0
      %1934 = vmatpush1.xpose.msra.mxu0 0.0
      %1935 = vmatprep.subr.mxu0 0.0
      %1936 = vmatpush1.xpose.msra.mxu0 0.0
      %1937 = vmatprep.subr.mxu0 0.0
      %1938 = vmatpush1.xpose.msra.mxu0 0.0
      %1939 = vmatprep.subr.mxu0 0.0
      %1940 = vmatpush1.xpose.msra.mxu0 0.0
      %1941 = vmatprep.subr.mxu0 0.0
      %1942 = vmatpush1.xpose.msra.mxu0 0.0
      %1943 = vmatprep.subr.mxu0 0.0
      %1944 = vmatpush1.xpose.msra.mxu0 0.0
      %1945 = vmatprep.subr.mxu0 0.0
      %1946 = vmatpush1.xpose.msra.mxu0 0.0
      %1947 = vmatprep.subr.mxu0 0.0
      %1948 = vmatpush1.xpose.msra.mxu0 0.0
      %1949 = vmatprep.subr.mxu0 0.0
      %1950 = vmatpush1.xpose.msra.mxu0 0.0
      %1951 = vmatprep.subr.mxu0 0.0
      %1952 = vmatpush1.xpose.msra.mxu0 0.0
      %1953 = vmatprep.subr.mxu0 0.0
      %1954 = vmatpush1.xpose.msra.mxu0 0.0
      %1955 = vmatprep.subr.mxu0 0.0
      %1956 = vmatpush1.xpose.msra.mxu0 0.0
      %1957 = vmatprep.subr.mxu0 0.0
      %1958 = vmatpush1.xpose.msra.mxu0 0.0
      %1959 = vmatprep.subr.mxu0 0.0
      %1960 = vmatpush1.xpose.msra.mxu0 0.0
      %1961 = vmatprep.subr.mxu0 0.0
      %1962 = vmatpush1.xpose.msra.mxu0 0.0
      %1963 = vmatprep.subr.mxu0 0.0
      %1964 = vmatpush1.xpose.msra.mxu0 0.0
      %1965 = vmatprep.subr.mxu0 0.0
      %1966 = vmatpush1.xpose.msra.mxu0 0.0
      %1967 = vmatprep.subr.mxu0 0.0
      %1968 = vmatpush1.xpose.msra.mxu0 0.0
      %1969 = vmatprep.subr.mxu0 0.0
      %1970 = vmatpush1.xpose.msra.mxu0 0.0
      %1971 = vmatprep.subr.mxu0 0.0
      %1972 = vmatpush1.xpose.msra.mxu0 0.0
      %1973 = vmatprep.subr.mxu0 0.0
      %1974 = vmatpush1.xpose.msra.mxu0 0.0
      %1975 = vmatprep.subr.mxu0 0.0
      %1976 = vmatpush1.xpose.msra.mxu0 0.0
      %1977 = vmatprep.mubr.f32.mxu0 0.0
      %1978 = vmatmul.mubr.f32.gmra.mrb[0].mxu0 %v1908
      %v1979 = vpop.f32.mrb[0].mxu0
      %v1980 = vadd.f32 0.0, %v1979
      %v1981 = vpop.f32.mrb[0].mxu0
      %1982 = vdwg.mxu0
      %v1984 = vsel %vm1678, %v1465, 0
      %v1987 = vsel %vm1678, %v875, 0
      %1989 = vmatprep.subr.mxu0 0.0
      %1990 = vmatpush1.xpose.msra.mxu0 %v1987
      %1991 = vmatprep.subr.mxu0 0.0
      %1992 = vmatpush1.xpose.msra.mxu0 0.0
      %1993 = vmatprep.subr.mxu0 0.0
      %1994 = vmatpush1.xpose.msra.mxu0 0.0
      %1995 = vmatprep.subr.mxu0 0.0
      %1996 = vmatpush1.xpose.msra.mxu0 0.0
      %1997 = vmatprep.subr.mxu0 0.0
      %1998 = vmatpush1.xpose.msra.mxu0 0.0
      %1999 = vmatprep.subr.mxu0 0.0
      %2000 = vmatpush1.xpose.msra.mxu0 0.0
      %2001 = vmatprep.subr.mxu0 0.0
      %2002 = vmatpush1.xpose.msra.mxu0 0.0
      %2003 = vmatprep.subr.mxu0 0.0
      %2004 = vmatpush1.xpose.msra.mxu0 0.0
      %2005 = vmatprep.subr.mxu0 0.0
      %2006 = vmatpush1.xpose.msra.mxu0 0.0
      %2007 = vmatprep.subr.mxu0 0.0
      %2008 = vmatpush1.xpose.msra.mxu0 0.0
      %2009 = vmatprep.subr.mxu0 0.0
      %2010 = vmatpush1.xpose.msra.mxu0 0.0
      %2011 = vmatprep.subr.mxu0 0.0
      %2012 = vmatpush1.xpose.msra.mxu0 0.0
      %2013 = vmatprep.subr.mxu0 0.0
      %2014 = vmatpush1.xpose.msra.mxu0 0.0
      %2015 = vmatprep.subr.mxu0 0.0
      %2016 = vmatpush1.xpose.msra.mxu0 0.0
      %2017 = vmatprep.subr.mxu0 0.0
      %2018 = vmatpush1.xpose.msra.mxu0 0.0
      %2019 = vmatprep.subr.mxu0 0.0
      %2020 = vmatpush1.xpose.msra.mxu0 0.0
      %2021 = vmatprep.subr.mxu0 0.0
      %2022 = vmatpush1.xpose.msra.mxu0 0.0
      %2023 = vmatprep.subr.mxu0 0.0
      %2024 = vmatpush1.xpose.msra.mxu0 0.0
      %2025 = vmatprep.subr.mxu0 0.0
      %2026 = vmatpush1.xpose.msra.mxu0 0.0
      %2027 = vmatprep.subr.mxu0 0.0
      %2028 = vmatpush1.xpose.msra.mxu0 0.0
      %2029 = vmatprep.subr.mxu0 0.0
      %2030 = vmatpush1.xpose.msra.mxu0 0.0
      %2031 = vmatprep.subr.mxu0 0.0
      %2032 = vmatpush1.xpose.msra.mxu0 0.0
      %2033 = vmatprep.subr.mxu0 0.0
      %2034 = vmatpush1.xpose.msra.mxu0 0.0
      %2035 = vmatprep.subr.mxu0 0.0
      %2036 = vmatpush1.xpose.msra.mxu0 0.0
      %2037 = vmatprep.subr.mxu0 0.0
      %2038 = vmatpush1.xpose.msra.mxu0 0.0
      %2039 = vmatprep.subr.mxu0 0.0
      %2040 = vmatpush1.xpose.msra.mxu0 0.0
      %2041 = vmatprep.subr.mxu0 0.0
      %2042 = vmatpush1.xpose.msra.mxu0 0.0
      %2043 = vmatprep.subr.mxu0 0.0
      %2044 = vmatpush1.xpose.msra.mxu0 0.0
      %2045 = vmatprep.subr.mxu0 0.0
      %2046 = vmatpush1.xpose.msra.mxu0 0.0
      %2047 = vmatprep.subr.mxu0 0.0
      %2048 = vmatpush1.xpose.msra.mxu0 0.0
      %2049 = vmatprep.subr.mxu0 0.0
      %2050 = vmatpush1.xpose.msra.mxu0 0.0
      %2051 = vmatprep.subr.mxu0 0.0
      %2052 = vmatpush1.xpose.msra.mxu0 0.0
      %2053 = vmatprep.mubr.f32.mxu0 0.0
      %2054 = vmatmul.mubr.f32.gmra.mrb[0].mxu0 %v1984
      %v2055 = vpop.f32.mrb[0].mxu0
      %v2056 = vadd.f32 0.0, %v2055
      %v2057 = vpop.f32.mrb[0].mxu0
      %2058 = vdwg.mxu0
      %v2060 = vsel %vm1678, %v1535, 0
      %v2063 = vsel %vm1678, %v945, 0
      %2065 = vmatprep.subr.mxu0 0.0
      %2066 = vmatpush1.xpose.msra.mxu0 %v2063
      %2067 = vmatprep.subr.mxu0 0.0
      %2068 = vmatpush1.xpose.msra.mxu0 0.0
      %2069 = vmatprep.subr.mxu0 0.0
      %2070 = vmatpush1.xpose.msra.mxu0 0.0
      %2071 = vmatprep.subr.mxu0 0.0
      %2072 = vmatpush1.xpose.msra.mxu0 0.0
      %2073 = vmatprep.subr.mxu0 0.0
      %2074 = vmatpush1.xpose.msra.mxu0 0.0
      %2075 = vmatprep.subr.mxu0 0.0
      %2076 = vmatpush1.xpose.msra.mxu0 0.0
      %2077 = vmatprep.subr.mxu0 0.0
      %2078 = vmatpush1.xpose.msra.mxu0 0.0
      %2079 = vmatprep.subr.mxu0 0.0
      %2080 = vmatpush1.xpose.msra.mxu0 0.0
      %2081 = vmatprep.subr.mxu0 0.0
      %2082 = vmatpush1.xpose.msra.mxu0 0.0
      %2083 = vmatprep.subr.mxu0 0.0
      %2084 = vmatpush1.xpose.msra.mxu0 0.0
      %2085 = vmatprep.subr.mxu0 0.0
      %2086 = vmatpush1.xpose.msra.mxu0 0.0
      %2087 = vmatprep.subr.mxu0 0.0
      %2088 = vmatpush1.xpose.msra.mxu0 0.0
      %2089 = vmatprep.subr.mxu0 0.0
      %2090 = vmatpush1.xpose.msra.mxu0 0.0
      %2091 = vmatprep.subr.mxu0 0.0
      %2092 = vmatpush1.xpose.msra.mxu0 0.0
      %2093 = vmatprep.subr.mxu0 0.0
      %2094 = vmatpush1.xpose.msra.mxu0 0.0
      %2095 = vmatprep.subr.mxu0 0.0
      %2096 = vmatpush1.xpose.msra.mxu0 0.0
      %2097 = vmatprep.subr.mxu0 0.0
      %2098 = vmatpush1.xpose.msra.mxu0 0.0
      %2099 = vmatprep.subr.mxu0 0.0
      %2100 = vmatpush1.xpose.msra.mxu0 0.0
      %2101 = vmatprep.subr.mxu0 0.0
      %2102 = vmatpush1.xpose.msra.mxu0 0.0
      %2103 = vmatprep.subr.mxu0 0.0
      %2104 = vmatpush1.xpose.msra.mxu0 0.0
      %2105 = vmatprep.subr.mxu0 0.0
      %2106 = vmatpush1.xpose.msra.mxu0 0.0
      %2107 = vmatprep.subr.mxu0 0.0
      %2108 = vmatpush1.xpose.msra.mxu0 0.0
      %2109 = vmatprep.subr.mxu0 0.0
      %2110 = vmatpush1.xpose.msra.mxu0 0.0
      %2111 = vmatprep.subr.mxu0 0.0
      %2112 = vmatpush1.xpose.msra.mxu0 0.0
      %2113 = vmatprep.subr.mxu0 0.0
      %2114 = vmatpush1.xpose.msra.mxu0 0.0
      %2115 = vmatprep.subr.mxu0 0.0
      %2116 = vmatpush1.xpose.msra.mxu0 0.0
      %2117 = vmatprep.subr.mxu0 0.0
      %2118 = vmatpush1.xpose.msra.mxu0 0.0
      %2119 = vmatprep.subr.mxu0 0.0
      %2120 = vmatpush1.xpose.msra.mxu0 0.0
      %2121 = vmatprep.subr.mxu0 0.0
      %2122 = vmatpush1.xpose.msra.mxu0 0.0
      %2123 = vmatprep.subr.mxu0 0.0
      %2124 = vmatpush1.xpose.msra.mxu0 0.0
      %2125 = vmatprep.subr.mxu0 0.0
      %2126 = vmatpush1.xpose.msra.mxu0 0.0
      %2127 = vmatprep.subr.mxu0 0.0
      %2128 = vmatpush1.xpose.msra.mxu0 0.0
      %2129 = vmatprep.mubr.f32.mxu0 0.0
      %2130 = vmatmul.mubr.f32.gmra.mrb[0].mxu0 %v2060
      %v2131 = vpop.f32.mrb[0].mxu0
      %v2132 = vadd.f32 0.0, %v2131
      %v2133 = vpop.f32.mrb[0].mxu0
      %2134 = vdwg.mxu0
      %v2136 = vsel %vm1678, %v1605, 0
      %v2139 = vsel %vm1678, %v1015, 0
      %2141 = vmatprep.subr.mxu0 0.0
      %2142 = vmatpush1.xpose.msra.mxu0 %v2139
      %2143 = vmatprep.subr.mxu0 0.0
      %2144 = vmatpush1.xpose.msra.mxu0 0.0
      %2145 = vmatprep.subr.mxu0 0.0
      %2146 = vmatpush1.xpose.msra.mxu0 0.0
      %2147 = vmatprep.subr.mxu0 0.0
      %2148 = vmatpush1.xpose.msra.mxu0 0.0
      %2149 = vmatprep.subr.mxu0 0.0
      %2150 = vmatpush1.xpose.msra.mxu0 0.0
      %2151 = vmatprep.subr.mxu0 0.0
      %2152 = vmatpush1.xpose.msra.mxu0 0.0
      %2153 = vmatprep.subr.mxu0 0.0
      %2154 = vmatpush1.xpose.msra.mxu0 0.0
      %2155 = vmatprep.subr.mxu0 0.0
      %2156 = vmatpush1.xpose.msra.mxu0 0.0
      %2157 = vmatprep.subr.mxu0 0.0
      %2158 = vmatpush1.xpose.msra.mxu0 0.0
      %2159 = vmatprep.subr.mxu0 0.0
      %2160 = vmatpush1.xpose.msra.mxu0 0.0
      %2161 = vmatprep.subr.mxu0 0.0
      %2162 = vmatpush1.xpose.msra.mxu0 0.0
      %2163 = vmatprep.subr.mxu0 0.0
      %2164 = vmatpush1.xpose.msra.mxu0 0.0
      %2165 = vmatprep.subr.mxu0 0.0
      %2166 = vmatpush1.xpose.msra.mxu0 0.0
      %2167 = vmatprep.subr.mxu0 0.0
      %2168 = vmatpush1.xpose.msra.mxu0 0.0
      %2169 = vmatprep.subr.mxu0 0.0
      %2170 = vmatpush1.xpose.msra.mxu0 0.0
      %2171 = vmatprep.subr.mxu0 0.0
      %2172 = vmatpush1.xpose.msra.mxu0 0.0
      %2173 = vmatprep.subr.mxu0 0.0
      %2174 = vmatpush1.xpose.msra.mxu0 0.0
      %2175 = vmatprep.subr.mxu0 0.0
      %2176 = vmatpush1.xpose.msra.mxu0 0.0
      %2177 = vmatprep.subr.mxu0 0.0
      %2178 = vmatpush1.xpose.msra.mxu0 0.0
      %2179 = vmatprep.subr.mxu0 0.0
      %2180 = vmatpush1.xpose.msra.mxu0 0.0
      %2181 = vmatprep.subr.mxu0 0.0
      %2182 = vmatpush1.xpose.msra.mxu0 0.0
      %2183 = vmatprep.subr.mxu0 0.0
      %2184 = vmatpush1.xpose.msra.mxu0 0.0
      %2185 = vmatprep.subr.mxu0 0.0
      %2186 = vmatpush1.xpose.msra.mxu0 0.0
      %2187 = vmatprep.subr.mxu0 0.0
      %2188 = vmatpush1.xpose.msra.mxu0 0.0
      %2189 = vmatprep.subr.mxu0 0.0
      %2190 = vmatpush1.xpose.msra.mxu0 0.0
      %2191 = vmatprep.subr.mxu0 0.0
      %2192 = vmatpush1.xpose.msra.mxu0 0.0
      %2193 = vmatprep.subr.mxu0 0.0
      %2194 = vmatpush1.xpose.msra.mxu0 0.0
      %2195 = vmatprep.subr.mxu0 0.0
      %2196 = vmatpush1.xpose.msra.mxu0 0.0
      %2197 = vmatprep.subr.mxu0 0.0
      %2198 = vmatpush1.xpose.msra.mxu0 0.0
      %2199 = vmatprep.subr.mxu0 0.0
      %2200 = vmatpush1.xpose.msra.mxu0 0.0
      %2201 = vmatprep.subr.mxu0 0.0
      %2202 = vmatpush1.xpose.msra.mxu0 0.0
      %2203 = vmatprep.subr.mxu0 0.0
      %2204 = vmatpush1.xpose.msra.mxu0 0.0
      %2205 = vmatprep.mubr.f32.mxu0 0.0
      %2206 = vmatmul.mubr.f32.gmra.mrb[0].mxu0 %v2136
      %v2207 = vpop.f32.mrb[0].mxu0
      %v2208 = vadd.f32 0.0, %v2207
      %v2209 = vpop.f32.mrb[0].mxu0
      %2210 = vdwg.mxu0
      %v2212 = vsel %vm1678, %v1675, 0
      %v2215 = vsel %vm1678, %v1085, 0
      %2217 = vmatprep.subr.mxu0 0.0
      %2218 = vmatpush1.xpose.msra.mxu0 %v2215
      %2219 = vmatprep.subr.mxu0 0.0
      %2220 = vmatpush1.xpose.msra.mxu0 0.0
      %2221 = vmatprep.subr.mxu0 0.0
      %2222 = vmatpush1.xpose.msra.mxu0 0.0
      %2223 = vmatprep.subr.mxu0 0.0
      %2224 = vmatpush1.xpose.msra.mxu0 0.0
      %2225 = vmatprep.subr.mxu0 0.0
      %2226 = vmatpush1.xpose.msra.mxu0 0.0
      %2227 = vmatprep.subr.mxu0 0.0
      %2228 = vmatpush1.xpose.msra.mxu0 0.0
      %2229 = vmatprep.subr.mxu0 0.0
      %2230 = vmatpush1.xpose.msra.mxu0 0.0
      %2231 = vmatprep.subr.mxu0 0.0
      %2232 = vmatpush1.xpose.msra.mxu0 0.0
      %2233 = vmatprep.subr.mxu0 0.0
      %2234 = vmatpush1.xpose.msra.mxu0 0.0
      %2235 = vmatprep.subr.mxu0 0.0
      %2236 = vmatpush1.xpose.msra.mxu0 0.0
      %2237 = vmatprep.subr.mxu0 0.0
      %2238 = vmatpush1.xpose.msra.mxu0 0.0
      %2239 = vmatprep.subr.mxu0 0.0
      %2240 = vmatpush1.xpose.msra.mxu0 0.0
      %2241 = vmatprep.subr.mxu0 0.0
      %2242 = vmatpush1.xpose.msra.mxu0 0.0
      %2243 = vmatprep.subr.mxu0 0.0
      %2244 = vmatpush1.xpose.msra.mxu0 0.0
      %2245 = vmatprep.subr.mxu0 0.0
      %2246 = vmatpush1.xpose.msra.mxu0 0.0
      %2247 = vmatprep.subr.mxu0 0.0
      %2248 = vmatpush1.xpose.msra.mxu0 0.0
      %2249 = vmatprep.subr.mxu0 0.0
      %2250 = vmatpush1.xpose.msra.mxu0 0.0
      %2251 = vmatprep.subr.mxu0 0.0
      %2252 = vmatpush1.xpose.msra.mxu0 0.0
      %2253 = vmatprep.subr.mxu0 0.0
      %2254 = vmatpush1.xpose.msra.mxu0 0.0
      %2255 = vmatprep.subr.mxu0 0.0
      %2256 = vmatpush1.xpose.msra.mxu0 0.0
      %2257 = vmatprep.subr.mxu0 0.0
      %2258 = vmatpush1.xpose.msra.mxu0 0.0
      %2259 = vmatprep.subr.mxu0 0.0
      %2260 = vmatpush1.xpose.msra.mxu0 0.0
      %2261 = vmatprep.subr.mxu0 0.0
      %2262 = vmatpush1.xpose.msra.mxu0 0.0
      %2263 = vmatprep.subr.mxu0 0.0
      %2264 = vmatpush1.xpose.msra.mxu0 0.0
      %2265 = vmatprep.subr.mxu0 0.0
      %2266 = vmatpush1.xpose.msra.mxu0 0.0
      %2267 = vmatprep.subr.mxu0 0.0
      %2268 = vmatpush1.xpose.msra.mxu0 0.0
      %2269 = vmatprep.subr.mxu0 0.0
      %2270 = vmatpush1.xpose.msra.mxu0 0.0
      %2271 = vmatprep.subr.mxu0 0.0
      %2272 = vmatpush1.xpose.msra.mxu0 0.0
      %2273 = vmatprep.subr.mxu0 0.0
      %2274 = vmatpush1.xpose.msra.mxu0 0.0
      %2275 = vmatprep.subr.mxu0 0.0
      %2276 = vmatpush1.xpose.msra.mxu0 0.0
      %2277 = vmatprep.subr.mxu0 0.0
      %2278 = vmatpush1.xpose.msra.mxu0 0.0
      %2279 = vmatprep.subr.mxu0 0.0
      %2280 = vmatpush1.xpose.msra.mxu0 0.0
      %2281 = vmatprep.mubr.f32.mxu0 0.0
      %2282 = vmatmul.mubr.f32.gmra.mrb[0].mxu0 %v2212
      %v2283 = vpop.f32.mrb[0].mxu0
      %v2284 = vadd.f32 0.0, %v2283
      %v2285 = vpop.f32.mrb[0].mxu0
      %2286 = vdwg.mxu0
      %vm2287 = vcmask 45056
      %v2288 = vsel %vm2287, %v1752, -inf
      %2289 = vmax.xlane.f32.xlu0 %v2288
      %v2290 = vpop.xlane.xlu0 %2289
      %v2291 = vsel %vm2287, %v1828, -inf
      %2292 = vmax.xlane.f32.xlu0 %v2291
      %v2293 = vpop.xlane.xlu0 %2292
      %v2294 = vsel %vm2287, %v1904, -inf
      %2295 = vmax.xlane.f32.xlu0 %v2294
      %v2296 = vpop.xlane.xlu0 %2295
      %v2297 = vsel %vm2287, %v1980, -inf
      %2298 = vmax.xlane.f32.xlu0 %v2297
      %v2299 = vpop.xlane.xlu0 %2298
      %v2300 = vsel %vm2287, %v2056, -inf
      %2301 = vmax.xlane.f32.xlu0 %v2300
      %v2302 = vpop.xlane.xlu0 %2301
      %v2303 = vsel %vm2287, %v2132, -inf
      %2304 = vmax.xlane.f32.xlu0 %v2303
      %v2305 = vpop.xlane.xlu0 %2304
      %v2306 = vsel %vm2287, %v2208, -inf
      %2307 = vmax.xlane.f32.xlu0 %v2306
      %v2308 = vpop.xlane.xlu0 %2307
      %v2309 = vsel %vm2287, %v2284, -inf
      %2310 = vmax.xlane.f32.xlu0 %v2309
      %v2311 = vpop.xlane.xlu0 %2310
      %v2312 = vsub.f32 %v1752, %v2290
      %v2313 = vsub.f32 %v1828, %v2293
      %v2314 = vsub.f32 %v1904, %v2296
      %v2315 = vsub.f32 %v1980, %v2299
      %v2316 = vsub.f32 %v2056, %v2302
      %v2317 = vsub.f32 %v2132, %v2305
      %v2318 = vsub.f32 %v2208, %v2308
      %v2319 = vsub.f32 %v2284, %v2311
      %v2320 = vmul.f32 %v2312, 1.442695
      %v2321 = vpow.pop %v2320
      %v2322 = vmul.f32 %v2313, 1.442695
      %v2323 = vpow.pop %v2322
      %v2324 = vmul.f32 %v2314, 1.442695
      %v2325 = vpow.pop %v2324
      %v2326 = vmul.f32 %v2315, 1.442695
      %v2327 = vpow.pop %v2326
      %v2328 = vmul.f32 %v2316, 1.442695
      %v2329 = vpow.pop %v2328
      %v2330 = vmul.f32 %v2317, 1.442695
      %v2331 = vpow.pop %v2330
      %v2332 = vmul.f32 %v2318, 1.442695
      %v2333 = vpow.pop %v2332
      %v2334 = vmul.f32 %v2319, 1.442695
      %v2335 = vpow.pop %v2334
      %v2336 = vsel %vm2287, %v2321, 0.0
      %2337 = vadd.xlane.f32.xlu0 %v2336
      %v2338 = vpop.xlane.xlu0 %2337
      %v2339 = vsel %vm2287, %v2323, 0.0
      %2340 = vadd.xlane.f32.xlu0 %v2339
      %v2341 = vpop.xlane.xlu0 %2340
      %v2342 = vsel %vm2287, %v2325, 0.0
      %2343 = vadd.xlane.f32.xlu0 %v2342
      %v2344 = vpop.xlane.xlu0 %2343
      %v2345 = vsel %vm2287, %v2327, 0.0
      %2346 = vadd.xlane.f32.xlu0 %v2345
      %v2347 = vpop.xlane.xlu0 %2346
      %v2348 = vsel %vm2287, %v2329, 0.0
      %2349 = vadd.xlane.f32.xlu0 %v2348
      %v2350 = vpop.xlane.xlu0 %2349
      %v2351 = vsel %vm2287, %v2331, 0.0
      %2352 = vadd.xlane.f32.xlu0 %v2351
      %v2353 = vpop.xlane.xlu0 %2352
      %v2354 = vsel %vm2287, %v2333, 0.0
      %2355 = vadd.xlane.f32.xlu0 %v2354
      %v2356 = vpop.xlane.xlu0 %2355
      %v2357 = vsel %vm2287, %v2335, 0.0
      %2358 = vadd.xlane.f32.xlu0 %v2357
      %v2359 = vpop.xlane.xlu0 %2358
      %v2360 = vrcp.pop %v2338
      %v2361 = vrcp.pop %v2341
      %v2362 = vrcp.pop %v2344
      %v2363 = vrcp.pop %v2347
      %v2364 = vrcp.pop %v2350
      %v2365 = vrcp.pop %v2353
      %v2366 = vrcp.pop %v2356
      %v2367 = vrcp.pop %v2359
      %v2368 = vmul.f32 %v2321, %v2360
      %v2369 = vmul.f32 %v2323, %v2361
      %v2370 = vmul.f32 %v2325, %v2362
      %v2371 = vmul.f32 %v2327, %v2363
      %v2372 = vmul.f32 %v2329, %v2364
      %v2373 = vmul.f32 %v2331, %v2365
      %v2374 = vmul.f32 %v2333, %v2366
      %v2375 = vmul.f32 %v2335, %v2367
      %2376 = vst.msk [vmem:[%s451] sm:$0x1f] %vm2287, %v2368
      %2377 = vst.msk [vmem:[%s451 + $0x8] sm:$0x1f] %vm2287, %v2369
      %2378 = vst.msk [vmem:[%s451 + $0x10] sm:$0x1f] %vm2287, %v2370
      %2379 = vst.msk [vmem:[%s451 + $0x18] sm:$0x1f] %vm2287, %v2371
      %2380 = vst.msk [vmem:[%s451 + $0x20] sm:$0x1f] %vm2287, %v2372
      %2381 = vst.msk [vmem:[%s451 + $0x28] sm:$0x1f] %vm2287, %v2373
      %2382 = vst.msk [vmem:[%s451 + $0x30] sm:$0x1f] %vm2287, %v2374
      %2383 = vst.msk [vmem:[%s451 + $0x38] sm:$0x1f] %vm2287, %v2375
      %vm2384 = vcmask 48128
      %v2386 = vsel %vm2384, %v2368, 0
      %vm2388 = vcmask 1045504
      %v2389 = vsel %vm2388, %v592, 0
      %2391 = vmatprep.subr.mxu0 0.0
      %2392 = vmatpush1.msra.mxu0 %v2389
      %2393 = vmatprep.subr.mxu0 0.0
      %2394 = vmatpush1.msra.mxu0 0.0
      %2395 = vmatprep.subr.mxu0 0.0
      %2396 = vmatpush1.msra.mxu0 0.0
      %2397 = vmatprep.subr.mxu0 0.0
      %2398 = vmatpush1.msra.mxu0 0.0
      %2399 = vmatprep.subr.mxu0 0.0
      %2400 = vmatpush1.msra.mxu0 0.0
      %2401 = vmatprep.subr.mxu0 0.0
      %2402 = vmatpush1.msra.mxu0 0.0
      %2403 = vmatprep.subr.mxu0 0.0
      %2404 = vmatpush1.msra.mxu0 0.0
      %2405 = vmatprep.subr.mxu0 0.0
      %2406 = vmatpush1.msra.mxu0 0.0
      %2407 = vmatprep.subr.mxu0 0.0
      %2408 = vmatpush1.msra.mxu0 0.0
      %2409 = vmatprep.subr.mxu0 0.0
      %2410 = vmatpush1.msra.mxu0 0.0
      %2411 = vmatprep.subr.mxu0 0.0
      %2412 = vmatpush1.msra.mxu0 0.0
      %2413 = vmatprep.subr.mxu0 0.0
      %2414 = vmatpush1.msra.mxu0 0.0
      %2415 = vmatprep.subr.mxu0 0.0
      %2416 = vmatpush1.msra.mxu0 0.0
      %2417 = vmatprep.subr.mxu0 0.0
      %2418 = vmatpush1.msra.mxu0 0.0
      %2419 = vmatprep.subr.mxu0 0.0
      %2420 = vmatpush1.msra.mxu0 0.0
      %2421 = vmatprep.subr.mxu0 0.0
      %2422 = vmatpush1.msra.mxu0 0.0
      %2423 = vmatprep.subr.mxu0 0.0
      %2424 = vmatpush1.msra.mxu0 0.0
      %2425 = vmatprep.subr.mxu0 0.0
      %2426 = vmatpush1.msra.mxu0 0.0
      %2427 = vmatprep.subr.mxu0 0.0
      %2428 = vmatpush1.msra.mxu0 0.0
      %2429 = vmatprep.subr.mxu0 0.0
      %2430 = vmatpush1.msra.mxu0 0.0
      %2431 = vmatprep.subr.mxu0 0.0
      %2432 = vmatpush1.msra.mxu0 0.0
      %2433 = vmatprep.subr.mxu0 0.0
      %2434 = vmatpush1.msra.mxu0 0.0
      %2435 = vmatprep.subr.mxu0 0.0
      %2436 = vmatpush1.msra.mxu0 0.0
      %2437 = vmatprep.subr.mxu0 0.0
      %2438 = vmatpush1.msra.mxu0 0.0
      %2439 = vmatprep.subr.mxu0 0.0
      %2440 = vmatpush1.msra.mxu0 0.0
      %2441 = vmatprep.subr.mxu0 0.0
      %2442 = vmatpush1.msra.mxu0 0.0
      %2443 = vmatprep.subr.mxu0 0.0
      %2444 = vmatpush1.msra.mxu0 0.0
      %2445 = vmatprep.subr.mxu0 0.0
      %2446 = vmatpush1.msra.mxu0 0.0
      %2447 = vmatprep.subr.mxu0 0.0
      %2448 = vmatpush1.msra.mxu0 0.0
      %2449 = vmatprep.subr.mxu0 0.0
      %2450 = vmatpush1.msra.mxu0 0.0
      %2451 = vmatprep.subr.mxu0 0.0
      %2452 = vmatpush1.msra.mxu0 0.0
      %2453 = vmatprep.subr.mxu0 0.0
      %2454 = vmatpush1.msra.mxu0 0.0
      %2455 = vmatprep.mubr.f32.mxu0 0.0
      %2456 = vmatmul.mubr.f32.gmra.mrb[0].mxu0 %v2386
      %v2457 = vpop.f32.mrb[0].mxu0
      %v2458 = vadd.f32 0.0, %v2457
      %v2459 = vpop.f32.mrb[0].mxu0
      %2460 = vdwg.mxu0
      %v2462 = vsel %vm2384, %v2369, 0
      %v2464 = vsel %vm2388, %v662, 0
      %2466 = vmatprep.subr.mxu0 0.0
      %2467 = vmatpush1.msra.mxu0 %v2464
      %2468 = vmatprep.subr.mxu0 0.0
      %2469 = vmatpush1.msra.mxu0 0.0
      %2470 = vmatprep.subr.mxu0 0.0
      %2471 = vmatpush1.msra.mxu0 0.0
      %2472 = vmatprep.subr.mxu0 0.0
      %2473 = vmatpush1.msra.mxu0 0.0
      %2474 = vmatprep.subr.mxu0 0.0
      %2475 = vmatpush1.msra.mxu0 0.0
      %2476 = vmatprep.subr.mxu0 0.0
      %2477 = vmatpush1.msra.mxu0 0.0
      %2478 = vmatprep.subr.mxu0 0.0
      %2479 = vmatpush1.msra.mxu0 0.0
      %2480 = vmatprep.subr.mxu0 0.0
      %2481 = vmatpush1.msra.mxu0 0.0
      %2482 = vmatprep.subr.mxu0 0.0
      %2483 = vmatpush1.msra.mxu0 0.0
      %2484 = vmatprep.subr.mxu0 0.0
      %2485 = vmatpush1.msra.mxu0 0.0
      %2486 = vmatprep.subr.mxu0 0.0
      %2487 = vmatpush1.msra.mxu0 0.0
      %2488 = vmatprep.subr.mxu0 0.0
      %2489 = vmatpush1.msra.mxu0 0.0
      %2490 = vmatprep.subr.mxu0 0.0
      %2491 = vmatpush1.msra.mxu0 0.0
      %2492 = vmatprep.subr.mxu0 0.0
      %2493 = vmatpush1.msra.mxu0 0.0
      %2494 = vmatprep.subr.mxu0 0.0
      %2495 = vmatpush1.msra.mxu0 0.0
      %2496 = vmatprep.subr.mxu0 0.0
      %2497 = vmatpush1.msra.mxu0 0.0
      %2498 = vmatprep.subr.mxu0 0.0
      %2499 = vmatpush1.msra.mxu0 0.0
      %2500 = vmatprep.subr.mxu0 0.0
      %2501 = vmatpush1.msra.mxu0 0.0
      %2502 = vmatprep.subr.mxu0 0.0
      %2503 = vmatpush1.msra.mxu0 0.0
      %2504 = vmatprep.subr.mxu0 0.0
      %2505 = vmatpush1.msra.mxu0 0.0
      %2506 = vmatprep.subr.mxu0 0.0
      %2507 = vmatpush1.msra.mxu0 0.0
      %2508 = vmatprep.subr.mxu0 0.0
      %2509 = vmatpush1.msra.mxu0 0.0
      %2510 = vmatprep.subr.mxu0 0.0
      %2511 = vmatpush1.msra.mxu0 0.0
      %2512 = vmatprep.subr.mxu0 0.0
      %2513 = vmatpush1.msra.mxu0 0.0
      %2514 = vmatprep.subr.mxu0 0.0
      %2515 = vmatpush1.msra.mxu0 0.0
      %2516 = vmatprep.subr.mxu0 0.0
      %2517 = vmatpush1.msra.mxu0 0.0
      %2518 = vmatprep.subr.mxu0 0.0
      %2519 = vmatpush1.msra.mxu0 0.0
      %2520 = vmatprep.subr.mxu0 0.0
      %2521 = vmatpush1.msra.mxu0 0.0
      %2522 = vmatprep.subr.mxu0 0.0
      %2523 = vmatpush1.msra.mxu0 0.0
      %2524 = vmatprep.subr.mxu0 0.0
      %2525 = vmatpush1.msra.mxu0 0.0
      %2526 = vmatprep.subr.mxu0 0.0
      %2527 = vmatpush1.msra.mxu0 0.0
      %2528 = vmatprep.subr.mxu0 0.0
      %2529 = vmatpush1.msra.mxu0 0.0
      %2530 = vmatprep.mubr.f32.mxu0 0.0
      %2531 = vmatmul.mubr.f32.gmra.mrb[0].mxu0 %v2462
      %v2532 = vpop.f32.mrb[0].mxu0
      %v2533 = vadd.f32 0.0, %v2532
      %v2534 = vpop.f32.mrb[0].mxu0
      %2535 = vdwg.mxu0
      %v2537 = vsel %vm2384, %v2370, 0
      %v2539 = vsel %vm2388, %v732, 0
      %2541 = vmatprep.subr.mxu0 0.0
      %2542 = vmatpush1.msra.mxu0 %v2539
      %2543 = vmatprep.subr.mxu0 0.0
      %2544 = vmatpush1.msra.mxu0 0.0
      %2545 = vmatprep.subr.mxu0 0.0
      %2546 = vmatpush1.msra.mxu0 0.0
      %2547 = vmatprep.subr.mxu0 0.0
      %2548 = vmatpush1.msra.mxu0 0.0
      %2549 = vmatprep.subr.mxu0 0.0
      %2550 = vmatpush1.msra.mxu0 0.0
      %2551 = vmatprep.subr.mxu0 0.0
      %2552 = vmatpush1.msra.mxu0 0.0
      %2553 = vmatprep.subr.mxu0 0.0
      %2554 = vmatpush1.msra.mxu0 0.0
      %2555 = vmatprep.subr.mxu0 0.0
      %2556 = vmatpush1.msra.mxu0 0.0
      %2557 = vmatprep.subr.mxu0 0.0
      %2558 = vmatpush1.msra.mxu0 0.0
      %2559 = vmatprep.subr.mxu0 0.0
      %2560 = vmatpush1.msra.mxu0 0.0
      %2561 = vmatprep.subr.mxu0 0.0
      %2562 = vmatpush1.msra.mxu0 0.0
      %2563 = vmatprep.subr.mxu0 0.0
      %2564 = vmatpush1.msra.mxu0 0.0
      %2565 = vmatprep.subr.mxu0 0.0
      %2566 = vmatpush1.msra.mxu0 0.0
      %2567 = vmatprep.subr.mxu0 0.0
      %2568 = vmatpush1.msra.mxu0 0.0
      %2569 = vmatprep.subr.mxu0 0.0
      %2570 = vmatpush1.msra.mxu0 0.0
      %2571 = vmatprep.subr.mxu0 0.0
      %2572 = vmatpush1.msra.mxu0 0.0
      %2573 = vmatprep.subr.mxu0 0.0
      %2574 = vmatpush1.msra.mxu0 0.0
      %2575 = vmatprep.subr.mxu0 0.0
      %2576 = vmatpush1.msra.mxu0 0.0
      %2577 = vmatprep.subr.mxu0 0.0
      %2578 = vmatpush1.msra.mxu0 0.0
      %2579 = vmatprep.subr.mxu0 0.0
      %2580 = vmatpush1.msra.mxu0 0.0
      %2581 = vmatprep.subr.mxu0 0.0
      %2582 = vmatpush1.msra.mxu0 0.0
      %2583 = vmatprep.subr.mxu0 0.0
      %2584 = vmatpush1.msra.mxu0 0.0
      %2585 = vmatprep.subr.mxu0 0.0
      %2586 = vmatpush1.msra.mxu0 0.0
      %2587 = vmatprep.subr.mxu0 0.0
      %2588 = vmatpush1.msra.mxu0 0.0
      %2589 = vmatprep.subr.mxu0 0.0
      %2590 = vmatpush1.msra.mxu0 0.0
      %2591 = vmatprep.subr.mxu0 0.0
      %2592 = vmatpush1.msra.mxu0 0.0
      %2593 = vmatprep.subr.mxu0 0.0
      %2594 = vmatpush1.msra.mxu0 0.0
      %2595 = vmatprep.subr.mxu0 0.0
      %2596 = vmatpush1.msra.mxu0 0.0
      %2597 = vmatprep.subr.mxu0 0.0
      %2598 = vmatpush1.msra.mxu0 0.0
      %2599 = vmatprep.subr.mxu0 0.0
      %2600 = vmatpush1.msra.mxu0 0.0
      %2601 = vmatprep.subr.mxu0 0.0
      %2602 = vmatpush1.msra.mxu0 0.0
      %2603 = vmatprep.subr.mxu0 0.0
      %2604 = vmatpush1.msra.mxu0 0.0
      %2605 = vmatprep.mubr.f32.mxu0 0.0
      %2606 = vmatmul.mubr.f32.gmra.mrb[0].mxu0 %v2537
      %v2607 = vpop.f32.mrb[0].mxu0
      %v2608 = vadd.f32 0.0, %v2607
      %v2609 = vpop.f32.mrb[0].mxu0
      %2610 = vdwg.mxu0
      %v2612 = vsel %vm2384, %v2371, 0
      %v2614 = vsel %vm2388, %v802, 0
      %2616 = vmatprep.subr.mxu0 0.0
      %2617 = vmatpush1.msra.mxu0 %v2614
      %2618 = vmatprep.subr.mxu0 0.0
      %2619 = vmatpush1.msra.mxu0 0.0
      %2620 = vmatprep.subr.mxu0 0.0
      %2621 = vmatpush1.msra.mxu0 0.0
      %2622 = vmatprep.subr.mxu0 0.0
      %2623 = vmatpush1.msra.mxu0 0.0
      %2624 = vmatprep.subr.mxu0 0.0
      %2625 = vmatpush1.msra.mxu0 0.0
      %2626 = vmatprep.subr.mxu0 0.0
      %2627 = vmatpush1.msra.mxu0 0.0
      %2628 = vmatprep.subr.mxu0 0.0
      %2629 = vmatpush1.msra.mxu0 0.0
      %2630 = vmatprep.subr.mxu0 0.0
      %2631 = vmatpush1.msra.mxu0 0.0
      %2632 = vmatprep.subr.mxu0 0.0
      %2633 = vmatpush1.msra.mxu0 0.0
      %2634 = vmatprep.subr.mxu0 0.0
      %2635 = vmatpush1.msra.mxu0 0.0
      %2636 = vmatprep.subr.mxu0 0.0
      %2637 = vmatpush1.msra.mxu0 0.0
      %2638 = vmatprep.subr.mxu0 0.0
      %2639 = vmatpush1.msra.mxu0 0.0
      %2640 = vmatprep.subr.mxu0 0.0
      %2641 = vmatpush1.msra.mxu0 0.0
      %2642 = vmatprep.subr.mxu0 0.0
      %2643 = vmatpush1.msra.mxu0 0.0
      %2644 = vmatprep.subr.mxu0 0.0
      %2645 = vmatpush1.msra.mxu0 0.0
      %2646 = vmatprep.subr.mxu0 0.0
      %2647 = vmatpush1.msra.mxu0 0.0
      %2648 = vmatprep.subr.mxu0 0.0
      %2649 = vmatpush1.msra.mxu0 0.0
      %2650 = vmatprep.subr.mxu0 0.0
      %2651 = vmatpush1.msra.mxu0 0.0
      %2652 = vmatprep.subr.mxu0 0.0
      %2653 = vmatpush1.msra.mxu0 0.0
      %2654 = vmatprep.subr.mxu0 0.0
      %2655 = vmatpush1.msra.mxu0 0.0
      %2656 = vmatprep.subr.mxu0 0.0
      %2657 = vmatpush1.msra.mxu0 0.0
      %2658 = vmatprep.subr.mxu0 0.0
      %2659 = vmatpush1.msra.mxu0 0.0
      %2660 = vmatprep.subr.mxu0 0.0
      %2661 = vmatpush1.msra.mxu0 0.0
      %2662 = vmatprep.subr.mxu0 0.0
      %2663 = vmatpush1.msra.mxu0 0.0
      %2664 = vmatprep.subr.mxu0 0.0
      %2665 = vmatpush1.msra.mxu0 0.0
      %2666 = vmatprep.subr.mxu0 0.0
      %2667 = vmatpush1.msra.mxu0 0.0
      %2668 = vmatprep.subr.mxu0 0.0
      %2669 = vmatpush1.msra.mxu0 0.0
      %2670 = vmatprep.subr.mxu0 0.0
      %2671 = vmatpush1.msra.mxu0 0.0
      %2672 = vmatprep.subr.mxu0 0.0
      %2673 = vmatpush1.msra.mxu0 0.0
      %2674 = vmatprep.subr.mxu0 0.0
      %2675 = vmatpush1.msra.mxu0 0.0
      %2676 = vmatprep.subr.mxu0 0.0
      %2677 = vmatpush1.msra.mxu0 0.0
      %2678 = vmatprep.subr.mxu0 0.0
      %2679 = vmatpush1.msra.mxu0 0.0
      %2680 = vmatprep.mubr.f32.mxu0 0.0
      %2681 = vmatmul.mubr.f32.gmra.mrb[0].mxu0 %v2612
      %v2682 = vpop.f32.mrb[0].mxu0
      %v2683 = vadd.f32 0.0, %v2682
      %v2684 = vpop.f32.mrb[0].mxu0
      %2685 = vdwg.mxu0
      %v2687 = vsel %vm2384, %v2372, 0
      %v2689 = vsel %vm2388, %v875, 0
      %2691 = vmatprep.subr.mxu0 0.0
      %2692 = vmatpush1.msra.mxu0 %v2689
      %2693 = vmatprep.subr.mxu0 0.0
      %2694 = vmatpush1.msra.mxu0 0.0
      %2695 = vmatprep.subr.mxu0 0.0
      %2696 = vmatpush1.msra.mxu0 0.0
      %2697 = vmatprep.subr.mxu0 0.0
      %2698 = vmatpush1.msra.mxu0 0.0
      %2699 = vmatprep.subr.mxu0 0.0
      %2700 = vmatpush1.msra.mxu0 0.0
      %2701 = vmatprep.subr.mxu0 0.0
      %2702 = vmatpush1.msra.mxu0 0.0
      %2703 = vmatprep.subr.mxu0 0.0
      %2704 = vmatpush1.msra.mxu0 0.0
      %2705 = vmatprep.subr.mxu0 0.0
      %2706 = vmatpush1.msra.mxu0 0.0
      %2707 = vmatprep.subr.mxu0 0.0
      %2708 = vmatpush1.msra.mxu0 0.0
      %2709 = vmatprep.subr.mxu0 0.0
      %2710 = vmatpush1.msra.mxu0 0.0
      %2711 = vmatprep.subr.mxu0 0.0
      %2712 = vmatpush1.msra.mxu0 0.0
      %2713 = vmatprep.subr.mxu0 0.0
      %2714 = vmatpush1.msra.mxu0 0.0
      %2715 = vmatprep.subr.mxu0 0.0
      %2716 = vmatpush1.msra.mxu0 0.0
      %2717 = vmatprep.subr.mxu0 0.0
      %2718 = vmatpush1.msra.mxu0 0.0
      %2719 = vmatprep.subr.mxu0 0.0
      %2720 = vmatpush1.msra.mxu0 0.0
      %2721 = vmatprep.subr.mxu0 0.0
      %2722 = vmatpush1.msra.mxu0 0.0
      %2723 = vmatprep.subr.mxu0 0.0
      %2724 = vmatpush1.msra.mxu0 0.0
      %2725 = vmatprep.subr.mxu0 0.0
      %2726 = vmatpush1.msra.mxu0 0.0
      %2727 = vmatprep.subr.mxu0 0.0
      %2728 = vmatpush1.msra.mxu0 0.0
      %2729 = vmatprep.subr.mxu0 0.0
      %2730 = vmatpush1.msra.mxu0 0.0
      %2731 = vmatprep.subr.mxu0 0.0
      %2732 = vmatpush1.msra.mxu0 0.0
      %2733 = vmatprep.subr.mxu0 0.0
      %2734 = vmatpush1.msra.mxu0 0.0
      %2735 = vmatprep.subr.mxu0 0.0
      %2736 = vmatpush1.msra.mxu0 0.0
      %2737 = vmatprep.subr.mxu0 0.0
      %2738 = vmatpush1.msra.mxu0 0.0
      %2739 = vmatprep.subr.mxu0 0.0
      %2740 = vmatpush1.msra.mxu0 0.0
      %2741 = vmatprep.subr.mxu0 0.0
      %2742 = vmatpush1.msra.mxu0 0.0
      %2743 = vmatprep.subr.mxu0 0.0
      %2744 = vmatpush1.msra.mxu0 0.0
      %2745 = vmatprep.subr.mxu0 0.0
      %2746 = vmatpush1.msra.mxu0 0.0
      %2747 = vmatprep.subr.mxu0 0.0
      %2748 = vmatpush1.msra.mxu0 0.0
      %2749 = vmatprep.subr.mxu0 0.0
      %2750 = vmatpush1.msra.mxu0 0.0
      %2751 = vmatprep.subr.mxu0 0.0
      %2752 = vmatpush1.msra.mxu0 0.0
      %2753 = vmatprep.subr.mxu0 0.0
      %2754 = vmatpush1.msra.mxu0 0.0
      %2755 = vmatprep.mubr.f32.mxu0 0.0
      %2756 = vmatmul.mubr.f32.gmra.mrb[0].mxu0 %v2687
      %v2757 = vpop.f32.mrb[0].mxu0
      %v2758 = vadd.f32 0.0, %v2757
      %v2759 = vpop.f32.mrb[0].mxu0
      %2760 = vdwg.mxu0
      %v2762 = vsel %vm2384, %v2373, 0
      %v2764 = vsel %vm2388, %v945, 0
      %2766 = vmatprep.subr.mxu0 0.0
      %2767 = vmatpush1.msra.mxu0 %v2764
      %2768 = vmatprep.subr.mxu0 0.0
      %2769 = vmatpush1.msra.mxu0 0.0
      %2770 = vmatprep.subr.mxu0 0.0
      %2771 = vmatpush1.msra.mxu0 0.0
      %2772 = vmatprep.subr.mxu0 0.0
      %2773 = vmatpush1.msra.mxu0 0.0
      %2774 = vmatprep.subr.mxu0 0.0
      %2775 = vmatpush1.msra.mxu0 0.0
      %2776 = vmatprep.subr.mxu0 0.0
      %2777 = vmatpush1.msra.mxu0 0.0
      %2778 = vmatprep.subr.mxu0 0.0
      %2779 = vmatpush1.msra.mxu0 0.0
      %2780 = vmatprep.subr.mxu0 0.0
      %2781 = vmatpush1.msra.mxu0 0.0
      %2782 = vmatprep.subr.mxu0 0.0
      %2783 = vmatpush1.msra.mxu0 0.0
      %2784 = vmatprep.subr.mxu0 0.0
      %2785 = vmatpush1.msra.mxu0 0.0
      %2786 = vmatprep.subr.mxu0 0.0
      %2787 = vmatpush1.msra.mxu0 0.0
      %2788 = vmatprep.subr.mxu0 0.0
      %2789 = vmatpush1.msra.mxu0 0.0
      %2790 = vmatprep.subr.mxu0 0.0
      %2791 = vmatpush1.msra.mxu0 0.0
      %2792 = vmatprep.subr.mxu0 0.0
      %2793 = vmatpush1.msra.mxu0 0.0
      %2794 = vmatprep.subr.mxu0 0.0
      %2795 = vmatpush1.msra.mxu0 0.0
      %2796 = vmatprep.subr.mxu0 0.0
      %2797 = vmatpush1.msra.mxu0 0.0
      %2798 = vmatprep.subr.mxu0 0.0
      %2799 = vmatpush1.msra.mxu0 0.0
      %2800 = vmatprep.subr.mxu0 0.0
      %2801 = vmatpush1.msra.mxu0 0.0
      %2802 = vmatprep.subr.mxu0 0.0
      %2803 = vmatpush1.msra.mxu0 0.0
      %2804 = vmatprep.subr.mxu0 0.0
      %2805 = vmatpush1.msra.mxu0 0.0
      %2806 = vmatprep.subr.mxu0 0.0
      %2807 = vmatpush1.msra.mxu0 0.0
      %2808 = vmatprep.subr.mxu0 0.0
      %2809 = vmatpush1.msra.mxu0 0.0
      %2810 = vmatprep.subr.mxu0 0.0
      %2811 = vmatpush1.msra.mxu0 0.0
      %2812 = vmatprep.subr.mxu0 0.0
      %2813 = vmatpush1.msra.mxu0 0.0
      %2814 = vmatprep.subr.mxu0 0.0
      %2815 = vmatpush1.msra.mxu0 0.0
      %2816 = vmatprep.subr.mxu0 0.0
      %2817 = vmatpush1.msra.mxu0 0.0
      %2818 = vmatprep.subr.mxu0 0.0
      %2819 = vmatpush1.msra.mxu0 0.0
      %2820 = vmatprep.subr.mxu0 0.0
      %2821 = vmatpush1.msra.mxu0 0.0
      %2822 = vmatprep.subr.mxu0 0.0
      %2823 = vmatpush1.msra.mxu0 0.0
      %2824 = vmatprep.subr.mxu0 0.0
      %2825 = vmatpush1.msra.mxu0 0.0
      %2826 = vmatprep.subr.mxu0 0.0
      %2827 = vmatpush1.msra.mxu0 0.0
      %2828 = vmatprep.subr.mxu0 0.0
      %2829 = vmatpush1.msra.mxu0 0.0
      %2830 = vmatprep.mubr.f32.mxu0 0.0
      %2831 = vmatmul.mubr.f32.gmra.mrb[0].mxu0 %v2762
      %v2832 = vpop.f32.mrb[0].mxu0
      %v2833 = vadd.f32 0.0, %v2832
      %v2834 = vpop.f32.mrb[0].mxu0
      %2835 = vdwg.mxu0
      %v2837 = vsel %vm2384, %v2374, 0
      %v2839 = vsel %vm2388, %v1015, 0
      %2841 = vmatprep.subr.mxu0 0.0
      %2842 = vmatpush1.msra.mxu0 %v2839
      %2843 = vmatprep.subr.mxu0 0.0
      %2844 = vmatpush1.msra.mxu0 0.0
      %2845 = vmatprep.subr.mxu0 0.0
      %2846 = vmatpush1.msra.mxu0 0.0
      %2847 = vmatprep.subr.mxu0 0.0
      %2848 = vmatpush1.msra.mxu0 0.0
      %2849 = vmatprep.subr.mxu0 0.0
      %2850 = vmatpush1.msra.mxu0 0.0
      %2851 = vmatprep.subr.mxu0 0.0
      %2852 = vmatpush1.msra.mxu0 0.0
      %2853 = vmatprep.subr.mxu0 0.0
      %2854 = vmatpush1.msra.mxu0 0.0
      %2855 = vmatprep.subr.mxu0 0.0
      %2856 = vmatpush1.msra.mxu0 0.0
      %2857 = vmatprep.subr.mxu0 0.0
      %2858 = vmatpush1.msra.mxu0 0.0
      %2859 = vmatprep.subr.mxu0 0.0
      %2860 = vmatpush1.msra.mxu0 0.0
      %2861 = vmatprep.subr.mxu0 0.0
      %2862 = vmatpush1.msra.mxu0 0.0
      %2863 = vmatprep.subr.mxu0 0.0
      %2864 = vmatpush1.msra.mxu0 0.0
      %2865 = vmatprep.subr.mxu0 0.0
      %2866 = vmatpush1.msra.mxu0 0.0
      %2867 = vmatprep.subr.mxu0 0.0
      %2868 = vmatpush1.msra.mxu0 0.0
      %2869 = vmatprep.subr.mxu0 0.0
      %2870 = vmatpush1.msra.mxu0 0.0
      %2871 = vmatprep.subr.mxu0 0.0
      %2872 = vmatpush1.msra.mxu0 0.0
      %2873 = vmatprep.subr.mxu0 0.0
      %2874 = vmatpush1.msra.mxu0 0.0
      %2875 = vmatprep.subr.mxu0 0.0
      %2876 = vmatpush1.msra.mxu0 0.0
      %2877 = vmatprep.subr.mxu0 0.0
      %2878 = vmatpush1.msra.mxu0 0.0
      %2879 = vmatprep.subr.mxu0 0.0
      %2880 = vmatpush1.msra.mxu0 0.0
      %2881 = vmatprep.subr.mxu0 0.0
      %2882 = vmatpush1.msra.mxu0 0.0
      %2883 = vmatprep.subr.mxu0 0.0
      %2884 = vmatpush1.msra.mxu0 0.0
      %2885 = vmatprep.subr.mxu0 0.0
      %2886 = vmatpush1.msra.mxu0 0.0
      %2887 = vmatprep.subr.mxu0 0.0
      %2888 = vmatpush1.msra.mxu0 0.0
      %2889 = vmatprep.subr.mxu0 0.0
      %2890 = vmatpush1.msra.mxu0 0.0
      %2891 = vmatprep.subr.mxu0 0.0
      %2892 = vmatpush1.msra.mxu0 0.0
      %2893 = vmatprep.subr.mxu0 0.0
      %2894 = vmatpush1.msra.mxu0 0.0
      %2895 = vmatprep.subr.mxu0 0.0
      %2896 = vmatpush1.msra.mxu0 0.0
      %2897 = vmatprep.subr.mxu0 0.0
      %2898 = vmatpush1.msra.mxu0 0.0
      %2899 = vmatprep.subr.mxu0 0.0
      %2900 = vmatpush1.msra.mxu0 0.0
      %2901 = vmatprep.subr.mxu0 0.0
      %2902 = vmatpush1.msra.mxu0 0.0
      %2903 = vmatprep.subr.mxu0 0.0
      %2904 = vmatpush1.msra.mxu0 0.0
      %2905 = vmatprep.mubr.f32.mxu0 0.0
      %2906 = vmatmul.mubr.f32.gmra.mrb[0].mxu0 %v2837
      %v2907 = vpop.f32.mrb[0].mxu0
      %v2908 = vadd.f32 0.0, %v2907
      %v2909 = vpop.f32.mrb[0].mxu0
      %2910 = vdwg.mxu0
      %v2912 = vsel %vm2384, %v2375, 0
      %v2914 = vsel %vm2388, %v1085, 0
      %2916 = vmatprep.subr.mxu0 0.0
      %2917 = vmatpush1.msra.mxu0 %v2914
      %2918 = vmatprep.subr.mxu0 0.0
      %2919 = vmatpush1.msra.mxu0 0.0
      %2920 = vmatprep.subr.mxu0 0.0
      %2921 = vmatpush1.msra.mxu0 0.0
      %2922 = vmatprep.subr.mxu0 0.0
      %2923 = vmatpush1.msra.mxu0 0.0
      %2924 = vmatprep.subr.mxu0 0.0
      %2925 = vmatpush1.msra.mxu0 0.0
      %2926 = vmatprep.subr.mxu0 0.0
      %2927 = vmatpush1.msra.mxu0 0.0
      %2928 = vmatprep.subr.mxu0 0.0
      %2929 = vmatpush1.msra.mxu0 0.0
      %2930 = vmatprep.subr.mxu0 0.0
      %2931 = vmatpush1.msra.mxu0 0.0
      %2932 = vmatprep.subr.mxu0 0.0
      %2933 = vmatpush1.msra.mxu0 0.0
      %2934 = vmatprep.subr.mxu0 0.0
      %2935 = vmatpush1.msra.mxu0 0.0
      %2936 = vmatprep.subr.mxu0 0.0
      %2937 = vmatpush1.msra.mxu0 0.0
      %2938 = vmatprep.subr.mxu0 0.0
      %2939 = vmatpush1.msra.mxu0 0.0
      %2940 = vmatprep.subr.mxu0 0.0
      %2941 = vmatpush1.msra.mxu0 0.0
      %2942 = vmatprep.subr.mxu0 0.0
      %2943 = vmatpush1.msra.mxu0 0.0
      %2944 = vmatprep.subr.mxu0 0.0
      %2945 = vmatpush1.msra.mxu0 0.0
      %2946 = vmatprep.subr.mxu0 0.0
      %2947 = vmatpush1.msra.mxu0 0.0
      %2948 = vmatprep.subr.mxu0 0.0
      %2949 = vmatpush1.msra.mxu0 0.0
      %2950 = vmatprep.subr.mxu0 0.0
      %2951 = vmatpush1.msra.mxu0 0.0
      %2952 = vmatprep.subr.mxu0 0.0
      %2953 = vmatpush1.msra.mxu0 0.0
      %2954 = vmatprep.subr.mxu0 0.0
      %2955 = vmatpush1.msra.mxu0 0.0
      %2956 = vmatprep.subr.mxu0 0.0
      %2957 = vmatpush1.msra.mxu0 0.0
      %2958 = vmatprep.subr.mxu0 0.0
      %2959 = vmatpush1.msra.mxu0 0.0
      %2960 = vmatprep.subr.mxu0 0.0
      %2961 = vmatpush1.msra.mxu0 0.0
      %2962 = vmatprep.subr.mxu0 0.0
      %2963 = vmatpush1.msra.mxu0 0.0
      %2964 = vmatprep.subr.mxu0 0.0
      %2965 = vmatpush1.msra.mxu0 0.0
      %2966 = vmatprep.subr.mxu0 0.0
      %2967 = vmatpush1.msra.mxu0 0.0
      %2968 = vmatprep.subr.mxu0 0.0
      %2969 = vmatpush1.msra.mxu0 0.0
      %2970 = vmatprep.subr.mxu0 0.0
      %2971 = vmatpush1.msra.mxu0 0.0
      %2972 = vmatprep.subr.mxu0 0.0
      %2973 = vmatpush1.msra.mxu0 0.0
      %2974 = vmatprep.subr.mxu0 0.0
      %2975 = vmatpush1.msra.mxu0 0.0
      %2976 = vmatprep.subr.mxu0 0.0
      %2977 = vmatpush1.msra.mxu0 0.0
      %2978 = vmatprep.subr.mxu0 0.0
      %2979 = vmatpush1.msra.mxu0 0.0
      %2980 = vmatprep.mubr.f32.mxu0 0.0
      %2981 = vmatmul.mubr.f32.gmra.mrb[0].mxu0 %v2912
      %v2982 = vpop.f32.mrb[0].mxu0
      %v2983 = vadd.f32 0.0, %v2982
      %v2984 = vpop.f32.mrb[0].mxu0
      %2985 = vdwg.mxu0
      %v2986 = vld [vmem:[%s6] sm:$0xff]
      %v2987 = vld [vmem:[%s6 + $0x8] sm:$0xff]
      %v2988 = vld [vmem:[%s6 + $0x10] sm:$0xff]
      %v2989 = vld [vmem:[%s6 + $0x18] sm:$0xff]
      %v2991 = vsel %vm1678, %v2458, 0
      %2993 = vmatprep.subr.mxu0 0.0
      %2994 = vmatpush1.msra.mxu0 %v2986
      %2995 = vmatprep.subr.mxu0 0.0
      %2996 = vmatpush1.msra.mxu0 0.0
      %2997 = vmatprep.subr.mxu0 0.0
      %2998 = vmatpush1.msra.mxu0 0.0
      %2999 = vmatprep.subr.mxu0 0.0
      %3000 = vmatpush1.msra.mxu0 0.0
      %3001 = vmatprep.subr.mxu0 0.0
      %3002 = vmatpush1.msra.mxu0 0.0
      %3003 = vmatprep.subr.mxu0 0.0
      %3004 = vmatpush1.msra.mxu0 0.0
      %3005 = vmatprep.subr.mxu0 0.0
      %3006 = vmatpush1.msra.mxu0 0.0
      %3007 = vmatprep.subr.mxu0 0.0
      %3008 = vmatpush1.msra.mxu0 0.0
      %3009 = vmatprep.subr.mxu0 0.0
      %3010 = vmatpush1.msra.mxu0 0.0
      %3011 = vmatprep.subr.mxu0 0.0
      %3012 = vmatpush1.msra.mxu0 0.0
      %3013 = vmatprep.subr.mxu0 0.0
      %3014 = vmatpush1.msra.mxu0 0.0
      %3015 = vmatprep.subr.mxu0 0.0
      %3016 = vmatpush1.msra.mxu0 0.0
      %3017 = vmatprep.subr.mxu0 0.0
      %3018 = vmatpush1.msra.mxu0 0.0
      %3019 = vmatprep.subr.mxu0 0.0
      %3020 = vmatpush1.msra.mxu0 0.0
      %3021 = vmatprep.subr.mxu0 0.0
      %3022 = vmatpush1.msra.mxu0 0.0
      %3023 = vmatprep.subr.mxu0 0.0
      %3024 = vmatpush1.msra.mxu0 0.0
      %3025 = vmatprep.subr.mxu0 0.0
      %3026 = vmatpush1.msra.mxu0 0.0
      %3027 = vmatprep.subr.mxu0 0.0
      %3028 = vmatpush1.msra.mxu0 0.0
      %3029 = vmatprep.subr.mxu0 0.0
      %3030 = vmatpush1.msra.mxu0 0.0
      %3031 = vmatprep.subr.mxu0 0.0
      %3032 = vmatpush1.msra.mxu0 0.0
      %3033 = vmatprep.subr.mxu0 0.0
      %3034 = vmatpush1.msra.mxu0 0.0
      %3035 = vmatprep.subr.mxu0 0.0
      %3036 = vmatpush1.msra.mxu0 0.0
      %3037 = vmatprep.subr.mxu0 0.0
      %3038 = vmatpush1.msra.mxu0 0.0
      %3039 = vmatprep.subr.mxu0 0.0
      %3040 = vmatpush1.msra.mxu0 0.0
      %3041 = vmatprep.subr.mxu0 0.0
      %3042 = vmatpush1.msra.mxu0 0.0
      %3043 = vmatprep.subr.mxu0 0.0
      %3044 = vmatpush1.msra.mxu0 0.0
      %3045 = vmatprep.subr.mxu0 0.0
      %3046 = vmatpush1.msra.mxu0 0.0
      %3047 = vmatprep.subr.mxu0 0.0
      %3048 = vmatpush1.msra.mxu0 0.0
      %3049 = vmatprep.subr.mxu0 0.0
      %3050 = vmatpush1.msra.mxu0 0.0
      %3051 = vmatprep.subr.mxu0 0.0
      %3052 = vmatpush1.msra.mxu0 0.0
      %3053 = vmatprep.subr.mxu0 0.0
      %3054 = vmatpush1.msra.mxu0 0.0
      %3055 = vmatprep.subr.mxu0 0.0
      %3056 = vmatpush1.msra.mxu0 0.0
      %3057 = vmatprep.mubr.f32.mxu0 0.0
      %3058 = vmatmul.mubr.f32.gmra.mrb[0].mxu0 %v2991
      %v3059 = vpop.f32.mrb[0].mxu0
      %v3060 = vadd.f32 0.0, %v3059
      %v3061 = vpop.f32.mrb[0].mxu0
      %3062 = vdwg.mxu0
      %v3064 = vsel %vm1678, %v2533, 0
      %3066 = vmatprep.subr.mxu0 0.0
      %3067 = vmatpush1.msra.mxu0 %v2987
      %3068 = vmatprep.subr.mxu0 0.0
      %3069 = vmatpush1.msra.mxu0 0.0
      %3070 = vmatprep.subr.mxu0 0.0
      %3071 = vmatpush1.msra.mxu0 0.0
      %3072 = vmatprep.subr.mxu0 0.0
      %3073 = vmatpush1.msra.mxu0 0.0
      %3074 = vmatprep.subr.mxu0 0.0
      %3075 = vmatpush1.msra.mxu0 0.0
      %3076 = vmatprep.subr.mxu0 0.0
      %3077 = vmatpush1.msra.mxu0 0.0
      %3078 = vmatprep.subr.mxu0 0.0
      %3079 = vmatpush1.msra.mxu0 0.0
      %3080 = vmatprep.subr.mxu0 0.0
      %3081 = vmatpush1.msra.mxu0 0.0
      %3082 = vmatprep.subr.mxu0 0.0
      %3083 = vmatpush1.msra.mxu0 0.0
      %3084 = vmatprep.subr.mxu0 0.0
      %3085 = vmatpush1.msra.mxu0 0.0
      %3086 = vmatprep.subr.mxu0 0.0
      %3087 = vmatpush1.msra.mxu0 0.0
      %3088 = vmatprep.subr.mxu0 0.0
      %3089 = vmatpush1.msra.mxu0 0.0
      %3090 = vmatprep.subr.mxu0 0.0
      %3091 = vmatpush1.msra.mxu0 0.0
      %3092 = vmatprep.subr.mxu0 0.0
      %3093 = vmatpush1.msra.mxu0 0.0
      %3094 = vmatprep.subr.mxu0 0.0
      %3095 = vmatpush1.msra.mxu0 0.0
      %3096 = vmatprep.subr.mxu0 0.0
      %3097 = vmatpush1.msra.mxu0 0.0
      %3098 = vmatprep.subr.mxu0 0.0
      %3099 = vmatpush1.msra.mxu0 0.0
      %3100 = vmatprep.subr.mxu0 0.0
      %3101 = vmatpush1.msra.mxu0 0.0
      %3102 = vmatprep.subr.mxu0 0.0
      %3103 = vmatpush1.msra.mxu0 0.0
      %3104 = vmatprep.subr.mxu0 0.0
      %3105 = vmatpush1.msra.mxu0 0.0
      %3106 = vmatprep.subr.mxu0 0.0
      %3107 = vmatpush1.msra.mxu0 0.0
      %3108 = vmatprep.subr.mxu0 0.0
      %3109 = vmatpush1.msra.mxu0 0.0
      %3110 = vmatprep.subr.mxu0 0.0
      %3111 = vmatpush1.msra.mxu0 0.0
      %3112 = vmatprep.subr.mxu0 0.0
      %3113 = vmatpush1.msra.mxu0 0.0
      %3114 = vmatprep.subr.mxu0 0.0
      %3115 = vmatpush1.msra.mxu0 0.0
      %3116 = vmatprep.subr.mxu0 0.0
      %3117 = vmatpush1.msra.mxu0 0.0
      %3118 = vmatprep.subr.mxu0 0.0
      %3119 = vmatpush1.msra.mxu0 0.0
      %3120 = vmatprep.subr.mxu0 0.0
      %3121 = vmatpush1.msra.mxu0 0.0
      %3122 = vmatprep.subr.mxu0 0.0
      %3123 = vmatpush1.msra.mxu0 0.0
      %3124 = vmatprep.subr.mxu0 0.0
      %3125 = vmatpush1.msra.mxu0 0.0
      %3126 = vmatprep.subr.mxu0 0.0
      %3127 = vmatpush1.msra.mxu0 0.0
      %3128 = vmatprep.subr.mxu0 0.0
      %3129 = vmatpush1.msra.mxu0 0.0
      %3130 = vmatprep.mubr.f32.mxu0 0.0
      %3131 = vmatmul.mubr.f32.gmra.mrb[0].mxu0 %v3064
      %v3132 = vpop.f32.mrb[0].mxu0
      %v3133 = vadd.f32 0.0, %v3132
      %v3134 = vpop.f32.mrb[0].mxu0
      %3135 = vdwg.mxu0
      %v3137 = vsel %vm1678, %v2608, 0
      %3139 = vmatprep.subr.mxu0 0.0
      %3140 = vmatpush1.msra.mxu0 %v2988
      %3141 = vmatprep.subr.mxu0 0.0
      %3142 = vmatpush1.msra.mxu0 0.0
      %3143 = vmatprep.subr.mxu0 0.0
      %3144 = vmatpush1.msra.mxu0 0.0
      %3145 = vmatprep.subr.mxu0 0.0
      %3146 = vmatpush1.msra.mxu0 0.0
      %3147 = vmatprep.subr.mxu0 0.0
      %3148 = vmatpush1.msra.mxu0 0.0
      %3149 = vmatprep.subr.mxu0 0.0
      %3150 = vmatpush1.msra.mxu0 0.0
      %3151 = vmatprep.subr.mxu0 0.0
      %3152 = vmatpush1.msra.mxu0 0.0
      %3153 = vmatprep.subr.mxu0 0.0
      %3154 = vmatpush1.msra.mxu0 0.0
      %3155 = vmatprep.subr.mxu0 0.0
      %3156 = vmatpush1.msra.mxu0 0.0
      %3157 = vmatprep.subr.mxu0 0.0
      %3158 = vmatpush1.msra.mxu0 0.0
      %3159 = vmatprep.subr.mxu0 0.0
      %3160 = vmatpush1.msra.mxu0 0.0
      %3161 = vmatprep.subr.mxu0 0.0
      %3162 = vmatpush1.msra.mxu0 0.0
      %3163 = vmatprep.subr.mxu0 0.0
      %3164 = vmatpush1.msra.mxu0 0.0
      %3165 = vmatprep.subr.mxu0 0.0
      %3166 = vmatpush1.msra.mxu0 0.0
      %3167 = vmatprep.subr.mxu0 0.0
      %3168 = vmatpush1.msra.mxu0 0.0
      %3169 = vmatprep.subr.mxu0 0.0
      %3170 = vmatpush1.msra.mxu0 0.0
      %3171 = vmatprep.subr.mxu0 0.0
      %3172 = vmatpush1.msra.mxu0 0.0
      %3173 = vmatprep.subr.mxu0 0.0
      %3174 = vmatpush1.msra.mxu0 0.0
      %3175 = vmatprep.subr.mxu0 0.0
      %3176 = vmatpush1.msra.mxu0 0.0
      %3177 = vmatprep.subr.mxu0 0.0
      %3178 = vmatpush1.msra.mxu0 0.0
      %3179 = vmatprep.subr.mxu0 0.0
      %3180 = vmatpush1.msra.mxu0 0.0
      %3181 = vmatprep.subr.mxu0 0.0
      %3182 = vmatpush1.msra.mxu0 0.0
      %3183 = vmatprep.subr.mxu0 0.0
      %3184 = vmatpush1.msra.mxu0 0.0
      %3185 = vmatprep.subr.mxu0 0.0
      %3186 = vmatpush1.msra.mxu0 0.0
      %3187 = vmatprep.subr.mxu0 0.0
      %3188 = vmatpush1.msra.mxu0 0.0
      %3189 = vmatprep.subr.mxu0 0.0
      %3190 = vmatpush1.msra.mxu0 0.0
      %3191 = vmatprep.subr.mxu0 0.0
      %3192 = vmatpush1.msra.mxu0 0.0
      %3193 = vmatprep.subr.mxu0 0.0
      %3194 = vmatpush1.msra.mxu0 0.0
      %3195 = vmatprep.subr.mxu0 0.0
      %3196 = vmatpush1.msra.mxu0 0.0
      %3197 = vmatprep.subr.mxu0 0.0
      %3198 = vmatpush1.msra.mxu0 0.0
      %3199 = vmatprep.subr.mxu0 0.0
      %3200 = vmatpush1.msra.mxu0 0.0
      %3201 = vmatprep.subr.mxu0 0.0
      %3202 = vmatpush1.msra.mxu0 0.0
      %3203 = vmatprep.mubr.f32.mxu0 0.0
      %3204 = vmatmul.mubr.f32.gmra.mrb[0].mxu0 %v3137
      %v3205 = vpop.f32.mrb[0].mxu0
      %v3206 = vadd.f32 0.0, %v3205
      %v3207 = vpop.f32.mrb[0].mxu0
      %3208 = vdwg.mxu0
      %v3210 = vsel %vm1678, %v2683, 0
      %3212 = vmatprep.subr.mxu0 0.0
      %3213 = vmatpush1.msra.mxu0 %v2989
      %3214 = vmatprep.subr.mxu0 0.0
      %3215 = vmatpush1.msra.mxu0 0.0
      %3216 = vmatprep.subr.mxu0 0.0
      %3217 = vmatpush1.msra.mxu0 0.0
      %3218 = vmatprep.subr.mxu0 0.0
      %3219 = vmatpush1.msra.mxu0 0.0
      %3220 = vmatprep.subr.mxu0 0.0
      %3221 = vmatpush1.msra.mxu0 0.0
      %3222 = vmatprep.subr.mxu0 0.0
      %3223 = vmatpush1.msra.mxu0 0.0
      %3224 = vmatprep.subr.mxu0 0.0
      %3225 = vmatpush1.msra.mxu0 0.0
      %3226 = vmatprep.subr.mxu0 0.0
      %3227 = vmatpush1.msra.mxu0 0.0
      %3228 = vmatprep.subr.mxu0 0.0
      %3229 = vmatpush1.msra.mxu0 0.0
      %3230 = vmatprep.subr.mxu0 0.0
      %3231 = vmatpush1.msra.mxu0 0.0
      %3232 = vmatprep.subr.mxu0 0.0
      %3233 = vmatpush1.msra.mxu0 0.0
      %3234 = vmatprep.subr.mxu0 0.0
      %3235 = vmatpush1.msra.mxu0 0.0
      %3236 = vmatprep.subr.mxu0 0.0
      %3237 = vmatpush1.msra.mxu0 0.0
      %3238 = vmatprep.subr.mxu0 0.0
      %3239 = vmatpush1.msra.mxu0 0.0
      %3240 = vmatprep.subr.mxu0 0.0
      %3241 = vmatpush1.msra.mxu0 0.0
      %3242 = vmatprep.subr.mxu0 0.0
      %3243 = vmatpush1.msra.mxu0 0.0
      %3244 = vmatprep.subr.mxu0 0.0
      %3245 = vmatpush1.msra.mxu0 0.0
      %3246 = vmatprep.subr.mxu0 0.0
      %3247 = vmatpush1.msra.mxu0 0.0
      %3248 = vmatprep.subr.mxu0 0.0
      %3249 = vmatpush1.msra.mxu0 0.0
      %3250 = vmatprep.subr.mxu0 0.0
      %3251 = vmatpush1.msra.mxu0 0.0
      %3252 = vmatprep.subr.mxu0 0.0
      %3253 = vmatpush1.msra.mxu0 0.0
      %3254 = vmatprep.subr.mxu0 0.0
      %3255 = vmatpush1.msra.mxu0 0.0
      %3256 = vmatprep.subr.mxu0 0.0
      %3257 = vmatpush1.msra.mxu0 0.0
      %3258 = vmatprep.subr.mxu0 0.0
      %3259 = vmatpush1.msra.mxu0 0.0
      %3260 = vmatprep.subr.mxu0 0.0
      %3261 = vmatpush1.msra.mxu0 0.0
      %3262 = vmatprep.subr.mxu0 0.0
      %3263 = vmatpush1.msra.mxu0 0.0
      %3264 = vmatprep.subr.mxu0 0.0
      %3265 = vmatpush1.msra.mxu0 0.0
      %3266 = vmatprep.subr.mxu0 0.0
      %3267 = vmatpush1.msra.mxu0 0.0
      %3268 = vmatprep.subr.mxu0 0.0
      %3269 = vmatpush1.msra.mxu0 0.0
      %3270 = vmatprep.subr.mxu0 0.0
      %3271 = vmatpush1.msra.mxu0 0.0
      %3272 = vmatprep.subr.mxu0 0.0
      %3273 = vmatpush1.msra.mxu0 0.0
      %3274 = vmatprep.subr.mxu0 0.0
      %3275 = vmatpush1.msra.mxu0 0.0
      %3276 = vmatprep.mubr.f32.mxu0 0.0
      %3277 = vmatmul.mubr.f32.gmra.mrb[0].mxu0 %v3210
      %v3278 = vpop.f32.mrb[0].mxu0
      %v3279 = vadd.f32 0.0, %v3278
      %v3280 = vpop.f32.mrb[0].mxu0
      %3281 = vdwg.mxu0
      %v3283 = vsel %vm1678, %v2758, 0
      %3285 = vmatprep.subr.mxu0 0.0
      %3286 = vmatpush1.msra.mxu0 %v2986
      %3287 = vmatprep.subr.mxu0 0.0
      %3288 = vmatpush1.msra.mxu0 0.0
      %3289 = vmatprep.subr.mxu0 0.0
      %3290 = vmatpush1.msra.mxu0 0.0
      %3291 = vmatprep.subr.mxu0 0.0
      %3292 = vmatpush1.msra.mxu0 0.0
      %3293 = vmatprep.subr.mxu0 0.0
      %3294 = vmatpush1.msra.mxu0 0.0
      %3295 = vmatprep.subr.mxu0 0.0
      %3296 = vmatpush1.msra.mxu0 0.0
      %3297 = vmatprep.subr.mxu0 0.0
      %3298 = vmatpush1.msra.mxu0 0.0
      %3299 = vmatprep.subr.mxu0 0.0
      %3300 = vmatpush1.msra.mxu0 0.0
      %3301 = vmatprep.subr.mxu0 0.0
      %3302 = vmatpush1.msra.mxu0 0.0
      %3303 = vmatprep.subr.mxu0 0.0
      %3304 = vmatpush1.msra.mxu0 0.0
      %3305 = vmatprep.subr.mxu0 0.0
      %3306 = vmatpush1.msra.mxu0 0.0
      %3307 = vmatprep.subr.mxu0 0.0
      %3308 = vmatpush1.msra.mxu0 0.0
      %3309 = vmatprep.subr.mxu0 0.0
      %3310 = vmatpush1.msra.mxu0 0.0
      %3311 = vmatprep.subr.mxu0 0.0
      %3312 = vmatpush1.msra.mxu0 0.0
      %3313 = vmatprep.subr.mxu0 0.0
      %3314 = vmatpush1.msra.mxu0 0.0
      %3315 = vmatprep.subr.mxu0 0.0
      %3316 = vmatpush1.msra.mxu0 0.0
      %3317 = vmatprep.subr.mxu0 0.0
      %3318 = vmatpush1.msra.mxu0 0.0
      %3319 = vmatprep.subr.mxu0 0.0
      %3320 = vmatpush1.msra.mxu0 0.0
      %3321 = vmatprep.subr.mxu0 0.0
      %3322 = vmatpush1.msra.mxu0 0.0
      %3323 = vmatprep.subr.mxu0 0.0
      %3324 = vmatpush1.msra.mxu0 0.0
      %3325 = vmatprep.subr.mxu0 0.0
      %3326 = vmatpush1.msra.mxu0 0.0
      %3327 = vmatprep.subr.mxu0 0.0
      %3328 = vmatpush1.msra.mxu0 0.0
      %3329 = vmatprep.subr.mxu0 0.0
      %3330 = vmatpush1.msra.mxu0 0.0
      %3331 = vmatprep.subr.mxu0 0.0
      %3332 = vmatpush1.msra.mxu0 0.0
      %3333 = vmatprep.subr.mxu0 0.0
      %3334 = vmatpush1.msra.mxu0 0.0
      %3335 = vmatprep.subr.mxu0 0.0
      %3336 = vmatpush1.msra.mxu0 0.0
      %3337 = vmatprep.subr.mxu0 0.0
      %3338 = vmatpush1.msra.mxu0 0.0
      %3339 = vmatprep.subr.mxu0 0.0
      %3340 = vmatpush1.msra.mxu0 0.0
      %3341 = vmatprep.subr.mxu0 0.0
      %3342 = vmatpush1.msra.mxu0 0.0
      %3343 = vmatprep.subr.mxu0 0.0
      %3344 = vmatpush1.msra.mxu0 0.0
      %3345 = vmatprep.subr.mxu0 0.0
      %3346 = vmatpush1.msra.mxu0 0.0
      %3347 = vmatprep.subr.mxu0 0.0
      %3348 = vmatpush1.msra.mxu0 0.0
      %3349 = vmatprep.mubr.f32.mxu0 0.0
      %3350 = vmatmul.mubr.f32.gmra.mrb[0].mxu0 %v3283
      %v3351 = vpop.f32.mrb[0].mxu0
      %v3352 = vadd.f32 0.0, %v3351
      %v3353 = vpop.f32.mrb[0].mxu0
      %3354 = vdwg.mxu0
      %v3356 = vsel %vm1678, %v2833, 0
      %3358 = vmatprep.subr.mxu0 0.0
      %3359 = vmatpush1.msra.mxu0 %v2987
      %3360 = vmatprep.subr.mxu0 0.0
      %3361 = vmatpush1.msra.mxu0 0.0
      %3362 = vmatprep.subr.mxu0 0.0
      %3363 = vmatpush1.msra.mxu0 0.0
      %3364 = vmatprep.subr.mxu0 0.0
      %3365 = vmatpush1.msra.mxu0 0.0
      %3366 = vmatprep.subr.mxu0 0.0
      %3367 = vmatpush1.msra.mxu0 0.0
      %3368 = vmatprep.subr.mxu0 0.0
      %3369 = vmatpush1.msra.mxu0 0.0
      %3370 = vmatprep.subr.mxu0 0.0
      %3371 = vmatpush1.msra.mxu0 0.0
      %3372 = vmatprep.subr.mxu0 0.0
      %3373 = vmatpush1.msra.mxu0 0.0
      %3374 = vmatprep.subr.mxu0 0.0
      %3375 = vmatpush1.msra.mxu0 0.0
      %3376 = vmatprep.subr.mxu0 0.0
      %3377 = vmatpush1.msra.mxu0 0.0
      %3378 = vmatprep.subr.mxu0 0.0
      %3379 = vmatpush1.msra.mxu0 0.0
      %3380 = vmatprep.subr.mxu0 0.0
      %3381 = vmatpush1.msra.mxu0 0.0
      %3382 = vmatprep.subr.mxu0 0.0
      %3383 = vmatpush1.msra.mxu0 0.0
      %3384 = vmatprep.subr.mxu0 0.0
      %3385 = vmatpush1.msra.mxu0 0.0
      %3386 = vmatprep.subr.mxu0 0.0
      %3387 = vmatpush1.msra.mxu0 0.0
      %3388 = vmatprep.subr.mxu0 0.0
      %3389 = vmatpush1.msra.mxu0 0.0
      %3390 = vmatprep.subr.mxu0 0.0
      %3391 = vmatpush1.msra.mxu0 0.0
      %3392 = vmatprep.subr.mxu0 0.0
      %3393 = vmatpush1.msra.mxu0 0.0
      %3394 = vmatprep.subr.mxu0 0.0
      %3395 = vmatpush1.msra.mxu0 0.0
      %3396 = vmatprep.subr.mxu0 0.0
      %3397 = vmatpush1.msra.mxu0 0.0
      %3398 = vmatprep.subr.mxu0 0.0
      %3399 = vmatpush1.msra.mxu0 0.0
      %3400 = vmatprep.subr.mxu0 0.0
      %3401 = vmatpush1.msra.mxu0 0.0
      %3402 = vmatprep.subr.mxu0 0.0
      %3403 = vmatpush1.msra.mxu0 0.0
      %3404 = vmatprep.subr.mxu0 0.0
      %3405 = vmatpush1.msra.mxu0 0.0
      %3406 = vmatprep.subr.mxu0 0.0
      %3407 = vmatpush1.msra.mxu0 0.0
      %3408 = vmatprep.subr.mxu0 0.0
      %3409 = vmatpush1.msra.mxu0 0.0
      %3410 = vmatprep.subr.mxu0 0.0
      %3411 = vmatpush1.msra.mxu0 0.0
      %3412 = vmatprep.subr.mxu0 0.0
      %3413 = vmatpush1.msra.mxu0 0.0
      %3414 = vmatprep.subr.mxu0 0.0
      %3415 = vmatpush1.msra.mxu0 0.0
      %3416 = vmatprep.subr.mxu0 0.0
      %3417 = vmatpush1.msra.mxu0 0.0
      %3418 = vmatprep.subr.mxu0 0.0
      %3419 = vmatpush1.msra.mxu0 0.0
      %3420 = vmatprep.subr.mxu0 0.0
      %3421 = vmatpush1.msra.mxu0 0.0
      %3422 = vmatprep.mubr.f32.mxu0 0.0
      %3423 = vmatmul.mubr.f32.gmra.mrb[0].mxu0 %v3356
      %v3424 = vpop.f32.mrb[0].mxu0
      %v3425 = vadd.f32 0.0, %v3424
      %v3426 = vpop.f32.mrb[0].mxu0
      %3427 = vdwg.mxu0
      %v3429 = vsel %vm1678, %v2908, 0
      %3431 = vmatprep.subr.mxu0 0.0
      %3432 = vmatpush1.msra.mxu0 %v2988
      %3433 = vmatprep.subr.mxu0 0.0
      %3434 = vmatpush1.msra.mxu0 0.0
      %3435 = vmatprep.subr.mxu0 0.0
      %3436 = vmatpush1.msra.mxu0 0.0
      %3437 = vmatprep.subr.mxu0 0.0
      %3438 = vmatpush1.msra.mxu0 0.0
      %3439 = vmatprep.subr.mxu0 0.0
      %3440 = vmatpush1.msra.mxu0 0.0
      %3441 = vmatprep.subr.mxu0 0.0
      %3442 = vmatpush1.msra.mxu0 0.0
      %3443 = vmatprep.subr.mxu0 0.0
      %3444 = vmatpush1.msra.mxu0 0.0
      %3445 = vmatprep.subr.mxu0 0.0
      %3446 = vmatpush1.msra.mxu0 0.0
      %3447 = vmatprep.subr.mxu0 0.0
      %3448 = vmatpush1.msra.mxu0 0.0
      %3449 = vmatprep.subr.mxu0 0.0
      %3450 = vmatpush1.msra.mxu0 0.0
      %3451 = vmatprep.subr.mxu0 0.0
      %3452 = vmatpush1.msra.mxu0 0.0
      %3453 = vmatprep.subr.mxu0 0.0
      %3454 = vmatpush1.msra.mxu0 0.0
      %3455 = vmatprep.subr.mxu0 0.0
      %3456 = vmatpush1.msra.mxu0 0.0
      %3457 = vmatprep.subr.mxu0 0.0
      %3458 = vmatpush1.msra.mxu0 0.0
      %3459 = vmatprep.subr.mxu0 0.0
      %3460 = vmatpush1.msra.mxu0 0.0
      %3461 = vmatprep.subr.mxu0 0.0
      %3462 = vmatpush1.msra.mxu0 0.0
      %3463 = vmatprep.subr.mxu0 0.0
      %3464 = vmatpush1.msra.mxu0 0.0
      %3465 = vmatprep.subr.mxu0 0.0
      %3466 = vmatpush1.msra.mxu0 0.0
      %3467 = vmatprep.subr.mxu0 0.0
      %3468 = vmatpush1.msra.mxu0 0.0
      %3469 = vmatprep.subr.mxu0 0.0
      %3470 = vmatpush1.msra.mxu0 0.0
      %3471 = vmatprep.subr.mxu0 0.0
      %3472 = vmatpush1.msra.mxu0 0.0
      %3473 = vmatprep.subr.mxu0 0.0
      %3474 = vmatpush1.msra.mxu0 0.0
      %3475 = vmatprep.subr.mxu0 0.0
      %3476 = vmatpush1.msra.mxu0 0.0
      %3477 = vmatprep.subr.mxu0 0.0
      %3478 = vmatpush1.msra.mxu0 0.0
      %3479 = vmatprep.subr.mxu0 0.0
      %3480 = vmatpush1.msra.mxu0 0.0
      %3481 = vmatprep.subr.mxu0 0.0
      %3482 = vmatpush1.msra.mxu0 0.0
      %3483 = vmatprep.subr.mxu0 0.0
      %3484 = vmatpush1.msra.mxu0 0.0
      %3485 = vmatprep.subr.mxu0 0.0
      %3486 = vmatpush1.msra.mxu0 0.0
      %3487 = vmatprep.subr.mxu0 0.0
      %3488 = vmatpush1.msra.mxu0 0.0
      %3489 = vmatprep.subr.mxu0 0.0
      %3490 = vmatpush1.msra.mxu0 0.0
      %3491 = vmatprep.subr.mxu0 0.0
      %3492 = vmatpush1.msra.mxu0 0.0
      %3493 = vmatprep.subr.mxu0 0.0
      %3494 = vmatpush1.msra.mxu0 0.0
      %3495 = vmatprep.mubr.f32.mxu0 0.0
      %3496 = vmatmul.mubr.f32.gmra.mrb[0].mxu0 %v3429
      %v3497 = vpop.f32.mrb[0].mxu0
      %v3498 = vadd.f32 0.0, %v3497
      %v3499 = vpop.f32.mrb[0].mxu0
      %3500 = vdwg.mxu0
      %v3502 = vsel %vm1678, %v2983, 0
      %3504 = vmatprep.subr.mxu0 0.0
      %3505 = vmatpush1.msra.mxu0 %v2989
      %3506 = vmatprep.subr.mxu0 0.0
      %3507 = vmatpush1.msra.mxu0 0.0
      %3508 = vmatprep.subr.mxu0 0.0
      %3509 = vmatpush1.msra.mxu0 0.0
      %3510 = vmatprep.subr.mxu0 0.0
      %3511 = vmatpush1.msra.mxu0 0.0
      %3512 = vmatprep.subr.mxu0 0.0
      %3513 = vmatpush1.msra.mxu0 0.0
      %3514 = vmatprep.subr.mxu0 0.0
      %3515 = vmatpush1.msra.mxu0 0.0
      %3516 = vmatprep.subr.mxu0 0.0
      %3517 = vmatpush1.msra.mxu0 0.0
      %3518 = vmatprep.subr.mxu0 0.0
      %3519 = vmatpush1.msra.mxu0 0.0
      %3520 = vmatprep.subr.mxu0 0.0
      %3521 = vmatpush1.msra.mxu0 0.0
      %3522 = vmatprep.subr.mxu0 0.0
      %3523 = vmatpush1.msra.mxu0 0.0
      %3524 = vmatprep.subr.mxu0 0.0
      %3525 = vmatpush1.msra.mxu0 0.0
      %3526 = vmatprep.subr.mxu0 0.0
      %3527 = vmatpush1.msra.mxu0 0.0
      %3528 = vmatprep.subr.mxu0 0.0
      %3529 = vmatpush1.msra.mxu0 0.0
      %3530 = vmatprep.subr.mxu0 0.0
      %3531 = vmatpush1.msra.mxu0 0.0
      %3532 = vmatprep.subr.mxu0 0.0
      %3533 = vmatpush1.msra.mxu0 0.0
      %3534 = vmatprep.subr.mxu0 0.0
      %3535 = vmatpush1.msra.mxu0 0.0
      %3536 = vmatprep.subr.mxu0 0.0
      %3537 = vmatpush1.msra.mxu0 0.0
      %3538 = vmatprep.subr.mxu0 0.0
      %3539 = vmatpush1.msra.mxu0 0.0
      %3540 = vmatprep.subr.mxu0 0.0
      %3541 = vmatpush1.msra.mxu0 0.0
      %3542 = vmatprep.subr.mxu0 0.0
      %3543 = vmatpush1.msra.mxu0 0.0
      %3544 = vmatprep.subr.mxu0 0.0
      %3545 = vmatpush1.msra.mxu0 0.0
      %3546 = vmatprep.subr.mxu0 0.0
      %3547 = vmatpush1.msra.mxu0 0.0
      %3548 = vmatprep.subr.mxu0 0.0
      %3549 = vmatpush1.msra.mxu0 0.0
      %3550 = vmatprep.subr.mxu0 0.0
      %3551 = vmatpush1.msra.mxu0 0.0
      %3552 = vmatprep.subr.mxu0 0.0
      %3553 = vmatpush1.msra.mxu0 0.0
      %3554 = vmatprep.subr.mxu0 0.0
      %3555 = vmatpush1.msra.mxu0 0.0
      %3556 = vmatprep.subr.mxu0 0.0
      %3557 = vmatpush1.msra.mxu0 0.0
      %3558 = vmatprep.subr.mxu0 0.0
      %3559 = vmatpush1.msra.mxu0 0.0
      %3560 = vmatprep.subr.mxu0 0.0
      %3561 = vmatpush1.msra.mxu0 0.0
      %3562 = vmatprep.subr.mxu0 0.0
      %3563 = vmatpush1.msra.mxu0 0.0
      %3564 = vmatprep.subr.mxu0 0.0
      %3565 = vmatpush1.msra.mxu0 0.0
      %3566 = vmatprep.subr.mxu0 0.0
      %3567 = vmatpush1.msra.mxu0 0.0
      %3568 = vmatprep.mubr.f32.mxu0 0.0
      %3569 = vmatmul.mubr.f32.gmra.mrb[0].mxu0 %v3502
      %v3570 = vpop.f32.mrb[0].mxu0
      %v3571 = vadd.f32 0.0, %v3570
      %v3572 = vpop.f32.mrb[0].mxu0
      %3573 = vdwg.mxu0
      %v3574 = vadd.f32 %v3060, %v3133
      %v3575 = vadd.f32 %v3352, %v3425
      %v3576 = vadd.f32 %v3574, %v3206
      %v3577 = vadd.f32 %v3575, %v3498
      %v3578 = vadd.f32 %v3576, %v3279
      %v3579 = vadd.f32 %v3577, %v3571
      %v3580 = vld [vmem:[%s7] sm:$0x1]
      %v3582 = vlaneseq
      %v3583 = vshrl.u32 %v3582, 7
      %v3584 = vsub.s32 0, %v3583
      %v3585 = vrot.slane %v3580, %v3584
      %v3587 = vadd.f32 %v3578, %v3585
      %v3588 = vadd.f32 %v3579, %v3585
      %v3589 = vld [vmem:[%s8] sm:$0xff]
      %v3590 = vld [vmem:[%s8 + $0x8] sm:$0xff]
      %v3591 = vld [vmem:[%s8 + $0x10] sm:$0xff]
      %v3592 = vld [vmem:[%s8 + $0x18] sm:$0xff]
      %v3593 = vld [vmem:[%s9] sm:$0xff]
      %v3594 = vld [vmem:[%s9 + $0x8] sm:$0xff]
      %v3595 = vld [vmem:[%s9 + $0x10] sm:$0xff]
      %v3596 = vld [vmem:[%s9 + $0x18] sm:$0xff]
      %3597 = vmatprep.subr.mxu0 0.0
      %3598 = vmatpush1.msra.mxu0 %v3593
      %3599 = vmatprep.subr.mxu0 0.0
      %3600 = vmatpush1.msra.mxu0 %v3594
      %3601 = vmatprep.subr.mxu0 0.0
      %3602 = vmatpush1.msra.mxu0 %v3595
      %3603 = vmatprep.subr.mxu0 0.0
      %3604 = vmatpush1.msra.mxu0 %v3596
      %3605 = vmatprep.subr.mxu0 0.0
      %3606 = vmatpush1.msra.mxu0 0.0
      %3607 = vmatprep.subr.mxu0 0.0
      %3608 = vmatpush1.msra.mxu0 0.0
      %3609 = vmatprep.subr.mxu0 0.0
      %3610 = vmatpush1.msra.mxu0 0.0
      %3611 = vmatprep.subr.mxu0 0.0
      %3612 = vmatpush1.msra.mxu0 0.0
      %3613 = vmatprep.subr.mxu0 0.0
      %3614 = vmatpush1.msra.mxu0 0.0
      %3615 = vmatprep.subr.mxu0 0.0
      %3616 = vmatpush1.msra.mxu0 0.0
      %3617 = vmatprep.subr.mxu0 0.0
      %3618 = vmatpush1.msra.mxu0 0.0
      %3619 = vmatprep.subr.mxu0 0.0
      %3620 = vmatpush1.msra.mxu0 0.0
      %3621 = vmatprep.subr.mxu0 0.0
      %3622 = vmatpush1.msra.mxu0 0.0
      %3623 = vmatprep.subr.mxu0 0.0
      %3624 = vmatpush1.msra.mxu0 0.0
      %3625 = vmatprep.subr.mxu0 0.0
      %3626 = vmatpush1.msra.mxu0 0.0
      %3627 = vmatprep.subr.mxu0 0.0
      %3628 = vmatpush1.msra.mxu0 0.0
      %3629 = vmatprep.subr.mxu0 0.0
      %3630 = vmatpush1.msra.mxu0 0.0
      %3631 = vmatprep.subr.mxu0 0.0
      %3632 = vmatpush1.msra.mxu0 0.0
      %3633 = vmatprep.subr.mxu0 0.0
      %3634 = vmatpush1.msra.mxu0 0.0
      %3635 = vmatprep.subr.mxu0 0.0
      %3636 = vmatpush1.msra.mxu0 0.0
      %3637 = vmatprep.subr.mxu0 0.0
      %3638 = vmatpush1.msra.mxu0 0.0
      %3639 = vmatprep.subr.mxu0 0.0
      %3640 = vmatpush1.msra.mxu0 0.0
      %3641 = vmatprep.subr.mxu0 0.0
      %3642 = vmatpush1.msra.mxu0 0.0
      %3643 = vmatprep.subr.mxu0 0.0
      %3644 = vmatpush1.msra.mxu0 0.0
      %3645 = vmatprep.subr.mxu0 0.0
      %3646 = vmatpush1.msra.mxu0 0.0
      %3647 = vmatprep.subr.mxu0 0.0
      %3648 = vmatpush1.msra.mxu0 0.0
      %3649 = vmatprep.subr.mxu0 0.0
      %3650 = vmatpush1.msra.mxu0 0.0
      %3651 = vmatprep.subr.mxu0 0.0
      %3652 = vmatpush1.msra.mxu0 0.0
      %3653 = vmatprep.subr.mxu0 0.0
      %3654 = vmatpush1.msra.mxu0 0.0
      %3655 = vmatprep.subr.mxu0 0.0
      %3656 = vmatpush1.msra.mxu0 0.0
      %3657 = vmatprep.subr.mxu0 0.0
      %3658 = vmatpush1.msra.mxu0 0.0
      %3659 = vmatprep.subr.mxu0 0.0
      %3660 = vmatpush1.msra.mxu0 0.0
      %3661 = vmatprep.mubr.f32.mxu0 0.0
      %3662 = vmatmul.mubr.f32.gmra.mrb[0].mxu0 %v1113
      %v3663 = vpop.f32.mrb[0].mxu0
      %v3664 = vadd.f32 0.0, %v3663
      %v3665 = vpop.f32.mrb[0].mxu0
      %3666 = vdwg.mxu0
      %3667 = vmatprep.subr.mxu0 0.0
      %3668 = vmatpush1.msra.mxu0 %v3593
      %3669 = vmatprep.subr.mxu0 0.0
      %3670 = vmatpush1.msra.mxu0 %v3594
      %3671 = vmatprep.subr.mxu0 0.0
      %3672 = vmatpush1.msra.mxu0 %v3595
      %3673 = vmatprep.subr.mxu0 0.0
      %3674 = vmatpush1.msra.mxu0 %v3596
      %3675 = vmatprep.subr.mxu0 0.0
      %3676 = vmatpush1.msra.mxu0 0.0
      %3677 = vmatprep.subr.mxu0 0.0
      %3678 = vmatpush1.msra.mxu0 0.0
      %3679 = vmatprep.subr.mxu0 0.0
      %3680 = vmatpush1.msra.mxu0 0.0
      %3681 = vmatprep.subr.mxu0 0.0
      %3682 = vmatpush1.msra.mxu0 0.0
      %3683 = vmatprep.subr.mxu0 0.0
      %3684 = vmatpush1.msra.mxu0 0.0
      %3685 = vmatprep.subr.mxu0 0.0
      %3686 = vmatpush1.msra.mxu0 0.0
      %3687 = vmatprep.subr.mxu0 0.0
      %3688 = vmatpush1.msra.mxu0 0.0
      %3689 = vmatprep.subr.mxu0 0.0
      %3690 = vmatpush1.msra.mxu0 0.0
      %3691 = vmatprep.subr.mxu0 0.0
      %3692 = vmatpush1.msra.mxu0 0.0
      %3693 = vmatprep.subr.mxu0 0.0
      %3694 = vmatpush1.msra.mxu0 0.0
      %3695 = vmatprep.subr.mxu0 0.0
      %3696 = vmatpush1.msra.mxu0 0.0
      %3697 = vmatprep.subr.mxu0 0.0
      %3698 = vmatpush1.msra.mxu0 0.0
      %3699 = vmatprep.subr.mxu0 0.0
      %3700 = vmatpush1.msra.mxu0 0.0
      %3701 = vmatprep.subr.mxu0 0.0
      %3702 = vmatpush1.msra.mxu0 0.0
      %3703 = vmatprep.subr.mxu0 0.0
      %3704 = vmatpush1.msra.mxu0 0.0
      %3705 = vmatprep.subr.mxu0 0.0
      %3706 = vmatpush1.msra.mxu0 0.0
      %3707 = vmatprep.subr.mxu0 0.0
      %3708 = vmatpush1.msra.mxu0 0.0
      %3709 = vmatprep.subr.mxu0 0.0
      %3710 = vmatpush1.msra.mxu0 0.0
      %3711 = vmatprep.subr.mxu0 0.0
      %3712 = vmatpush1.msra.mxu0 0.0
      %3713 = vmatprep.subr.mxu0 0.0
      %3714 = vmatpush1.msra.mxu0 0.0
      %3715 = vmatprep.subr.mxu0 0.0
      %3716 = vmatpush1.msra.mxu0 0.0
      %3717 = vmatprep.subr.mxu0 0.0
      %3718 = vmatpush1.msra.mxu0 0.0
      %3719 = vmatprep.subr.mxu0 0.0
      %3720 = vmatpush1.msra.mxu0 0.0
      %3721 = vmatprep.subr.mxu0 0.0
      %3722 = vmatpush1.msra.mxu0 0.0
      %3723 = vmatprep.subr.mxu0 0.0
      %3724 = vmatpush1.msra.mxu0 0.0
      %3725 = vmatprep.subr.mxu0 0.0
      %3726 = vmatpush1.msra.mxu0 0.0
      %3727 = vmatprep.subr.mxu0 0.0
      %3728 = vmatpush1.msra.mxu0 0.0
      %3729 = vmatprep.subr.mxu0 0.0
      %3730 = vmatpush1.msra.mxu0 0.0
      %3731 = vmatprep.mubr.f32.mxu0 0.0
      %3732 = vmatmul.mubr.f32.gmra.mrb[0].mxu0 %v1396
      %v3733 = vpop.f32.mrb[0].mxu0
      %v3734 = vadd.f32 0.0, %v3733
      %v3735 = vpop.f32.mrb[0].mxu0
      %3736 = vdwg.mxu0
      %v3738 = vsel %vm521, %v3587, 0
      %3740 = vmatprep.subr.mxu0 0.0
      %3741 = vmatpush1.msra.mxu0 %v3589
      %3742 = vmatprep.subr.mxu0 0.0
      %3743 = vmatpush1.msra.mxu0 %v3590
      %3744 = vmatprep.subr.mxu0 0.0
      %3745 = vmatpush1.msra.mxu0 %v3591
      %3746 = vmatprep.subr.mxu0 0.0
      %3747 = vmatpush1.msra.mxu0 %v3592
      %3748 = vmatprep.subr.mxu0 0.0
      %3749 = vmatpush1.msra.mxu0 0.0
      %3750 = vmatprep.subr.mxu0 0.0
      %3751 = vmatpush1.msra.mxu0 0.0
      %3752 = vmatprep.subr.mxu0 0.0
      %3753 = vmatpush1.msra.mxu0 0.0
      %3754 = vmatprep.subr.mxu0 0.0
      %3755 = vmatpush1.msra.mxu0 0.0
      %3756 = vmatprep.subr.mxu0 0.0
      %3757 = vmatpush1.msra.mxu0 0.0
      %3758 = vmatprep.subr.mxu0 0.0
      %3759 = vmatpush1.msra.mxu0 0.0
      %3760 = vmatprep.subr.mxu0 0.0
      %3761 = vmatpush1.msra.mxu0 0.0
      %3762 = vmatprep.subr.mxu0 0.0
      %3763 = vmatpush1.msra.mxu0 0.0
      %3764 = vmatprep.subr.mxu0 0.0
      %3765 = vmatpush1.msra.mxu0 0.0
      %3766 = vmatprep.subr.mxu0 0.0
      %3767 = vmatpush1.msra.mxu0 0.0
      %3768 = vmatprep.subr.mxu0 0.0
      %3769 = vmatpush1.msra.mxu0 0.0
      %3770 = vmatprep.subr.mxu0 0.0
      %3771 = vmatpush1.msra.mxu0 0.0
      %3772 = vmatprep.subr.mxu0 0.0
      %3773 = vmatpush1.msra.mxu0 0.0
      %3774 = vmatprep.subr.mxu0 0.0
      %3775 = vmatpush1.msra.mxu0 0.0
      %3776 = vmatprep.subr.mxu0 0.0
      %3777 = vmatpush1.msra.mxu0 0.0
      %3778 = vmatprep.subr.mxu0 0.0
      %3779 = vmatpush1.msra.mxu0 0.0
      %3780 = vmatprep.subr.mxu0 0.0
      %3781 = vmatpush1.msra.mxu0 0.0
      %3782 = vmatprep.subr.mxu0 0.0
      %3783 = vmatpush1.msra.mxu0 0.0
      %3784 = vmatprep.subr.mxu0 0.0
      %3785 = vmatpush1.msra.mxu0 0.0
      %3786 = vmatprep.subr.mxu0 0.0
      %3787 = vmatpush1.msra.mxu0 0.0
      %3788 = vmatprep.subr.mxu0 0.0
      %3789 = vmatpush1.msra.mxu0 0.0
      %3790 = vmatprep.subr.mxu0 0.0
      %3791 = vmatpush1.msra.mxu0 0.0
      %3792 = vmatprep.subr.mxu0 0.0
      %3793 = vmatpush1.msra.mxu0 0.0
      %3794 = vmatprep.subr.mxu0 0.0
      %3795 = vmatpush1.msra.mxu0 0.0
      %3796 = vmatprep.subr.mxu0 0.0
      %3797 = vmatpush1.msra.mxu0 0.0
      %3798 = vmatprep.subr.mxu0 0.0
      %3799 = vmatpush1.msra.mxu0 0.0
      %3800 = vmatprep.subr.mxu0 0.0
      %3801 = vmatpush1.msra.mxu0 0.0
      %3802 = vmatprep.subr.mxu0 0.0
      %3803 = vmatpush1.msra.mxu0 0.0
      %3804 = vmatprep.mubr.f32.mxu0 0.0
      %3805 = vmatmul.mubr.f32.gmra.mrb[0].mxu0 %v3738
      %v3806 = vpop.f32.mrb[0].mxu0
      %v3807 = vadd.f32 %v3664, %v3806
      %v3808 = vpop.f32.mrb[0].mxu0
      %3809 = vdwg.mxu0
      %v3811 = vsel %vm521, %v3588, 0
      %3813 = vmatprep.subr.mxu0 0.0
      %3814 = vmatpush1.msra.mxu0 %v3589
      %3815 = vmatprep.subr.mxu0 0.0
      %3816 = vmatpush1.msra.mxu0 %v3590
      %3817 = vmatprep.subr.mxu0 0.0
      %3818 = vmatpush1.msra.mxu0 %v3591
      %3819 = vmatprep.subr.mxu0 0.0
      %3820 = vmatpush1.msra.mxu0 %v3592
      %3821 = vmatprep.subr.mxu0 0.0
      %3822 = vmatpush1.msra.mxu0 0.0
      %3823 = vmatprep.subr.mxu0 0.0
      %3824 = vmatpush1.msra.mxu0 0.0
      %3825 = vmatprep.subr.mxu0 0.0
      %3826 = vmatpush1.msra.mxu0 0.0
      %3827 = vmatprep.subr.mxu0 0.0
      %3828 = vmatpush1.msra.mxu0 0.0
      %3829 = vmatprep.subr.mxu0 0.0
      %3830 = vmatpush1.msra.mxu0 0.0
      %3831 = vmatprep.subr.mxu0 0.0
      %3832 = vmatpush1.msra.mxu0 0.0
      %3833 = vmatprep.subr.mxu0 0.0
      %3834 = vmatpush1.msra.mxu0 0.0
      %3835 = vmatprep.subr.mxu0 0.0
      %3836 = vmatpush1.msra.mxu0 0.0
      %3837 = vmatprep.subr.mxu0 0.0
      %3838 = vmatpush1.msra.mxu0 0.0
      %3839 = vmatprep.subr.mxu0 0.0
      %3840 = vmatpush1.msra.mxu0 0.0
      %3841 = vmatprep.subr.mxu0 0.0
      %3842 = vmatpush1.msra.mxu0 0.0
      %3843 = vmatprep.subr.mxu0 0.0
      %3844 = vmatpush1.msra.mxu0 0.0
      %3845 = vmatprep.subr.mxu0 0.0
      %3846 = vmatpush1.msra.mxu0 0.0
      %3847 = vmatprep.subr.mxu0 0.0
      %3848 = vmatpush1.msra.mxu0 0.0
      %3849 = vmatprep.subr.mxu0 0.0
      %3850 = vmatpush1.msra.mxu0 0.0
      %3851 = vmatprep.subr.mxu0 0.0
      %3852 = vmatpush1.msra.mxu0 0.0
      %3853 = vmatprep.subr.mxu0 0.0
      %3854 = vmatpush1.msra.mxu0 0.0
      %3855 = vmatprep.subr.mxu0 0.0
      %3856 = vmatpush1.msra.mxu0 0.0
      %3857 = vmatprep.subr.mxu0 0.0
      %3858 = vmatpush1.msra.mxu0 0.0
      %3859 = vmatprep.subr.mxu0 0.0
      %3860 = vmatpush1.msra.mxu0 0.0
      %3861 = vmatprep.subr.mxu0 0.0
      %3862 = vmatpush1.msra.mxu0 0.0
      %3863 = vmatprep.subr.mxu0 0.0
      %3864 = vmatpush1.msra.mxu0 0.0
      %3865 = vmatprep.subr.mxu0 0.0
      %3866 = vmatpush1.msra.mxu0 0.0
      %3867 = vmatprep.subr.mxu0 0.0
      %3868 = vmatpush1.msra.mxu0 0.0
      %3869 = vmatprep.subr.mxu0 0.0
      %3870 = vmatpush1.msra.mxu0 0.0
      %3871 = vmatprep.subr.mxu0 0.0
      %3872 = vmatpush1.msra.mxu0 0.0
      %3873 = vmatprep.subr.mxu0 0.0
      %3874 = vmatpush1.msra.mxu0 0.0
      %3875 = vmatprep.subr.mxu0 0.0
      %3876 = vmatpush1.msra.mxu0 0.0
      %3877 = vmatprep.mubr.f32.mxu0 0.0
      %3878 = vmatmul.mubr.f32.gmra.mrb[0].mxu0 %v3811
      %v3879 = vpop.f32.mrb[0].mxu0
      %v3880 = vadd.f32 %v3734, %v3879
      %v3881 = vpop.f32.mrb[0].mxu0
      %3882 = vdwg.mxu0
      %v3883 = vld [vmem:[%s10] sm:$0x1]
      %v3885 = vlaneseq
      %v3886 = vshrl.u32 %v3885, 7
      %v3887 = vsub.s32 0, %v3886
      %v3888 = vrot.slane %v3883, %v3887
      %v3890 = vadd.f32 %v3807, %v3888
      %v3891 = vadd.f32 %v3880, %v3888
      %v3892 = vtanh.pop %v3890
      %v3893 = vtanh.pop %v3891
      %vm3894 = vcmask 258048
      %3895 = vst.msk [vmem:[%s445] sm:$0x1f] %vm3894, %v3892
      %3896 = vst.msk [vmem:[%s445 + $0x8] sm:$0x1f] %vm3894, %v3893
      %s3897 = smul.u32 2, %s24
      %p3898 = scmp.lt.s32.totalorder %s3897, 3
      %s3899 = scalar_select %p3898, %s3897, 3
      %s3900 = smul.addr %s3899, 8
      %s3901 = scalar_lea.vmem %s11, %s3900
      %s3902 = smul.u32 8, %s24
      %p3903 = scmp.lt.s32.totalorder %s3902, 15
      %s3904 = scalar_select %p3903, %s3902, 15
      %s3905 = smul.addr %s3904, 8
      %s3906 = scalar_lea.vmem %s12, %s3905
      // Predicated region
      $region65: #{tpu_custom_call.1} parent=63 // pred_check
        %p3907 = pneg %p283
      $region66: #{tpu_custom_call.1} parent=63 // pred_check_branch
        %3909 = sbr.rel (%p3907) target = $region68
      $region67: #{tpu_custom_call.1} parent=63 // pred_region
        %s3910 = smul.u32 2, %s24
      $region68: #{tpu_custom_call.1} parent=63 // pred_fallthru
        _
      // Predicated region
      $region69: #{tpu_custom_call.1} parent=63 // pred_check
        %p3911 = pneg %p309
      $region70: #{tpu_custom_call.1} parent=63 // pred_check_branch
        %3913 = sbr.rel (%p3911) target = $region72
      $region71: #{tpu_custom_call.1} parent=63 // pred_region
        %s3914 = smul.u32 8, %s24
      $region72: #{tpu_custom_call.1} parent=63 // pred_fallthru
        _
    $region64: #{tpu_custom_call.1} parent=5 // pred_fallthru
      _
    %p3915 = scmp.le.s32.totalorder 2, %s19
    // Predicated region
    $region73: #{tpu_custom_call.1} parent=5 // pred_check
      %p3916 = pneg %p3915
    $region74: #{tpu_custom_call.1} parent=5 // pred_check_branch
      %3918 = sbr.rel (%p3916) target = $region76
    $region75: #{tpu_custom_call.1} parent=5 // pred_region
      %s3919 = ssub.s32 %s19, 2
      // Predicated region
      $region77: #{tpu_custom_call.1} parent=75 // pred_check
        %p3920 = pneg %p289
      $region78: #{tpu_custom_call.1} parent=75 // pred_check_branch
        %3922 = sbr.rel (%p3920) target = $region80
      $region79: #{tpu_custom_call.1} parent=75 // pred_region
        %s3923 = smul.u32 2, %s25
        %p3924 = scmp.lt.s32.totalorder %s3923, 3
        %s3925 = scalar_select %p3924, %s3923, 3
        %s3926 = smul.addr %s3925, 8
        %s3927 = scalar_lea.vmem %s11, %s3926
      $region80: #{tpu_custom_call.1} parent=75 // pred_fallthru
        _
      // Predicated region
      $region81: #{tpu_custom_call.1} parent=75 // pred_check
        %p3928 = pneg %p315
      $region82: #{tpu_custom_call.1} parent=75 // pred_check_branch
        %3930 = sbr.rel (%p3928) target = $region84
      $region83: #{tpu_custom_call.1} parent=75 // pred_region
        %s3931 = smul.u32 8, %s25
        %p3932 = scmp.lt.s32.totalorder %s3931, 15
        %s3933 = scalar_select %p3932, %s3931, 15
        %s3934 = smul.addr %s3933, 8
        %s3935 = scalar_lea.vmem %s12, %s3934
      $region84: #{tpu_custom_call.1} parent=75 // pred_fallthru
        _
    $region76: #{tpu_custom_call.1} parent=5 // pred_fallthru
      _
  $region6: #{tpu_custom_call.1} parent=0 // loop_footer
    %s23 = sadd.s32 1, %s19
  $region7: #{tpu_custom_call.1} parent=0 // loop_footer_branch
    %18 = sbr.rel target = $region3
  $region8: #{tpu_custom_call.1} parent=0 // loop_exit
    _

</llo_original>
